<compile_context>
chip_gen: v7x
topology: tpu7x:2x2x1
jax: 0.10.0
libtpu: 0.0.40
codegen_flags: <defaults>
</compile_context>

<pallas_src>
import jax
import jax.numpy as jnp
import numpy as np
from jax import lax
from jax.experimental import pallas as pl
from jax.experimental.pallas import tpu as pltpu


def _round_up(x, m):
    return -(-x // m) * m


# ---------------------------------------------------------------------------
# Kernel 1: fused-im2col conv (tap-shifted matmuls) + masked partial BN stats
# ---------------------------------------------------------------------------
def _conv_stats(xf, w_taps, mask, *, tm, ov, offsets, num_tiles, y_dtype):
    """xf: (Cin, rows) channels-major padded activations, rows=(num_tiles+1)*tm.
       w_taps: (T, Cout8, Cin).  mask: (1, num_tiles*tm) validity (f32).
       Returns y: (Cout8, num_tiles*tm) in y_dtype and per-tile stats
       (num_tiles, Cout8, 2) f32 with [...,0]=sum, [...,1]=sum of squares."""
    Cin, _ = xf.shape
    T, Cout8, _ = w_taps.shape
    M_pad = num_tiles * tm

    def kernel(x0_ref, x1_ref, w_ref, m_ref, y_ref, stats_ref):
        # Current tile + small look-ahead tile of the same flattened input.
        slab = jnp.concatenate([x0_ref[...], x1_ref[...]], axis=1)  # (Cin, tm+ov)
        acc = None
        for t, o in enumerate(offsets):            # static unroll over KH*KW taps
            a = slab[:, o:o + tm]                  # shifted (Cin, tm) window
            p = jnp.dot(w_ref[t], a, preferred_element_type=jnp.float32)
            acc = p if acc is None else acc + p    # (Cout8, tm) f32 accumulate
        m = m_ref[...]                             # (1, tm) validity mask
        ym = acc * m
        s1 = jnp.sum(ym, axis=1, keepdims=True)            # (Cout8, 1) sum
        s2 = jnp.sum(ym * acc, axis=1, keepdims=True)      # (Cout8, 1) sum sq
        stats_ref[0] = jnp.concatenate([s1, s2], axis=1)   # per-tile partials
        y_ref[...] = acc.astype(y_ref.dtype)

    y, stats = pl.pallas_call(
        kernel,
        out_shape=(
            jax.ShapeDtypeStruct((Cout8, M_pad), y_dtype),
            jax.ShapeDtypeStruct((num_tiles, Cout8, 2), jnp.float32),
        ),
        grid_spec=pltpu.PrefetchScalarGridSpec(
            num_scalar_prefetch=0,
            grid=(num_tiles,),
            in_specs=[
                pl.BlockSpec((Cin, tm), lambda i: (0, i)),
                pl.BlockSpec((Cin, ov), lambda i: (0, (i + 1) * (tm // ov))),
                pl.BlockSpec((T, Cout8, Cin), lambda i: (0, 0, 0)),
                pl.BlockSpec((1, tm), lambda i: (0, i)),
            ],
            out_specs=[
                pl.BlockSpec((Cout8, tm), lambda i: (0, i)),
                pl.BlockSpec((1, Cout8, 2), lambda i: (i, 0, 0)),
            ],
        ),
        compiler_params=pltpu.CompilerParams(
            dimension_semantics=("parallel",),   # per-tile partial stats -> safe
            vmem_limit_bytes=32 * 1024 * 1024,
        ),
    )(xf, xf, w_taps, mask)
    return y, stats


# ---------------------------------------------------------------------------
# Kernel 2: BatchNorm (pre-folded scale/shift) + ReLU, lane-dense elementwise
# ---------------------------------------------------------------------------
def _bn_relu(y, scale, shift, *, tm, out_dtype):
    Cout8, M_pad = y.shape

    def kernel(y_ref, sc_ref, sh_ref, o_ref):
        yv = y_ref[...].astype(jnp.float32)
        o = yv * sc_ref[...] + sh_ref[...]
        o_ref[...] = jnp.maximum(o, 0.0).astype(o_ref.dtype)

    return pl.pallas_call(
        kernel,
        out_shape=jax.ShapeDtypeStruct((Cout8, M_pad), out_dtype),
        grid_spec=pltpu.PrefetchScalarGridSpec(
            num_scalar_prefetch=0,
            grid=(M_pad // tm,),
            in_specs=[
                pl.BlockSpec((Cout8, tm), lambda i: (0, i)),
                pl.BlockSpec((Cout8, 1), lambda i: (0, 0)),
                pl.BlockSpec((Cout8, 1), lambda i: (0, 0)),
            ],
            out_specs=pl.BlockSpec((Cout8, tm), lambda i: (0, i)),
        ),
        compiler_params=pltpu.CompilerParams(
            dimension_semantics=("parallel",),
            vmem_limit_bytes=32 * 1024 * 1024,
        ),
    )(y, scale, shift)


# ---------------------------------------------------------------------------
# One (Conv 'same'/stride 1 -> BN(batch stats) -> ReLU) stage, channels-major.
# ---------------------------------------------------------------------------
def _conv_bn_relu_stage(x_cbhw, w_oihw, gamma, beta, *, eps, tm_target,
                        compute_dtype, out_dtype):
    """x_cbhw: (Cin, B, H, W).  w_oihw: (Cout, Cin, KH, KW) (PyTorch layout).
       Returns (Cout, B, H, W) in out_dtype."""
    Cin, B, H, W_ = x_cbhw.shape
    Cout, _, KH, KW = w_oihw.shape
    assert KH % 2 == 1 and KW % 2 == 1, "odd kernel sizes only ('same' padding)"
    ph, pw = KH // 2, KW // 2
    Hp, Wp = H + 2 * ph, W_ + 2 * pw
    Cout8 = _round_up(Cout, 8)

    # With the (Cin, B*Hp*Wp) flattening every tap (kh, kw) is a column shift.
    offsets = [kh * Wp + kw for kh in range(KH) for kw in range(KW)]
    overlap = offsets[-1]                        # (KH-1)*Wp + (KW-1)

    # Column tiling: tm (lane axis) aligned; ov = look-ahead window, divides tm.
    ov = _round_up(max(overlap, 1), 128)
    tm = _round_up(max(tm_target, ov), ov)

    M_full = B * Hp * Wp                         # padded-grid pixel count
    num_tiles = -(-M_full // tm)
    M_pad = num_tiles * tm
    rows = M_pad + tm                            # one extra zero tile for look-ahead

    # Activations: zero-pad spatially, flatten channels-major, pad columns.
    xp = jnp.pad(x_cbhw, ((0, 0), (0, 0), (ph, ph), (pw, pw)))   # (Cin,B,Hp,Wp)
    xf = xp.reshape(Cin, M_full).astype(compute_dtype)
    xf = jnp.pad(xf, ((0, 0), (0, rows - M_full)))               # (Cin, rows)

    # Weights: (Cout,Cin,KH,KW) -> (KH*KW, Cout8, Cin), tap order (kh, kw).
    wpad = jnp.pad(w_oihw, ((0, Cout8 - Cout), (0, 0), (0, 0), (0, 0)))
    w_taps = jnp.transpose(wpad, (2, 3, 0, 1)).reshape(KH * KW, Cout8, Cin)
    w_taps = w_taps.astype(compute_dtype)

    # Validity mask over the padded output grid (spatial-padding positions and
    # the tile-rounding tail must not contribute to the BN statistics).
    r = jnp.arange(M_pad, dtype=jnp.int32)
    valid = (r < M_full) & ((r % Wp) < W_) & (((r // Wp) % Hp) < H)
    mask = valid.astype(jnp.float32)[None, :]                    # (1, M_pad)

    # Kernel 1: fused-im2col conv + per-tile masked sum / sum-of-squares.
    # (Conv bias intentionally dropped: it cancels exactly under BatchNorm.)
    y, stats_part = _conv_stats(xf, w_taps, mask, tm=tm, ov=ov,
                                offsets=offsets, num_tiles=num_tiles,
                                y_dtype=compute_dtype)

    # Tiny per-channel glue: fold batch stats + affine into scale/shift.
    # TODO(synk): E[x^2]-E[x]^2 in f32 can cancel badly if |mean| >> std;
    # switch to shifted/Welford partials for poorly-centered activations.
    stats = jnp.sum(stats_part, axis=0)                           # (Cout8, 2)
    count = float(B * H * W_)
    mean = stats[:, 0] / count
    var = stats[:, 1] / count - mean * mean      # biased variance (PyTorch BN fwd)
    g = jnp.pad(gamma.astype(jnp.float32), (0, Cout8 - Cout))
    b = jnp.pad(beta.astype(jnp.float32), (0, Cout8 - Cout))
    scale = g * lax.rsqrt(var + eps)
    shift = b - mean * scale

    # Kernel 2: y * scale + shift, ReLU (lane-dense elementwise).
    out = _bn_relu(y, scale[:, None], shift[:, None], tm=tm, out_dtype=out_dtype)

    # Drop padded-grid garbage rows and padded channels.
    out = out[:, :M_full].reshape(Cout8, B, Hp, Wp)[:Cout, :, :H, :W_]
    return out


# ---------------------------------------------------------------------------
# Full ConvBlock forward (NCHW in / NCHW out, like the PyTorch module)
# ---------------------------------------------------------------------------
def conv_block_forward(x_nchw, params, *, compute_dtype=jnp.bfloat16,
                       tm=512, eps=1e-5):
    """params = (w1, b1, g1, be1, w2, b2, g2, be2) with PyTorch layouts.
    compute_dtype: MXU-operand / intermediate storage dtype (bfloat16 for
    v6e/v7x throughput; float32 for exact reference precision).  Accumulation
    and BN math are always f32.  Conv biases are accepted but unused (they
    cancel exactly under training-mode BatchNorm)."""
    w1, b1, g1, be1, w2, b2, g2, be2 = params
    del b1, b2
    x = jnp.transpose(x_nchw, (1, 0, 2, 3))          # (Cin, B, H, W)
    h = _conv_bn_relu_stage(x, w1, g1, be1, eps=eps, tm_target=tm,
                            compute_dtype=compute_dtype,
                            out_dtype=compute_dtype)
    h = _conv_bn_relu_stage(h, w2, g2, be2, eps=eps, tm_target=tm,
                            compute_dtype=compute_dtype,
                            out_dtype=jnp.float32)
    return jnp.transpose(h, (1, 0, 2, 3))            # (B, Cout, H, W)


# ---------------------------------------------------------------------------
# Pure-JAX reference.  compute_dtype=float32 -> exact PyTorch-default forward;
# compute_dtype=bfloat16 -> mirrors the kernel's rounding points.
# ---------------------------------------------------------------------------
def conv_block_reference(x, params, *, eps=1e-5, compute_dtype=jnp.float32):
    w1, b1, g1, be1, w2, b2, g2, be2 = params

    def rnd(a):
        return a.astype(compute_dtype).astype(jnp.float32)

    def step(x, w, b, g, be):
        y = lax.conv_general_dilated(
            rnd(x), rnd(w), (1, 1), "SAME",
            dimension_numbers=("NCHW", "OIHW", "NCHW"))
        y = rnd(y)                                # kernel stores y in compute_dtype
        y = y + b[None, :, None, None]            # bias (cancels under BN)
        mean = jnp.mean(y, axis=(0, 2, 3), keepdims=True)
        var = jnp.mean((y - mean) ** 2, axis=(0, 2, 3), keepdims=True)
        y = (y - mean) * lax.rsqrt(var + eps) * g[None, :, None, None] \
            + be[None, :, None, None]
        return jnp.maximum(y, 0.0)

    h = step(x, w1, b1, g1, be1)
    h = rnd(h)                                    # inter-stage activation dtype
    return step(h, w2, b2, g2, be2)


if __name__ == "__main__":
    B, Cin, Cout, H, W_ = 2, 4, 8, 16, 16
    KH = KW = 3

    key = jax.random.PRNGKey(0)
    ks = jax.random.split(key, 10)
    x = jax.random.normal(ks[0], (B, Cin, H, W_), jnp.float32)

    # Deterministic parameter init (shapes follow nn.Conv2d / nn.BatchNorm2d).
    w1 = 0.1 * jax.random.normal(ks[1], (Cout, Cin, KH, KW), jnp.float32)
    b1 = 0.1 * jax.random.normal(ks[2], (Cout,), jnp.float32)
    g1 = 1.0 + 0.1 * jax.random.normal(ks[3], (Cout,), jnp.float32)
    be1 = 0.1 * jax.random.normal(ks[4], (Cout,), jnp.float32)
    w2 = 0.1 * jax.random.normal(ks[5], (Cout, Cout, KH, KW), jnp.float32)
    b2 = 0.1 * jax.random.normal(ks[6], (Cout,), jnp.float32)
    g2 = 1.0 + 0.1 * jax.random.normal(ks[7], (Cout,), jnp.float32)
    be2 = 0.1 * jax.random.normal(ks[8], (Cout,), jnp.float32)
    params = (w1, b1, g1, be1, w2, b2, g2, be2)

    fwd = jax.jit(conv_block_forward, static_argnames=("compute_dtype", "tm"))

    # 1) Exact-precision path: must match the PyTorch-default forward tightly.
    out_f32 = jax.block_until_ready(fwd(x, params, compute_dtype=jnp.float32))
    ref_f32 = jax.block_until_ready(conv_block_reference(x, params))
    assert out_f32.shape == (B, Cout, H, W_), out_f32.shape
    np.testing.assert_allclose(np.asarray(out_f32), np.asarray(ref_f32),
                               rtol=1e-3, atol=1e-3)

    # 2) bf16 MXU path (default): compare against the rounding-aware reference.
    out_bf16 = jax.block_until_ready(fwd(x, params))
    ref_bf16 = jax.block_until_ready(
        conv_block_reference(x, params, compute_dtype=jnp.bfloat16))
    assert out_bf16.shape == (B, Cout, H, W_), out_bf16.shape
    np.testing.assert_allclose(np.asarray(out_bf16), np.asarray(ref_bf16),
                               rtol=1e-2, atol=1e-2)

    print("KERNEL_OK")
</pallas_src>

<mosaic_0001>
module attributes {stable_mosaic.version = 11 : i64} {
  func.func @kernel(%arg0: i32, %arg1: memref<4x512xf32, #tpu.memory_space<vmem>>, %arg2: memref<4x128xf32, #tpu.memory_space<vmem>>, %arg3: memref<9x8x4xf32, #tpu.memory_space<vmem>>, %arg4: memref<1x512xf32, #tpu.memory_space<vmem>>, %arg5: memref<8x512xf32, #tpu.memory_space<vmem>>, %arg6: memref<1x8x2xf32, #tpu.memory_space<vmem>>) attributes {dimension_semantics = [#tpu.dimension_semantics<parallel>], iteration_bounds = array<i64: 2>, scalar_prefetch = 0 : i64, scratch_operands = 0 : i64, tpu.core_type = #tpu.core_type<tc>, window_params = [{transform_indices = @transform_0, window_bounds = array<i64: 4, 512>}, {transform_indices = @transform_1, window_bounds = array<i64: 4, 128>}, {pipeline_mode = #tpu.pipeline_mode<synchronous>, transform_indices = @transform_2, window_bounds = array<i64: 9, 8, 4>}, {transform_indices = @transform_3, window_bounds = array<i64: 1, 512>}, {transform_indices = @transform_4, window_bounds = array<i64: 8, 512>}, {transform_indices = @transform_5, window_bounds = array<i64: 1, 8, 2>}]} {
    %c0 = arith.constant 0 : index
    %c0_0 = arith.constant 0 : index
    %0 = vector.load %arg1[%c0, %c0_0] : memref<4x512xf32, #tpu.memory_space<vmem>>, vector<4x512xf32>
    %c0_1 = arith.constant 0 : index
    %c0_2 = arith.constant 0 : index
    %1 = vector.load %arg2[%c0_1, %c0_2] : memref<4x128xf32, #tpu.memory_space<vmem>>, vector<4x128xf32>
    %2 = tpu.concatenate %0, %1 in 1 : vector<4x512xf32>, vector<4x128xf32> -> vector<4x640xf32>
    %3 = vector.extract_strided_slice %2 {offsets = [0, 0], sizes = [4, 512], strides = [1, 1]} : vector<4x640xf32> to vector<4x512xf32>
    %c0_3 = arith.constant 0 : index
    %c0_4 = arith.constant 0 : index
    %c0_5 = arith.constant 0 : index
    %4 = vector.load %arg3[%c0_3, %c0_4, %c0_5] : memref<9x8x4xf32, #tpu.memory_space<vmem>>, vector<1x8x4xf32>
    %5 = vector.shape_cast %4 : vector<1x8x4xf32> to vector<8x4xf32>
    %cst = arith.constant dense<0.000000e+00> : vector<8x512xf32>
    %6 = tpu.matmul %5, %3, %cst {dimension_numbers = #tpu.dot_dimension_numbers<[1], [0], [0], [1], [0, 0, 1, 1], [], []>} : vector<8x4xf32>, vector<4x512xf32>, vector<8x512xf32> -> vector<8x512xf32>
    %7 = vector.extract_strided_slice %2 {offsets = [0, 1], sizes = [4, 512], strides = [1, 1]} : vector<4x640xf32> to vector<4x512xf32>
    %c1 = arith.constant 1 : index
    %c0_6 = arith.constant 0 : index
    %c0_7 = arith.constant 0 : index
    %8 = vector.load %arg3[%c1, %c0_6, %c0_7] : memref<9x8x4xf32, #tpu.memory_space<vmem>>, vector<1x8x4xf32>
    %9 = vector.shape_cast %8 : vector<1x8x4xf32> to vector<8x4xf32>
    %cst_8 = arith.constant dense<0.000000e+00> : vector<8x512xf32>
    %10 = tpu.matmul %9, %7, %cst_8 {dimension_numbers = #tpu.dot_dimension_numbers<[1], [0], [0], [1], [0, 0, 1, 1], [], []>} : vector<8x4xf32>, vector<4x512xf32>, vector<8x512xf32> -> vector<8x512xf32>
    %11 = arith.addf %6, %10 : vector<8x512xf32>
    %12 = vector.extract_strided_slice %2 {offsets = [0, 2], sizes = [4, 512], strides = [1, 1]} : vector<4x640xf32> to vector<4x512xf32>
    %c2 = arith.constant 2 : index
    %c0_9 = arith.constant 0 : index
    %c0_10 = arith.constant 0 : index
    %13 = vector.load %arg3[%c2, %c0_9, %c0_10] : memref<9x8x4xf32, #tpu.memory_space<vmem>>, vector<1x8x4xf32>
    %14 = vector.shape_cast %13 : vector<1x8x4xf32> to vector<8x4xf32>
    %cst_11 = arith.constant dense<0.000000e+00> : vector<8x512xf32>
    %15 = tpu.matmul %14, %12, %cst_11 {dimension_numbers = #tpu.dot_dimension_numbers<[1], [0], [0], [1], [0, 0, 1, 1], [], []>} : vector<8x4xf32>, vector<4x512xf32>, vector<8x512xf32> -> vector<8x512xf32>
    %16 = arith.addf %11, %15 : vector<8x512xf32>
    %17 = vector.extract_strided_slice %2 {offsets = [0, 18], sizes = [4, 512], strides = [1, 1]} : vector<4x640xf32> to vector<4x512xf32>
    %c3 = arith.constant 3 : index
    %c0_12 = arith.constant 0 : index
    %c0_13 = arith.constant 0 : index
    %18 = vector.load %arg3[%c3, %c0_12, %c0_13] : memref<9x8x4xf32, #tpu.memory_space<vmem>>, vector<1x8x4xf32>
    %19 = vector.shape_cast %18 : vector<1x8x4xf32> to vector<8x4xf32>
    %cst_14 = arith.constant dense<0.000000e+00> : vector<8x512xf32>
    %20 = tpu.matmul %19, %17, %cst_14 {dimension_numbers = #tpu.dot_dimension_numbers<[1], [0], [0], [1], [0, 0, 1, 1], [], []>} : vector<8x4xf32>, vector<4x512xf32>, vector<8x512xf32> -> vector<8x512xf32>
    %21 = arith.addf %16, %20 : vector<8x512xf32>
    %22 = vector.extract_strided_slice %2 {offsets = [0, 19], sizes = [4, 512], strides = [1, 1]} : vector<4x640xf32> to vector<4x512xf32>
    %c4 = arith.constant 4 : index
    %c0_15 = arith.constant 0 : index
    %c0_16 = arith.constant 0 : index
    %23 = vector.load %arg3[%c4, %c0_15, %c0_16] : memref<9x8x4xf32, #tpu.memory_space<vmem>>, vector<1x8x4xf32>
    %24 = vector.shape_cast %23 : vector<1x8x4xf32> to vector<8x4xf32>
    %cst_17 = arith.constant dense<0.000000e+00> : vector<8x512xf32>
    %25 = tpu.matmul %24, %22, %cst_17 {dimension_numbers = #tpu.dot_dimension_numbers<[1], [0], [0], [1], [0, 0, 1, 1], [], []>} : vector<8x4xf32>, vector<4x512xf32>, vector<8x512xf32> -> vector<8x512xf32>
    %26 = arith.addf %21, %25 : vector<8x512xf32>
    %27 = vector.extract_strided_slice %2 {offsets = [0, 20], sizes = [4, 512], strides = [1, 1]} : vector<4x640xf32> to vector<4x512xf32>
    %c5 = arith.constant 5 : index
    %c0_18 = arith.constant 0 : index
    %c0_19 = arith.constant 0 : index
    %28 = vector.load %arg3[%c5, %c0_18, %c0_19] : memref<9x8x4xf32, #tpu.memory_space<vmem>>, vector<1x8x4xf32>
    %29 = vector.shape_cast %28 : vector<1x8x4xf32> to vector<8x4xf32>
    %cst_20 = arith.constant dense<0.000000e+00> : vector<8x512xf32>
    %30 = tpu.matmul %29, %27, %cst_20 {dimension_numbers = #tpu.dot_dimension_numbers<[1], [0], [0], [1], [0, 0, 1, 1], [], []>} : vector<8x4xf32>, vector<4x512xf32>, vector<8x512xf32> -> vector<8x512xf32>
    %31 = arith.addf %26, %30 : vector<8x512xf32>
    %32 = vector.extract_strided_slice %2 {offsets = [0, 36], sizes = [4, 512], strides = [1, 1]} : vector<4x640xf32> to vector<4x512xf32>
    %c6 = arith.constant 6 : index
    %c0_21 = arith.constant 0 : index
    %c0_22 = arith.constant 0 : index
    %33 = vector.load %arg3[%c6, %c0_21, %c0_22] : memref<9x8x4xf32, #tpu.memory_space<vmem>>, vector<1x8x4xf32>
    %34 = vector.shape_cast %33 : vector<1x8x4xf32> to vector<8x4xf32>
    %cst_23 = arith.constant dense<0.000000e+00> : vector<8x512xf32>
    %35 = tpu.matmul %34, %32, %cst_23 {dimension_numbers = #tpu.dot_dimension_numbers<[1], [0], [0], [1], [0, 0, 1, 1], [], []>} : vector<8x4xf32>, vector<4x512xf32>, vector<8x512xf32> -> vector<8x512xf32>
    %36 = arith.addf %31, %35 : vector<8x512xf32>
    %37 = vector.extract_strided_slice %2 {offsets = [0, 37], sizes = [4, 512], strides = [1, 1]} : vector<4x640xf32> to vector<4x512xf32>
    %c7 = arith.constant 7 : index
    %c0_24 = arith.constant 0 : index
    %c0_25 = arith.constant 0 : index
    %38 = vector.load %arg3[%c7, %c0_24, %c0_25] : memref<9x8x4xf32, #tpu.memory_space<vmem>>, vector<1x8x4xf32>
    %39 = vector.shape_cast %38 : vector<1x8x4xf32> to vector<8x4xf32>
    %cst_26 = arith.constant dense<0.000000e+00> : vector<8x512xf32>
    %40 = tpu.matmul %39, %37, %cst_26 {dimension_numbers = #tpu.dot_dimension_numbers<[1], [0], [0], [1], [0, 0, 1, 1], [], []>} : vector<8x4xf32>, vector<4x512xf32>, vector<8x512xf32> -> vector<8x512xf32>
    %41 = arith.addf %36, %40 : vector<8x512xf32>
    %42 = vector.extract_strided_slice %2 {offsets = [0, 38], sizes = [4, 512], strides = [1, 1]} : vector<4x640xf32> to vector<4x512xf32>
    %c8 = arith.constant 8 : index
    %c0_27 = arith.constant 0 : index
    %c0_28 = arith.constant 0 : index
    %43 = vector.load %arg3[%c8, %c0_27, %c0_28] : memref<9x8x4xf32, #tpu.memory_space<vmem>>, vector<1x8x4xf32>
    %44 = vector.shape_cast %43 : vector<1x8x4xf32> to vector<8x4xf32>
    %cst_29 = arith.constant dense<0.000000e+00> : vector<8x512xf32>
    %45 = tpu.matmul %44, %42, %cst_29 {dimension_numbers = #tpu.dot_dimension_numbers<[1], [0], [0], [1], [0, 0, 1, 1], [], []>} : vector<8x4xf32>, vector<4x512xf32>, vector<8x512xf32> -> vector<8x512xf32>
    %46 = arith.addf %41, %45 : vector<8x512xf32>
    %c0_30 = arith.constant 0 : index
    %c0_31 = arith.constant 0 : index
    %47 = vector.load %arg4[%c0_30, %c0_31] : memref<1x512xf32, #tpu.memory_space<vmem>>, vector<1x512xf32>
    %48 = vector.broadcast %47 : vector<1x512xf32> to vector<8x512xf32>
    %49 = arith.mulf %46, %48 : vector<8x512xf32>
    %cst_32 = arith.constant dense<0.000000e+00> : vector<8xf32>
    %50 = vector.multi_reduction <add>, %49, %cst_32 [1] : vector<8x512xf32> to vector<8xf32>
    %51 = vector.shape_cast %50 : vector<8xf32> to vector<8x1xf32>
    %52 = arith.mulf %49, %46 : vector<8x512xf32>
    %cst_33 = arith.constant dense<0.000000e+00> : vector<8xf32>
    %53 = vector.multi_reduction <add>, %52, %cst_33 [1] : vector<8x512xf32> to vector<8xf32>
    %54 = vector.shape_cast %53 : vector<8xf32> to vector<8x1xf32>
    %55 = tpu.concatenate %51, %54 in 1 : vector<8x1xf32>, vector<8x1xf32> -> vector<8x2xf32>
    %c0_34 = arith.constant 0 : index
    %c0_35 = arith.constant 0 : index
    %c0_36 = arith.constant 0 : index
    %56 = vector.load %arg6[%c0_34, %c0_35, %c0_36] : memref<1x8x2xf32, #tpu.memory_space<vmem>>, vector<1x8x2xf32>
    %57 = vector.shape_cast %56 : vector<1x8x2xf32> to vector<8x2xf32>
    %58 = vector.shape_cast %55 : vector<8x2xf32> to vector<1x8x2xf32>
    tpu.vector_store %arg6[%c0_34, %c0_35, %c0_36], %58 {strides = array<i32>} : memref<1x8x2xf32, #tpu.memory_space<vmem>>, vector<1x8x2xf32>,
    %c0_37 = arith.constant 0 : index
    %c0_38 = arith.constant 0 : index
    %59 = vector.load %arg5[%c0_37, %c0_38] : memref<8x512xf32, #tpu.memory_space<vmem>>, vector<8x512xf32>
    tpu.vector_store %arg5[%c0_37, %c0_38], %46 {strides = array<i32>} : memref<8x512xf32, #tpu.memory_space<vmem>>, vector<8x512xf32>,
    return
  }
  func.func @transform_0(%arg0: i32) -> (i32, i32) {
    %c0_i32 = arith.constant 0 : i32
    %c0_i32_0 = arith.constant 0 : i32
    return %c0_i32, %arg0 : i32, i32
  }
  func.func @transform_1(%arg0: i32) -> (i32, i32) {
    %c1_i32 = arith.constant 1 : i32
    %0 = arith.addi %arg0, %c1_i32 : i32
    %c4_i32 = arith.constant 4 : i32
    %1 = arith.muli %0, %c4_i32 : i32
    %c0_i32 = arith.constant 0 : i32
    %c0_i32_0 = arith.constant 0 : i32
    return %c0_i32, %1 : i32, i32
  }
  func.func @transform_2(%arg0: i32) -> (i32, i32, i32) {
    %c0_i32 = arith.constant 0 : i32
    %c0_i32_0 = arith.constant 0 : i32
    %c0_i32_1 = arith.constant 0 : i32
    %c0_i32_2 = arith.constant 0 : i32
    return %c0_i32, %c0_i32_0, %c0_i32_1 : i32, i32, i32
  }
  func.func @transform_3(%arg0: i32) -> (i32, i32) {
    %c0_i32 = arith.constant 0 : i32
    %c0_i32_0 = arith.constant 0 : i32
    return %c0_i32, %arg0 : i32, i32
  }
  func.func @transform_4(%arg0: i32) -> (i32, i32) {
    %c0_i32 = arith.constant 0 : i32
    %c0_i32_0 = arith.constant 0 : i32
    return %c0_i32, %arg0 : i32, i32
  }
  func.func @transform_5(%arg0: i32) -> (i32, i32, i32) {
    %c0_i32 = arith.constant 0 : i32
    %c0_i32_0 = arith.constant 0 : i32
    %c0_i32_1 = arith.constant 0 : i32
    return %arg0, %c0_i32, %c0_i32_0 : i32, i32, i32
  }
}

module attributes {stable_mosaic.version = 11 : i64} {
  func.func @kernel(%arg0: i32, %arg1: memref<8x512xf32, #tpu.memory_space<vmem>>, %arg2: memref<8x1xf32, #tpu.memory_space<vmem>>, %arg3: memref<8x1xf32, #tpu.memory_space<vmem>>, %arg4: memref<8x512xf32, #tpu.memory_space<vmem>>) attributes {dimension_semantics = [#tpu.dimension_semantics<parallel>], iteration_bounds = array<i64: 2>, scalar_prefetch = 0 : i64, scratch_operands = 0 : i64, tpu.core_type = #tpu.core_type<tc>, window_params = [{transform_indices = @transform_0, window_bounds = array<i64: 8, 512>}, {pipeline_mode = #tpu.pipeline_mode<synchronous>, transform_indices = @transform_1, window_bounds = array<i64: 8, 1>}, {pipeline_mode = #tpu.pipeline_mode<synchronous>, transform_indices = @transform_2, window_bounds = array<i64: 8, 1>}, {transform_indices = @transform_3, window_bounds = array<i64: 8, 512>}]} {
    %c0 = arith.constant 0 : index
    %c0_0 = arith.constant 0 : index
    %0 = vector.load %arg1[%c0, %c0_0] : memref<8x512xf32, #tpu.memory_space<vmem>>, vector<8x512xf32>
    %c0_1 = arith.constant 0 : index
    %c0_2 = arith.constant 0 : index
    %1 = vector.load %arg2[%c0_1, %c0_2] : memref<8x1xf32, #tpu.memory_space<vmem>>, vector<8x1xf32>
    %2 = vector.broadcast %1 : vector<8x1xf32> to vector<8x512xf32>
    %3 = arith.mulf %0, %2 : vector<8x512xf32>
    %c0_3 = arith.constant 0 : index
    %c0_4 = arith.constant 0 : index
    %4 = vector.load %arg3[%c0_3, %c0_4] : memref<8x1xf32, #tpu.memory_space<vmem>>, vector<8x1xf32>
    %5 = vector.broadcast %4 : vector<8x1xf32> to vector<8x512xf32>
    %6 = arith.addf %3, %5 : vector<8x512xf32>
    %cst = arith.constant 0.000000e+00 : f32
    %7 = vector.broadcast %cst : f32 to vector<8x512xf32>
    %8 = arith.maximumf %6, %7 : vector<8x512xf32>
    %c0_5 = arith.constant 0 : index
    %c0_6 = arith.constant 0 : index
    %9 = vector.load %arg4[%c0_5, %c0_6] : memref<8x512xf32, #tpu.memory_space<vmem>>, vector<8x512xf32>
    tpu.vector_store %arg4[%c0_5, %c0_6], %8 {strides = array<i32>} : memref<8x512xf32, #tpu.memory_space<vmem>>, vector<8x512xf32>,
    return
  }
  func.func @transform_0(%arg0: i32) -> (i32, i32) {
    %c0_i32 = arith.constant 0 : i32
    %c0_i32_0 = arith.constant 0 : i32
    return %c0_i32, %arg0 : i32, i32
  }
  func.func @transform_1(%arg0: i32) -> (i32, i32) {
    %c0_i32 = arith.constant 0 : i32
    %c0_i32_0 = arith.constant 0 : i32
    %c0_i32_1 = arith.constant 0 : i32
    return %c0_i32, %c0_i32_0 : i32, i32
  }
  func.func @transform_2(%arg0: i32) -> (i32, i32) {
    %c0_i32 = arith.constant 0 : i32
    %c0_i32_0 = arith.constant 0 : i32
    %c0_i32_1 = arith.constant 0 : i32
    return %c0_i32, %c0_i32_0 : i32, i32
  }
  func.func @transform_3(%arg0: i32) -> (i32, i32) {
    %c0_i32 = arith.constant 0 : i32
    %c0_i32_0 = arith.constant 0 : i32
    return %c0_i32, %arg0 : i32, i32
  }
}

module attributes {stable_mosaic.version = 11 : i64} {
  func.func @kernel(%arg0: i32, %arg1: memref<8x512xf32, #tpu.memory_space<vmem>>, %arg2: memref<8x128xf32, #tpu.memory_space<vmem>>, %arg3: memref<9x8x8xf32, #tpu.memory_space<vmem>>, %arg4: memref<1x512xf32, #tpu.memory_space<vmem>>, %arg5: memref<8x512xf32, #tpu.memory_space<vmem>>, %arg6: memref<1x8x2xf32, #tpu.memory_space<vmem>>) attributes {dimension_semantics = [#tpu.dimension_semantics<parallel>], iteration_bounds = array<i64: 2>, scalar_prefetch = 0 : i64, scratch_operands = 0 : i64, tpu.core_type = #tpu.core_type<tc>, window_params = [{transform_indices = @transform_0, window_bounds = array<i64: 8, 512>}, {transform_indices = @transform_1, window_bounds = array<i64: 8, 128>}, {pipeline_mode = #tpu.pipeline_mode<synchronous>, transform_indices = @transform_2, window_bounds = array<i64: 9, 8, 8>}, {transform_indices = @transform_3, window_bounds = array<i64: 1, 512>}, {transform_indices = @transform_4, window_bounds = array<i64: 8, 512>}, {transform_indices = @transform_5, window_bounds = array<i64: 1, 8, 2>}]} {
    %c0 = arith.constant 0 : index
    %c0_0 = arith.constant 0 : index
    %0 = vector.load %arg1[%c0, %c0_0] : memref<8x512xf32, #tpu.memory_space<vmem>>, vector<8x512xf32>
    %c0_1 = arith.constant 0 : index
    %c0_2 = arith.constant 0 : index
    %1 = vector.load %arg2[%c0_1, %c0_2] : memref<8x128xf32, #tpu.memory_space<vmem>>, vector<8x128xf32>
    %2 = tpu.concatenate %0, %1 in 1 : vector<8x512xf32>, vector<8x128xf32> -> vector<8x640xf32>
    %3 = vector.extract_strided_slice %2 {offsets = [0, 0], sizes = [8, 512], strides = [1, 1]} : vector<8x640xf32> to vector<8x512xf32>
    %c0_3 = arith.constant 0 : index
    %c0_4 = arith.constant 0 : index
    %c0_5 = arith.constant 0 : index
    %4 = vector.load %arg3[%c0_3, %c0_4, %c0_5] : memref<9x8x8xf32, #tpu.memory_space<vmem>>, vector<1x8x8xf32>
    %5 = vector.shape_cast %4 : vector<1x8x8xf32> to vector<8x8xf32>
    %cst = arith.constant dense<0.000000e+00> : vector<8x512xf32>
    %6 = tpu.matmul %5, %3, %cst {dimension_numbers = #tpu.dot_dimension_numbers<[1], [0], [0], [1], [0, 0, 1, 1], [], []>} : vector<8x8xf32>, vector<8x512xf32>, vector<8x512xf32> -> vector<8x512xf32>
    %7 = vector.extract_strided_slice %2 {offsets = [0, 1], sizes = [8, 512], strides = [1, 1]} : vector<8x640xf32> to vector<8x512xf32>
    %c1 = arith.constant 1 : index
    %c0_6 = arith.constant 0 : index
    %c0_7 = arith.constant 0 : index
    %8 = vector.load %arg3[%c1, %c0_6, %c0_7] : memref<9x8x8xf32, #tpu.memory_space<vmem>>, vector<1x8x8xf32>
    %9 = vector.shape_cast %8 : vector<1x8x8xf32> to vector<8x8xf32>
    %cst_8 = arith.constant dense<0.000000e+00> : vector<8x512xf32>
    %10 = tpu.matmul %9, %7, %cst_8 {dimension_numbers = #tpu.dot_dimension_numbers<[1], [0], [0], [1], [0, 0, 1, 1], [], []>} : vector<8x8xf32>, vector<8x512xf32>, vector<8x512xf32> -> vector<8x512xf32>
    %11 = arith.addf %6, %10 : vector<8x512xf32>
    %12 = vector.extract_strided_slice %2 {offsets = [0, 2], sizes = [8, 512], strides = [1, 1]} : vector<8x640xf32> to vector<8x512xf32>
    %c2 = arith.constant 2 : index
    %c0_9 = arith.constant 0 : index
    %c0_10 = arith.constant 0 : index
    %13 = vector.load %arg3[%c2, %c0_9, %c0_10] : memref<9x8x8xf32, #tpu.memory_space<vmem>>, vector<1x8x8xf32>
    %14 = vector.shape_cast %13 : vector<1x8x8xf32> to vector<8x8xf32>
    %cst_11 = arith.constant dense<0.000000e+00> : vector<8x512xf32>
    %15 = tpu.matmul %14, %12, %cst_11 {dimension_numbers = #tpu.dot_dimension_numbers<[1], [0], [0], [1], [0, 0, 1, 1], [], []>} : vector<8x8xf32>, vector<8x512xf32>, vector<8x512xf32> -> vector<8x512xf32>
    %16 = arith.addf %11, %15 : vector<8x512xf32>
    %17 = vector.extract_strided_slice %2 {offsets = [0, 18], sizes = [8, 512], strides = [1, 1]} : vector<8x640xf32> to vector<8x512xf32>
    %c3 = arith.constant 3 : index
    %c0_12 = arith.constant 0 : index
    %c0_13 = arith.constant 0 : index
    %18 = vector.load %arg3[%c3, %c0_12, %c0_13] : memref<9x8x8xf32, #tpu.memory_space<vmem>>, vector<1x8x8xf32>
    %19 = vector.shape_cast %18 : vector<1x8x8xf32> to vector<8x8xf32>
    %cst_14 = arith.constant dense<0.000000e+00> : vector<8x512xf32>
    %20 = tpu.matmul %19, %17, %cst_14 {dimension_numbers = #tpu.dot_dimension_numbers<[1], [0], [0], [1], [0, 0, 1, 1], [], []>} : vector<8x8xf32>, vector<8x512xf32>, vector<8x512xf32> -> vector<8x512xf32>
    %21 = arith.addf %16, %20 : vector<8x512xf32>
    %22 = vector.extract_strided_slice %2 {offsets = [0, 19], sizes = [8, 512], strides = [1, 1]} : vector<8x640xf32> to vector<8x512xf32>
    %c4 = arith.constant 4 : index
    %c0_15 = arith.constant 0 : index
    %c0_16 = arith.constant 0 : index
    %23 = vector.load %arg3[%c4, %c0_15, %c0_16] : memref<9x8x8xf32, #tpu.memory_space<vmem>>, vector<1x8x8xf32>
    %24 = vector.shape_cast %23 : vector<1x8x8xf32> to vector<8x8xf32>
    %cst_17 = arith.constant dense<0.000000e+00> : vector<8x512xf32>
    %25 = tpu.matmul %24, %22, %cst_17 {dimension_numbers = #tpu.dot_dimension_numbers<[1], [0], [0], [1], [0, 0, 1, 1], [], []>} : vector<8x8xf32>, vector<8x512xf32>, vector<8x512xf32> -> vector<8x512xf32>
    %26 = arith.addf %21, %25 : vector<8x512xf32>
    %27 = vector.extract_strided_slice %2 {offsets = [0, 20], sizes = [8, 512], strides = [1, 1]} : vector<8x640xf32> to vector<8x512xf32>
    %c5 = arith.constant 5 : index
    %c0_18 = arith.constant 0 : index
    %c0_19 = arith.constant 0 : index
    %28 = vector.load %arg3[%c5, %c0_18, %c0_19] : memref<9x8x8xf32, #tpu.memory_space<vmem>>, vector<1x8x8xf32>
    %29 = vector.shape_cast %28 : vector<1x8x8xf32> to vector<8x8xf32>
    %cst_20 = arith.constant dense<0.000000e+00> : vector<8x512xf32>
    %30 = tpu.matmul %29, %27, %cst_20 {dimension_numbers = #tpu.dot_dimension_numbers<[1], [0], [0], [1], [0, 0, 1, 1], [], []>} : vector<8x8xf32>, vector<8x512xf32>, vector<8x512xf32> -> vector<8x512xf32>
    %31 = arith.addf %26, %30 : vector<8x512xf32>
    %32 = vector.extract_strided_slice %2 {offsets = [0, 36], sizes = [8, 512], strides = [1, 1]} : vector<8x640xf32> to vector<8x512xf32>
    %c6 = arith.constant 6 : index
    %c0_21 = arith.constant 0 : index
    %c0_22 = arith.constant 0 : index
    %33 = vector.load %arg3[%c6, %c0_21, %c0_22] : memref<9x8x8xf32, #tpu.memory_space<vmem>>, vector<1x8x8xf32>
    %34 = vector.shape_cast %33 : vector<1x8x8xf32> to vector<8x8xf32>
    %cst_23 = arith.constant dense<0.000000e+00> : vector<8x512xf32>
    %35 = tpu.matmul %34, %32, %cst_23 {dimension_numbers = #tpu.dot_dimension_numbers<[1], [0], [0], [1], [0, 0, 1, 1], [], []>} : vector<8x8xf32>, vector<8x512xf32>, vector<8x512xf32> -> vector<8x512xf32>
    %36 = arith.addf %31, %35 : vector<8x512xf32>
    %37 = vector.extract_strided_slice %2 {offsets = [0, 37], sizes = [8, 512], strides = [1, 1]} : vector<8x640xf32> to vector<8x512xf32>
    %c7 = arith.constant 7 : index
    %c0_24 = arith.constant 0 : index
    %c0_25 = arith.constant 0 : index
    %38 = vector.load %arg3[%c7, %c0_24, %c0_25] : memref<9x8x8xf32, #tpu.memory_space<vmem>>, vector<1x8x8xf32>
    %39 = vector.shape_cast %38 : vector<1x8x8xf32> to vector<8x8xf32>
    %cst_26 = arith.constant dense<0.000000e+00> : vector<8x512xf32>
    %40 = tpu.matmul %39, %37, %cst_26 {dimension_numbers = #tpu.dot_dimension_numbers<[1], [0], [0], [1], [0, 0, 1, 1], [], []>} : vector<8x8xf32>, vector<8x512xf32>, vector<8x512xf32> -> vector<8x512xf32>
    %41 = arith.addf %36, %40 : vector<8x512xf32>
    %42 = vector.extract_strided_slice %2 {offsets = [0, 38], sizes = [8, 512], strides = [1, 1]} : vector<8x640xf32> to vector<8x512xf32>
    %c8 = arith.constant 8 : index
    %c0_27 = arith.constant 0 : index
    %c0_28 = arith.constant 0 : index
    %43 = vector.load %arg3[%c8, %c0_27, %c0_28] : memref<9x8x8xf32, #tpu.memory_space<vmem>>, vector<1x8x8xf32>
    %44 = vector.shape_cast %43 : vector<1x8x8xf32> to vector<8x8xf32>
    %cst_29 = arith.constant dense<0.000000e+00> : vector<8x512xf32>
    %45 = tpu.matmul %44, %42, %cst_29 {dimension_numbers = #tpu.dot_dimension_numbers<[1], [0], [0], [1], [0, 0, 1, 1], [], []>} : vector<8x8xf32>, vector<8x512xf32>, vector<8x512xf32> -> vector<8x512xf32>
    %46 = arith.addf %41, %45 : vector<8x512xf32>
    %c0_30 = arith.constant 0 : index
    %c0_31 = arith.constant 0 : index
    %47 = vector.load %arg4[%c0_30, %c0_31] : memref<1x512xf32, #tpu.memory_space<vmem>>, vector<1x512xf32>
    %48 = vector.broadcast %47 : vector<1x512xf32> to vector<8x512xf32>
    %49 = arith.mulf %46, %48 : vector<8x512xf32>
    %cst_32 = arith.constant dense<0.000000e+00> : vector<8xf32>
    %50 = vector.multi_reduction <add>, %49, %cst_32 [1] : vector<8x512xf32> to vector<8xf32>
    %51 = vector.shape_cast %50 : vector<8xf32> to vector<8x1xf32>
    %52 = arith.mulf %49, %46 : vector<8x512xf32>
    %cst_33 = arith.constant dense<0.000000e+00> : vector<8xf32>
    %53 = vector.multi_reduction <add>, %52, %cst_33 [1] : vector<8x512xf32> to vector<8xf32>
    %54 = vector.shape_cast %53 : vector<8xf32> to vector<8x1xf32>
    %55 = tpu.concatenate %51, %54 in 1 : vector<8x1xf32>, vector<8x1xf32> -> vector<8x2xf32>
    %c0_34 = arith.constant 0 : index
    %c0_35 = arith.constant 0 : index
    %c0_36 = arith.constant 0 : index
    %56 = vector.load %arg6[%c0_34, %c0_35, %c0_36] : memref<1x8x2xf32, #tpu.memory_space<vmem>>, vector<1x8x2xf32>
    %57 = vector.shape_cast %56 : vector<1x8x2xf32> to vector<8x2xf32>
    %58 = vector.shape_cast %55 : vector<8x2xf32> to vector<1x8x2xf32>
    tpu.vector_store %arg6[%c0_34, %c0_35, %c0_36], %58 {strides = array<i32>} : memref<1x8x2xf32, #tpu.memory_space<vmem>>, vector<1x8x2xf32>,
    %c0_37 = arith.constant 0 : index
    %c0_38 = arith.constant 0 : index
    %59 = vector.load %arg5[%c0_37, %c0_38] : memref<8x512xf32, #tpu.memory_space<vmem>>, vector<8x512xf32>
    tpu.vector_store %arg5[%c0_37, %c0_38], %46 {strides = array<i32>} : memref<8x512xf32, #tpu.memory_space<vmem>>, vector<8x512xf32>,
    return
  }
  func.func @transform_0(%arg0: i32) -> (i32, i32) {
    %c0_i32 = arith.constant 0 : i32
    %c0_i32_0 = arith.constant 0 : i32
    return %c0_i32, %arg0 : i32, i32
  }
  func.func @transform_1(%arg0: i32) -> (i32, i32) {
    %c1_i32 = arith.constant 1 : i32
    %0 = arith.addi %arg0, %c1_i32 : i32
    %c4_i32 = arith.constant 4 : i32
    %1 = arith.muli %0, %c4_i32 : i32
    %c0_i32 = arith.constant 0 : i32
    %c0_i32_0 = arith.constant 0 : i32
    return %c0_i32, %1 : i32, i32
  }
  func.func @transform_2(%arg0: i32) -> (i32, i32, i32) {
    %c0_i32 = arith.constant 0 : i32
    %c0_i32_0 = arith.constant 0 : i32
    %c0_i32_1 = arith.constant 0 : i32
    %c0_i32_2 = arith.constant 0 : i32
    return %c0_i32, %c0_i32_0, %c0_i32_1 : i32, i32, i32
  }
  func.func @transform_3(%arg0: i32) -> (i32, i32) {
    %c0_i32 = arith.constant 0 : i32
    %c0_i32_0 = arith.constant 0 : i32
    return %c0_i32, %arg0 : i32, i32
  }
  func.func @transform_4(%arg0: i32) -> (i32, i32) {
    %c0_i32 = arith.constant 0 : i32
    %c0_i32_0 = arith.constant 0 : i32
    return %c0_i32, %arg0 : i32, i32
  }
  func.func @transform_5(%arg0: i32) -> (i32, i32, i32) {
    %c0_i32 = arith.constant 0 : i32
    %c0_i32_0 = arith.constant 0 : i32
    %c0_i32_1 = arith.constant 0 : i32
    return %arg0, %c0_i32, %c0_i32_0 : i32, i32, i32
  }
}

</mosaic_0001>

<llo_original>
// kernel: conv_block_forward.5
$region0: #{conv_block_forward.5}
  #allocation0 [shape = 'u32[]', space=smem, size = 0x4, offset = 0x4, fixed_abs, tag = 'smem constant byte address 0x4 - core index']
  #allocation1 [shape = 'u32[144,128]{1,0:T(1,128)}', space=vmem, size = 0x12000, scoped, tag = 'internal scratch']
  %s0 = inlined_call_operand.vmem [shape: f32[8,1024], index: 0, kind: input, shape index: {}]
  %s1 = inlined_call_operand.vmem [shape: f32[8,1], index: 1, kind: input, shape index: {}]
  %s2 = inlined_call_operand.vmem [shape: f32[8,1], index: 2, kind: input, shape index: {}]
  %s3 = inlined_call_operand.vmem [shape: f32[8,1024], index: 3, kind: output, shape index: {}]
  %s4 = sld [smem:[#allocation0]]
  $region45: #{conv_block_forward.5} parent=0
    _
  %s6 = ssub.s32 1, %s4
  %s7 = scalar_select 0, %s6, %s4
  loop: start=0, step=1, limit=4
  $region2: #{conv_block_forward.5} parent=0 // loop_pre_header
    _
  $region3: #{conv_block_forward.5} parent=0 // loop_header
    %s9 = sphi 0, %s13
    %p10 = scmp.ge.s32.totalorder %s9, 4
    %s19 = sphi 0, %s21
    %s22 = sphi 0, %s19
    %s23 = sphi 0, %s22
    %s39 = sphi 0, %s23
    %s43 = sphi 0, %s43
    %s45 = sphi 0, %s43
    %s46 = sphi 0, %s45
    %s60 = sphi 0, %s46
    %s64 = sphi 0, %s64
    %s66 = sphi 0, %s64
    %s67 = sphi 0, %s66
    %s81 = sphi 0, %s67
    %s87 = sphi 0, %s89
    %s90 = sphi 0, %s87
    %s91 = sphi 0, %s90
    %s107 = sphi 0, %s91
  $region4: #{conv_block_forward.5} parent=0 // loop_header_branch
    %12 = sbr.rel (%p10) target = $region8
  $region5: #{conv_block_forward.5} parent=0 // loop_body
    %s14 = ssub.s32 %s9, 1
    %s15 = ssub.s32 %s9, 2
    %s16 = sadd.s32 %s9, 1
    %s17 = ssub.s32 %s9, %s16
    %p18 = scmp.eq.s32.totalorder %s17, 0
    %s20 = sadd.s32 %s19, 1
    %s21 = scalar_select %p18, %s19, %s20
    %p24 = pneg %p18
    %p25 = scmp.eq.s32.totalorder %s9, 1
    %p26 = por %p24, %p25
    %p27 = scmp.ne.s32.totalorder %s19, %s22
    %p28 = scmp.eq.s32.totalorder %s9, 0
    %p29 = por %p27, %p28
    %p30 = scmp.ne.s32.totalorder %s19, %s22
    %p31 = scmp.eq.s32.totalorder %s14, 1
    %p32 = por %p30, %p31
    %p33 = scmp.ne.s32.totalorder %s22, %s23
    %p34 = scmp.eq.s32.totalorder %s14, 0
    %p35 = por %p33, %p34
    %p36 = scmp.ne.s32.totalorder %s22, %s23
    %p37 = scmp.eq.s32.totalorder %s15, 1
    %p38 = por %p36, %p37
    %p40 = scmp.ne.s32.totalorder %s23, %s39
    %p41 = scmp.eq.s32.totalorder %s15, 0
    %p42 = por %p40, %p41
    %s44 = sadd.s32 %s43, 1
    %p47 = scmp.eq.s32.totalorder %s9, 1
    %p48 = scmp.ne.s32.totalorder %s43, %s45
    %p49 = scmp.eq.s32.totalorder %s9, 0
    %p50 = por %p48, %p49
    %p51 = scmp.ne.s32.totalorder %s43, %s45
    %p52 = scmp.eq.s32.totalorder %s14, 1
    %p53 = por %p51, %p52
    %p54 = scmp.ne.s32.totalorder %s45, %s46
    %p55 = scmp.eq.s32.totalorder %s14, 0
    %p56 = por %p54, %p55
    %p57 = scmp.ne.s32.totalorder %s45, %s46
    %p58 = scmp.eq.s32.totalorder %s15, 1
    %p59 = por %p57, %p58
    %p61 = scmp.ne.s32.totalorder %s46, %s60
    %p62 = scmp.eq.s32.totalorder %s15, 0
    %p63 = por %p61, %p62
    %s65 = sadd.s32 %s64, 1
    %p68 = scmp.eq.s32.totalorder %s9, 1
    %p69 = scmp.ne.s32.totalorder %s64, %s66
    %p70 = scmp.eq.s32.totalorder %s9, 0
    %p71 = por %p69, %p70
    %p72 = scmp.ne.s32.totalorder %s64, %s66
    %p73 = scmp.eq.s32.totalorder %s14, 1
    %p74 = por %p72, %p73
    %p75 = scmp.ne.s32.totalorder %s66, %s67
    %p76 = scmp.eq.s32.totalorder %s14, 0
    %p77 = por %p75, %p76
    %p78 = scmp.ne.s32.totalorder %s66, %s67
    %p79 = scmp.eq.s32.totalorder %s15, 1
    %p80 = por %p78, %p79
    %p82 = scmp.ne.s32.totalorder %s67, %s81
    %p83 = scmp.eq.s32.totalorder %s15, 0
    %p84 = por %p82, %p83
    %s85 = ssub.s32 %s9, %s16
    %p86 = scmp.eq.s32.totalorder %s85, 0
    %s88 = sadd.s32 %s87, 1
    %s89 = scalar_select %p86, %s87, %s88
    %p92 = pneg %p86
    %p93 = scmp.eq.s32.totalorder %s9, 1
    %p94 = por %p92, %p93
    %p95 = scmp.ne.s32.totalorder %s87, %s90
    %p96 = scmp.eq.s32.totalorder %s9, 0
    %p97 = por %p95, %p96
    %p98 = scmp.ne.s32.totalorder %s87, %s90
    %p99 = scmp.eq.s32.totalorder %s14, 1
    %p100 = por %p98, %p99
    %p101 = scmp.ne.s32.totalorder %s90, %s91
    %p102 = scmp.eq.s32.totalorder %s14, 0
    %p103 = por %p101, %p102
    %p104 = scmp.ne.s32.totalorder %s90, %s91
    %p105 = scmp.eq.s32.totalorder %s15, 1
    %p106 = por %p104, %p105
    %p108 = scmp.ne.s32.totalorder %s91, %s107
    %p109 = scmp.eq.s32.totalorder %s15, 0
    %p110 = por %p108, %p109
    %p111 = scmp.le.s32.totalorder 1, %s9
    %p112 = scmp.lt.s32.totalorder %s9, 3
    %p113 = pnand %p111, %p112
    %p114 = pneg %p113
    // Predicated region
    $region9: #{conv_block_forward.5} parent=5 // pred_check
      _
    $region10: #{conv_block_forward.5} parent=5 // pred_check_branch
      %116 = sbr.rel (%p113) target = $region12
    $region11: #{conv_block_forward.5} parent=5 // pred_region
      %s117 = ssub.s32 %s9, 1
      // Predicated region
      $region13: #{conv_block_forward.5} parent=11 // pred_check
        %p118 = pneg %p56
      $region14: #{conv_block_forward.5} parent=11 // pred_check_branch
        %120 = sbr.rel (%p118) target = $region16
      $region15: #{conv_block_forward.5} parent=11 // pred_region
        _
      $region16: #{conv_block_forward.5} parent=11 // pred_fallthru
        _
      // Predicated region
      $region17: #{conv_block_forward.5} parent=11 // pred_check
        %p121 = pneg %p77
      $region18: #{conv_block_forward.5} parent=11 // pred_check_branch
        %123 = sbr.rel (%p121) target = $region20
      $region19: #{conv_block_forward.5} parent=11 // pred_region
        _
      $region20: #{conv_block_forward.5} parent=11 // pred_fallthru
        _
    $region12: #{conv_block_forward.5} parent=5 // pred_fallthru
      _
    %p124 = scmp.lt.s32.totalorder %s9, 2
    // Predicated region
    $region21: #{conv_block_forward.5} parent=5 // pred_check
      %p125 = pneg %p124
    $region22: #{conv_block_forward.5} parent=5 // pred_check_branch
      %127 = sbr.rel (%p125) target = $region24
    $region23: #{conv_block_forward.5} parent=5 // pred_region
      // Predicated region
      $region25: #{conv_block_forward.5} parent=23 // pred_check
        %p128 = pneg %p29
      $region26: #{conv_block_forward.5} parent=23 // pred_check_branch
        %130 = sbr.rel (%p128) target = $region28
      $region27: #{conv_block_forward.5} parent=23 // pred_region
        %s131 = smul.u32 4, %s9
        %p132 = scmp.lt.s32.totalorder %s131, 7
        %s133 = scalar_select %p132, %s131, 7
        %s134 = smul.addr %s133, 8
        %s135 = scalar_lea.vmem %s0, %s134
        %s136 = smul.u32 4, %s9
      $region28: #{conv_block_forward.5} parent=23 // pred_fallthru
        _
    $region24: #{conv_block_forward.5} parent=5 // pred_fallthru
      _
    %p137 = scmp.le.s32.totalorder 1, %s9
    %p138 = scmp.lt.s32.totalorder %s9, 3
    %p139 = pnand %p137, %p138
    %p140 = pneg %p139
    // Predicated region
    $region29: #{conv_block_forward.5} parent=5 // pred_check
      _
    $region30: #{conv_block_forward.5} parent=5 // pred_check_branch
      %142 = sbr.rel (%p139) target = $region32
    $region31: #{conv_block_forward.5} parent=5 // pred_region
      %s143 = ssub.s32 %s9, 1
      %s144 = smul.u32 4, %s14
      %p145 = scmp.lt.s32.totalorder %s144, 7
      %s146 = scalar_select %p145, %s144, 7
      %s147 = smul.addr %s146, 8
      %s148 = scalar_lea.vmem %s0, %s147
      %p149 = pneg %p35
      %p150 = pneg %p32
      %p151 = pneg %p56
      %p152 = pneg %p53
      %p153 = pneg %p77
      %p154 = pneg %p74
      %p155 = pneg %p103
      %p156 = pneg %p100
      %s157 = smul.u32 4, %s14
      %p158 = scmp.lt.s32.totalorder %s157, 7
      %s159 = scalar_select %p158, %s157, 7
      %s160 = smul.addr %s159, 8
      %s161 = scalar_lea.vmem %s3, %s160
      %s162 = smul.u32 4, %s14
      %p163 = scmp.lt.s32.totalorder %s162, 7
      %s164 = scalar_select %p163, %s162, 7
      %s165 = smul.addr %s164, 8
      %s166 = scalar_lea.vmem %s0, %s165
      %s167 = smul.u32 4, %s14
      %s168 = smul.u32 4, %s14
      %p169 = scmp.lt.s32.totalorder %s168, 7
      %s170 = scalar_select %p169, %s168, 7
      %s171 = smul.addr %s170, 8
      %s172 = scalar_lea.vmem %s3, %s171
      %s173 = smul.u32 4, %s14
      %v174 = vld [vmem:[%s166] sm:$0xff]
      %v175 = vld [vmem:[%s166 + $0x8] sm:$0xff]
      %v176 = vld [vmem:[%s166 + $0x10] sm:$0xff]
      %v177 = vld [vmem:[%s166 + $0x18] sm:$0xff]
      %v178 = vld [vmem:[%s1] sm:$0xff]
      %180 = vset.pattern.permute.xlu0 0
      %181 = vperm.xlu0 %180, %v178
      %v182 = vpop.permute.xlu0 %181
      %v184 = vmul.f32 %v174, %v182
      %v185 = vmul.f32 %v175, %v182
      %v186 = vmul.f32 %v176, %v182
      %v187 = vmul.f32 %v177, %v182
      %v188 = vld [vmem:[%s2] sm:$0xff]
      %190 = vset.pattern.permute.xlu0 0
      %191 = vperm.xlu0 %190, %v188
      %v192 = vpop.permute.xlu0 %191
      %v194 = vadd.f32 %v184, %v192
      %v195 = vadd.f32 %v185, %v192
      %v196 = vadd.f32 %v186, %v192
      %v197 = vadd.f32 %v187, %v192
      %v198 = vmax.f32 %v194, 0.0
      %v199 = vmax.f32 %v195, 0.0
      %v200 = vmax.f32 %v196, 0.0
      %v201 = vmax.f32 %v197, 0.0
      %202 = vst [vmem:[%s172] sm:$0xff] %v198
      %203 = vst [vmem:[%s172 + $0x8] sm:$0xff] %v199
      %204 = vst [vmem:[%s172 + $0x10] sm:$0xff] %v200
      %205 = vst [vmem:[%s172 + $0x18] sm:$0xff] %v201
      %s206 = smul.u32 4, %s14
      %p207 = scmp.lt.s32.totalorder %s206, 7
      %s208 = scalar_select %p207, %s206, 7
      %s209 = smul.addr %s208, 8
      %s210 = scalar_lea.vmem %s3, %s209
      // Predicated region
      $region33: #{conv_block_forward.5} parent=31 // pred_check
        %p211 = pneg %p100
      $region34: #{conv_block_forward.5} parent=31 // pred_check_branch
        %213 = sbr.rel (%p211) target = $region36
      $region35: #{conv_block_forward.5} parent=31 // pred_region
        %s214 = smul.u32 4, %s14
      $region36: #{conv_block_forward.5} parent=31 // pred_fallthru
        _
    $region32: #{conv_block_forward.5} parent=5 // pred_fallthru
      _
    %p215 = scmp.le.s32.totalorder 2, %s9
    // Predicated region
    $region37: #{conv_block_forward.5} parent=5 // pred_check
      %p216 = pneg %p215
    $region38: #{conv_block_forward.5} parent=5 // pred_check_branch
      %218 = sbr.rel (%p216) target = $region40
    $region39: #{conv_block_forward.5} parent=5 // pred_region
      %s219 = ssub.s32 %s9, 2
      // Predicated region
      $region41: #{conv_block_forward.5} parent=39 // pred_check
        %p220 = pneg %p106
      $region42: #{conv_block_forward.5} parent=39 // pred_check_branch
        %222 = sbr.rel (%p220) target = $region44
      $region43: #{conv_block_forward.5} parent=39 // pred_region
        %s223 = smul.u32 4, %s15
        %p224 = scmp.lt.s32.totalorder %s223, 7
        %s225 = scalar_select %p224, %s223, 7
        %s226 = smul.addr %s225, 8
        %s227 = scalar_lea.vmem %s3, %s226
      $region44: #{conv_block_forward.5} parent=39 // pred_fallthru
        _
    $region40: #{conv_block_forward.5} parent=5 // pred_fallthru
      _
  $region6: #{conv_block_forward.5} parent=0 // loop_footer
    %s13 = sadd.s32 1, %s9
  $region7: #{conv_block_forward.5} parent=0 // loop_footer_branch
    %8 = sbr.rel target = $region3
  $region8: #{conv_block_forward.5} parent=0 // loop_exit
    _

// kernel: conv_block_forward.4
$region0: #{conv_block_forward.4}
  #allocation0 [shape = 'u32[]', space=smem, size = 0x4, offset = 0x4, fixed_abs, tag = 'smem constant byte address 0x4 - core index']
  #allocation1 [shape = 'u32[144,128]{1,0:T(1,128)}', space=vmem, size = 0x12000, scoped, tag = 'internal scratch']
  %s0 = inlined_call_operand.vmem [shape: f32[4,1536], index: 0, kind: input, shape index: {}, may-alias: {0,1}]
  %s1 = inlined_call_operand.vmem [shape: f32[4,1536], index: 1, kind: input, shape index: {}, may-alias: {0,1}]
  %s2 = inlined_call_operand.vmem [shape: f32[9,8,4], index: 2, kind: input, shape index: {}]
  %s3 = inlined_call_operand.vmem [shape: f32[1,1024], index: 3, kind: input, shape index: {}]
  %s4 = inlined_call_operand.vmem [shape: f32[8,1024], index: 4, kind: output, shape index: {0}]
  %s5 = inlined_call_operand.vmem [shape: f32[2,8,2], index: 5, kind: output, shape index: {1}]
  %6 = xla_tuple %s4, %s5
  %s7 = sld [smem:[#allocation0]]
  $region57: #{conv_block_forward.4} parent=0
    _
  %s9 = ssub.s32 1, %s7
  %s10 = scalar_select 0, %s9, %s7
  loop: start=0, step=1, limit=4
  $region2: #{conv_block_forward.4} parent=0 // loop_pre_header
    _
  $region3: #{conv_block_forward.4} parent=0 // loop_header
    %s12 = sphi 0, %s16
    %p13 = scmp.ge.s32.totalorder %s12, 4
    %s22 = sphi 0, %s24
    %s25 = sphi 0, %s22
    %s26 = sphi 0, %s25
    %s42 = sphi 0, %s26
    %s52 = sphi 0, %s54
    %s55 = sphi 0, %s52
    %s56 = sphi 0, %s55
    %s72 = sphi 0, %s56
    %s76 = sphi 0, %s76
    %s78 = sphi 0, %s76
    %s79 = sphi 0, %s78
    %s93 = sphi 0, %s79
    %s99 = sphi 0, %s101
    %s102 = sphi 0, %s99
    %s103 = sphi 0, %s102
    %s119 = sphi 0, %s103
    %s125 = sphi 0, %s127
    %s128 = sphi 0, %s125
    %s129 = sphi 0, %s128
    %s145 = sphi 0, %s129
    %s151 = sphi 0, %s153
    %s154 = sphi 0, %s151
    %s155 = sphi 0, %s154
    %s171 = sphi 0, %s155
  $region4: #{conv_block_forward.4} parent=0 // loop_header_branch
    %15 = sbr.rel (%p13) target = $region8
  $region5: #{conv_block_forward.4} parent=0 // loop_body
    %s17 = ssub.s32 %s12, 1
    %s18 = ssub.s32 %s12, 2
    %s19 = sadd.s32 %s12, 1
    %s20 = ssub.s32 %s12, %s19
    %p21 = scmp.eq.s32.totalorder %s20, 0
    %s23 = sadd.s32 %s22, 1
    %s24 = scalar_select %p21, %s22, %s23
    %p27 = pneg %p21
    %p28 = scmp.eq.s32.totalorder %s12, 1
    %p29 = por %p27, %p28
    %p30 = scmp.ne.s32.totalorder %s22, %s25
    %p31 = scmp.eq.s32.totalorder %s12, 0
    %p32 = por %p30, %p31
    %p33 = scmp.ne.s32.totalorder %s22, %s25
    %p34 = scmp.eq.s32.totalorder %s17, 1
    %p35 = por %p33, %p34
    %p36 = scmp.ne.s32.totalorder %s25, %s26
    %p37 = scmp.eq.s32.totalorder %s17, 0
    %p38 = por %p36, %p37
    %p39 = scmp.ne.s32.totalorder %s25, %s26
    %p40 = scmp.eq.s32.totalorder %s18, 1
    %p41 = por %p39, %p40
    %p43 = scmp.ne.s32.totalorder %s26, %s42
    %p44 = scmp.eq.s32.totalorder %s18, 0
    %p45 = por %p43, %p44
    %s46 = sadd.s32 %s12, 1
    %s47 = smul.u32 %s46, 4
    %s48 = sadd.s32 %s19, 1
    %s49 = smul.u32 %s48, 4
    %s50 = ssub.s32 %s47, %s49
    %p51 = scmp.eq.s32.totalorder %s50, 0
    %s53 = sadd.s32 %s52, 1
    %s54 = scalar_select %p51, %s52, %s53
    %p57 = pneg %p51
    %p58 = scmp.eq.s32.totalorder %s12, 1
    %p59 = por %p57, %p58
    %p60 = scmp.ne.s32.totalorder %s52, %s55
    %p61 = scmp.eq.s32.totalorder %s12, 0
    %p62 = por %p60, %p61
    %p63 = scmp.ne.s32.totalorder %s52, %s55
    %p64 = scmp.eq.s32.totalorder %s17, 1
    %p65 = por %p63, %p64
    %p66 = scmp.ne.s32.totalorder %s55, %s56
    %p67 = scmp.eq.s32.totalorder %s17, 0
    %p68 = por %p66, %p67
    %p69 = scmp.ne.s32.totalorder %s55, %s56
    %p70 = scmp.eq.s32.totalorder %s18, 1
    %p71 = por %p69, %p70
    %p73 = scmp.ne.s32.totalorder %s56, %s72
    %p74 = scmp.eq.s32.totalorder %s18, 0
    %p75 = por %p73, %p74
    %s77 = sadd.s32 %s76, 1
    %p80 = scmp.eq.s32.totalorder %s12, 1
    %p81 = scmp.ne.s32.totalorder %s76, %s78
    %p82 = scmp.eq.s32.totalorder %s12, 0
    %p83 = por %p81, %p82
    %p84 = scmp.ne.s32.totalorder %s76, %s78
    %p85 = scmp.eq.s32.totalorder %s17, 1
    %p86 = por %p84, %p85
    %p87 = scmp.ne.s32.totalorder %s78, %s79
    %p88 = scmp.eq.s32.totalorder %s17, 0
    %p89 = por %p87, %p88
    %p90 = scmp.ne.s32.totalorder %s78, %s79
    %p91 = scmp.eq.s32.totalorder %s18, 1
    %p92 = por %p90, %p91
    %p94 = scmp.ne.s32.totalorder %s79, %s93
    %p95 = scmp.eq.s32.totalorder %s18, 0
    %p96 = por %p94, %p95
    %s97 = ssub.s32 %s12, %s19
    %p98 = scmp.eq.s32.totalorder %s97, 0
    %s100 = sadd.s32 %s99, 1
    %s101 = scalar_select %p98, %s99, %s100
    %p104 = pneg %p98
    %p105 = scmp.eq.s32.totalorder %s12, 1
    %p106 = por %p104, %p105
    %p107 = scmp.ne.s32.totalorder %s99, %s102
    %p108 = scmp.eq.s32.totalorder %s12, 0
    %p109 = por %p107, %p108
    %p110 = scmp.ne.s32.totalorder %s99, %s102
    %p111 = scmp.eq.s32.totalorder %s17, 1
    %p112 = por %p110, %p111
    %p113 = scmp.ne.s32.totalorder %s102, %s103
    %p114 = scmp.eq.s32.totalorder %s17, 0
    %p115 = por %p113, %p114
    %p116 = scmp.ne.s32.totalorder %s102, %s103
    %p117 = scmp.eq.s32.totalorder %s18, 1
    %p118 = por %p116, %p117
    %p120 = scmp.ne.s32.totalorder %s103, %s119
    %p121 = scmp.eq.s32.totalorder %s18, 0
    %p122 = por %p120, %p121
    %s123 = ssub.s32 %s12, %s19
    %p124 = scmp.eq.s32.totalorder %s123, 0
    %s126 = sadd.s32 %s125, 1
    %s127 = scalar_select %p124, %s125, %s126
    %p130 = pneg %p124
    %p131 = scmp.eq.s32.totalorder %s12, 1
    %p132 = por %p130, %p131
    %p133 = scmp.ne.s32.totalorder %s125, %s128
    %p134 = scmp.eq.s32.totalorder %s12, 0
    %p135 = por %p133, %p134
    %p136 = scmp.ne.s32.totalorder %s125, %s128
    %p137 = scmp.eq.s32.totalorder %s17, 1
    %p138 = por %p136, %p137
    %p139 = scmp.ne.s32.totalorder %s128, %s129
    %p140 = scmp.eq.s32.totalorder %s17, 0
    %p141 = por %p139, %p140
    %p142 = scmp.ne.s32.totalorder %s128, %s129
    %p143 = scmp.eq.s32.totalorder %s18, 1
    %p144 = por %p142, %p143
    %p146 = scmp.ne.s32.totalorder %s129, %s145
    %p147 = scmp.eq.s32.totalorder %s18, 0
    %p148 = por %p146, %p147
    %s149 = ssub.s32 %s12, %s19
    %p150 = scmp.eq.s32.totalorder %s149, 0
    %s152 = sadd.s32 %s151, 1
    %s153 = scalar_select %p150, %s151, %s152
    %p156 = pneg %p150
    %p157 = scmp.eq.s32.totalorder %s12, 1
    %p158 = por %p156, %p157
    %p159 = scmp.ne.s32.totalorder %s151, %s154
    %p160 = scmp.eq.s32.totalorder %s12, 0
    %p161 = por %p159, %p160
    %p162 = scmp.ne.s32.totalorder %s151, %s154
    %p163 = scmp.eq.s32.totalorder %s17, 1
    %p164 = por %p162, %p163
    %p165 = scmp.ne.s32.totalorder %s154, %s155
    %p166 = scmp.eq.s32.totalorder %s17, 0
    %p167 = por %p165, %p166
    %p168 = scmp.ne.s32.totalorder %s154, %s155
    %p169 = scmp.eq.s32.totalorder %s18, 1
    %p170 = por %p168, %p169
    %p172 = scmp.ne.s32.totalorder %s155, %s171
    %p173 = scmp.eq.s32.totalorder %s18, 0
    %p174 = por %p172, %p173
    %p175 = scmp.le.s32.totalorder 1, %s12
    %p176 = scmp.lt.s32.totalorder %s12, 3
    %p177 = pnand %p175, %p176
    %p178 = pneg %p177
    // Predicated region
    $region9: #{conv_block_forward.4} parent=5 // pred_check
      _
    $region10: #{conv_block_forward.4} parent=5 // pred_check_branch
      %180 = sbr.rel (%p177) target = $region12
    $region11: #{conv_block_forward.4} parent=5 // pred_region
      %s181 = ssub.s32 %s12, 1
      // Predicated region
      $region13: #{conv_block_forward.4} parent=11 // pred_check
        %p182 = pneg %p89
      $region14: #{conv_block_forward.4} parent=11 // pred_check_branch
        %184 = sbr.rel (%p182) target = $region16
      $region15: #{conv_block_forward.4} parent=11 // pred_region
        _
      $region16: #{conv_block_forward.4} parent=11 // pred_fallthru
        _
    $region12: #{conv_block_forward.4} parent=5 // pred_fallthru
      _
    %p185 = scmp.lt.s32.totalorder %s12, 2
    // Predicated region
    $region17: #{conv_block_forward.4} parent=5 // pred_check
      %p186 = pneg %p185
    $region18: #{conv_block_forward.4} parent=5 // pred_check_branch
      %188 = sbr.rel (%p186) target = $region20
    $region19: #{conv_block_forward.4} parent=5 // pred_region
      // Predicated region
      $region21: #{conv_block_forward.4} parent=19 // pred_check
        %p189 = pneg %p32
      $region22: #{conv_block_forward.4} parent=19 // pred_check_branch
        %191 = sbr.rel (%p189) target = $region24
      $region23: #{conv_block_forward.4} parent=19 // pred_region
        %s192 = smul.u32 4, %s12
        %p193 = scmp.lt.s32.totalorder %s192, 11
        %s194 = scalar_select %p193, %s192, 11
        %s195 = smul.addr %s194, 4
        %s196 = scalar_lea.vmem %s0, %s195
        %s197 = smul.u32 4, %s12
      $region24: #{conv_block_forward.4} parent=19 // pred_fallthru
        _
      // Predicated region
      $region25: #{conv_block_forward.4} parent=19 // pred_check
        %p198 = pneg %p62
      $region26: #{conv_block_forward.4} parent=19 // pred_check_branch
        %200 = sbr.rel (%p198) target = $region28
      $region27: #{conv_block_forward.4} parent=19 // pred_region
        %s201 = sadd.s32 %s12, 1
        %s202 = smul.u32 %s201, 4
        %p203 = scmp.lt.s32.totalorder %s202, 11
        %s204 = scalar_select %p203, %s202, 11
        %s205 = smul.addr %s204, 4
        %s206 = scalar_lea.vmem %s1, %s205
        %s207 = sadd.s32 %s12, 1
        %s208 = smul.u32 %s207, 4
      $region28: #{conv_block_forward.4} parent=19 // pred_fallthru
        _
      // Predicated region
      $region29: #{conv_block_forward.4} parent=19 // pred_check
        %p209 = pneg %p109
      $region30: #{conv_block_forward.4} parent=19 // pred_check_branch
        %211 = sbr.rel (%p209) target = $region32
      $region31: #{conv_block_forward.4} parent=19 // pred_region
        %s212 = smul.u32 4, %s12
        %p213 = scmp.lt.s32.totalorder %s212, 7
        %s214 = scalar_select %p213, %s212, 7
        %s215 = scalar_lea.vmem %s3, %s214
        %s216 = smul.u32 4, %s12
      $region32: #{conv_block_forward.4} parent=19 // pred_fallthru
        _
    $region20: #{conv_block_forward.4} parent=5 // pred_fallthru
      _
    %p217 = scmp.le.s32.totalorder 1, %s12
    %p218 = scmp.lt.s32.totalorder %s12, 3
    %p219 = pnand %p217, %p218
    %p220 = pneg %p219
    // Predicated region
    $region33: #{conv_block_forward.4} parent=5 // pred_check
      _
    $region34: #{conv_block_forward.4} parent=5 // pred_check_branch
      %222 = sbr.rel (%p219) target = $region36
    $region35: #{conv_block_forward.4} parent=5 // pred_region
      %s223 = ssub.s32 %s12, 1
      %s224 = smul.u32 4, %s17
      %p225 = scmp.lt.s32.totalorder %s224, 11
      %s226 = scalar_select %p225, %s224, 11
      %s227 = smul.addr %s226, 4
      %s228 = scalar_lea.vmem %s0, %s227
      %p229 = pneg %p38
      %p230 = pneg %p35
      %s231 = sadd.s32 %s17, 1
      %s232 = smul.u32 %s231, 4
      %p233 = scmp.lt.s32.totalorder %s232, 11
      %s234 = scalar_select %p233, %s232, 11
      %s235 = smul.addr %s234, 4
      %s236 = scalar_lea.vmem %s1, %s235
      %p237 = pneg %p68
      %p238 = pneg %p65
      %p239 = pneg %p89
      %p240 = pneg %p86
      %s241 = smul.u32 4, %s17
      %p242 = scmp.lt.s32.totalorder %s241, 7
      %s243 = scalar_select %p242, %s241, 7
      %s244 = scalar_lea.vmem %s3, %s243
      %p245 = pneg %p115
      %p246 = pneg %p112
      %p247 = pneg %p141
      %p248 = pneg %p138
      %s249 = smul.u32 4, %s17
      %p250 = scmp.lt.s32.totalorder %s249, 7
      %s251 = scalar_select %p250, %s249, 7
      %s252 = smul.addr %s251, 8
      %s253 = scalar_lea.vmem %s4, %s252
      %p254 = pneg %p167
      %p255 = pneg %p164
      %p256 = scmp.lt.s32.totalorder %s17, 1
      %s257 = scalar_select %p256, %s17, 1
      %s258 = smul.addr %s257, 8
      %s259 = scalar_lea.vmem %s5, %s258
      %s260 = smul.u32 4, %s17
      %p261 = scmp.lt.s32.totalorder %s260, 11
      %s262 = scalar_select %p261, %s260, 11
      %s263 = smul.addr %s262, 4
      %s264 = scalar_lea.vmem %s0, %s263
      %s265 = smul.u32 4, %s17
      %s266 = sadd.s32 %s17, 1
      %s267 = smul.u32 %s266, 4
      %p268 = scmp.lt.s32.totalorder %s267, 11
      %s269 = scalar_select %p268, %s267, 11
      %s270 = smul.addr %s269, 4
      %s271 = scalar_lea.vmem %s1, %s270
      %s272 = sadd.s32 %s17, 1
      %s273 = smul.u32 %s272, 4
      %s274 = smul.u32 4, %s17
      %p275 = scmp.lt.s32.totalorder %s274, 7
      %s276 = scalar_select %p275, %s274, 7
      %s277 = scalar_lea.vmem %s3, %s276
      %s278 = smul.u32 4, %s17
      %s279 = smul.u32 4, %s17
      %p280 = scmp.lt.s32.totalorder %s279, 7
      %s281 = scalar_select %p280, %s279, 7
      %s282 = smul.addr %s281, 8
      %s283 = scalar_lea.vmem %s4, %s282
      %s284 = smul.u32 4, %s17
      %p285 = scmp.lt.s32.totalorder %s17, 1
      %s286 = scalar_select %p285, %s17, 1
      %s287 = smul.addr %s286, 8
      %s288 = scalar_lea.vmem %s5, %s287
      %v289 = vld [vmem:[%s264] sm:$0xff]
      %v290 = vld [vmem:[%s264 + $0x8] sm:$0xff]
      %v291 = vld [vmem:[%s271] sm:$0xf]
      %v294 = vcombine.high %v289, %v289
      %v295 = vcombine.high %v290, %v290
      %v296 = vld [vmem:[%s2] sm:$0xff]
      %s297 = scalar_lea.vmem %s2, 8
      %v298 = vld [vmem:[%s297] sm:$0xff]
      %300 = vrot.lane.b32.xlu0 %v289, 127
      %v301 = vpop.permute.xlu0 %300
      %302 = vrot.lane.b32.xlu0 %v294, 127
      %v303 = vpop.permute.xlu0 %302
      %304 = vrot.lane.b32.xlu0 %v290, 127
      %v305 = vpop.permute.xlu0 %304
      %306 = vrot.lane.b32.xlu0 %v295, 127
      %v307 = vpop.permute.xlu0 %306
      %308 = vrot.lane.b32.xlu0 %v291, 127
      %v309 = vpop.permute.xlu0 %308
      %vm310 = vcmask 1039360
      %v311 = vsel %vm310, %v301, %v303
      %v312 = vsel %vm310, %v303, %v305
      %v313 = vsel %vm310, %v305, %v307
      %v314 = vsel %vm310, %v307, %v309
      %vm315 = vcmask 31744
      %v317 = vsel %vm315, %v298, 0
      %vm319 = vcmask 1043456
      %v320 = vsel %vm319, %v311, 0
      %v322 = vsel %vm319, %v312, 0
      %v324 = vsel %vm319, %v313, 0
      %v326 = vsel %vm319, %v314, 0
      %328 = vmatprep.subr.mxu0 %v322
      %329 = vmatpush1.msra.mxu0 %v320
      %330 = vmatprep.subr.mxu0 0.0
      %331 = vmatpush1.msra.mxu0 0.0
      %332 = vmatprep.subr.mxu0 0.0
      %333 = vmatpush1.msra.mxu0 0.0
      %334 = vmatprep.subr.mxu0 0.0
      %335 = vmatpush1.msra.mxu0 0.0
      %336 = vmatprep.subr.mxu0 0.0
      %337 = vmatpush1.msra.mxu0 0.0
      %338 = vmatprep.subr.mxu0 0.0
      %339 = vmatpush1.msra.mxu0 0.0
      %340 = vmatprep.subr.mxu0 0.0
      %341 = vmatpush1.msra.mxu0 0.0
      %342 = vmatprep.subr.mxu0 0.0
      %343 = vmatpush1.msra.mxu0 0.0
      %344 = vmatprep.subr.mxu0 0.0
      %345 = vmatpush1.msra.mxu0 0.0
      %346 = vmatprep.subr.mxu0 0.0
      %347 = vmatpush1.msra.mxu0 0.0
      %348 = vmatprep.subr.mxu0 0.0
      %349 = vmatpush1.msra.mxu0 0.0
      %350 = vmatprep.subr.mxu0 0.0
      %351 = vmatpush1.msra.mxu0 0.0
      %352 = vmatprep.subr.mxu0 0.0
      %353 = vmatpush1.msra.mxu0 0.0
      %354 = vmatprep.subr.mxu0 0.0
      %355 = vmatpush1.msra.mxu0 0.0
      %356 = vmatprep.subr.mxu0 0.0
      %357 = vmatpush1.msra.mxu0 0.0
      %358 = vmatprep.subr.mxu0 0.0
      %359 = vmatpush1.msra.mxu0 0.0
      %360 = vmatprep.subr.mxu0 0.0
      %361 = vmatpush1.msra.mxu0 0.0
      %362 = vmatprep.subr.mxu0 0.0
      %363 = vmatpush1.msra.mxu0 0.0
      %364 = vmatprep.subr.mxu0 0.0
      %365 = vmatpush1.msra.mxu0 0.0
      %366 = vmatprep.subr.mxu0 0.0
      %367 = vmatpush1.msra.mxu0 0.0
      %368 = vmatprep.subr.mxu0 0.0
      %369 = vmatpush1.msra.mxu0 0.0
      %370 = vmatprep.subr.mxu0 0.0
      %371 = vmatpush1.msra.mxu0 0.0
      %372 = vmatprep.subr.mxu0 0.0
      %373 = vmatpush1.msra.mxu0 0.0
      %374 = vmatprep.subr.mxu0 0.0
      %375 = vmatpush1.msra.mxu0 0.0
      %376 = vmatprep.subr.mxu0 0.0
      %377 = vmatpush1.msra.mxu0 0.0
      %378 = vmatprep.subr.mxu0 0.0
      %379 = vmatpush1.msra.mxu0 0.0
      %380 = vmatprep.subr.mxu0 0.0
      %381 = vmatpush1.msra.mxu0 0.0
      %382 = vmatprep.subr.mxu0 0.0
      %383 = vmatpush1.msra.mxu0 0.0
      %384 = vmatprep.subr.mxu0 0.0
      %385 = vmatpush1.msra.mxu0 0.0
      %386 = vmatprep.subr.mxu0 0.0
      %387 = vmatpush1.msra.mxu0 0.0
      %388 = vmatprep.subr.mxu0 0.0
      %389 = vmatpush1.msra.mxu0 0.0
      %390 = vmatprep.subr.mxu0 0.0
      %391 = vmatpush1.msra.mxu0 0.0
      %392 = vmatprep.mubr.f32.mxu0 0.0
      %393 = vmatmul.mubr.f32.gmra.mrb[0].mxu0 %v317
      %v394 = vpop.f32.mrb[0].mxu0
      %v395 = vadd.f32 0.0, %v394
      %v396 = vpop.f32.mrb[0].mxu0
      %v397 = vadd.f32 0.0, %v396
      %398 = vdwg.mxu0
      %399 = vmatprep.subr.mxu0 %v326
      %400 = vmatpush1.msra.mxu0 %v324
      %401 = vmatprep.subr.mxu0 0.0
      %402 = vmatpush1.msra.mxu0 0.0
      %403 = vmatprep.subr.mxu0 0.0
      %404 = vmatpush1.msra.mxu0 0.0
      %405 = vmatprep.subr.mxu0 0.0
      %406 = vmatpush1.msra.mxu0 0.0
      %407 = vmatprep.subr.mxu0 0.0
      %408 = vmatpush1.msra.mxu0 0.0
      %409 = vmatprep.subr.mxu0 0.0
      %410 = vmatpush1.msra.mxu0 0.0
      %411 = vmatprep.subr.mxu0 0.0
      %412 = vmatpush1.msra.mxu0 0.0
      %413 = vmatprep.subr.mxu0 0.0
      %414 = vmatpush1.msra.mxu0 0.0
      %415 = vmatprep.subr.mxu0 0.0
      %416 = vmatpush1.msra.mxu0 0.0
      %417 = vmatprep.subr.mxu0 0.0
      %418 = vmatpush1.msra.mxu0 0.0
      %419 = vmatprep.subr.mxu0 0.0
      %420 = vmatpush1.msra.mxu0 0.0
      %421 = vmatprep.subr.mxu0 0.0
      %422 = vmatpush1.msra.mxu0 0.0
      %423 = vmatprep.subr.mxu0 0.0
      %424 = vmatpush1.msra.mxu0 0.0
      %425 = vmatprep.subr.mxu0 0.0
      %426 = vmatpush1.msra.mxu0 0.0
      %427 = vmatprep.subr.mxu0 0.0
      %428 = vmatpush1.msra.mxu0 0.0
      %429 = vmatprep.subr.mxu0 0.0
      %430 = vmatpush1.msra.mxu0 0.0
      %431 = vmatprep.subr.mxu0 0.0
      %432 = vmatpush1.msra.mxu0 0.0
      %433 = vmatprep.subr.mxu0 0.0
      %434 = vmatpush1.msra.mxu0 0.0
      %435 = vmatprep.subr.mxu0 0.0
      %436 = vmatpush1.msra.mxu0 0.0
      %437 = vmatprep.subr.mxu0 0.0
      %438 = vmatpush1.msra.mxu0 0.0
      %439 = vmatprep.subr.mxu0 0.0
      %440 = vmatpush1.msra.mxu0 0.0
      %441 = vmatprep.subr.mxu0 0.0
      %442 = vmatpush1.msra.mxu0 0.0
      %443 = vmatprep.subr.mxu0 0.0
      %444 = vmatpush1.msra.mxu0 0.0
      %445 = vmatprep.subr.mxu0 0.0
      %446 = vmatpush1.msra.mxu0 0.0
      %447 = vmatprep.subr.mxu0 0.0
      %448 = vmatpush1.msra.mxu0 0.0
      %449 = vmatprep.subr.mxu0 0.0
      %450 = vmatpush1.msra.mxu0 0.0
      %451 = vmatprep.subr.mxu0 0.0
      %452 = vmatpush1.msra.mxu0 0.0
      %453 = vmatprep.subr.mxu0 0.0
      %454 = vmatpush1.msra.mxu0 0.0
      %455 = vmatprep.subr.mxu0 0.0
      %456 = vmatpush1.msra.mxu0 0.0
      %457 = vmatprep.subr.mxu0 0.0
      %458 = vmatpush1.msra.mxu0 0.0
      %459 = vmatprep.subr.mxu0 0.0
      %460 = vmatpush1.msra.mxu0 0.0
      %461 = vmatprep.subr.mxu0 0.0
      %462 = vmatpush1.msra.mxu0 0.0
      %463 = vmatprep.mubr.f32.mxu0 0.0
      %464 = vmatmul.mubr.f32.gmra.mrb[0].mxu0 %v317
      %v465 = vpop.f32.mrb[0].mxu0
      %v466 = vadd.f32 0.0, %v465
      %v467 = vpop.f32.mrb[0].mxu0
      %v468 = vadd.f32 0.0, %v467
      %469 = vdwg.mxu0
      %v471 = vsel %vm315, %v296, 0
      %v473 = vsel %vm319, %v289, 0
      %v475 = vsel %vm319, %v294, 0
      %v477 = vsel %vm319, %v290, 0
      %v479 = vsel %vm319, %v295, 0
      %481 = vmatprep.subr.mxu0 %v475
      %482 = vmatpush1.msra.mxu0 %v473
      %483 = vmatprep.subr.mxu0 0.0
      %484 = vmatpush1.msra.mxu0 0.0
      %485 = vmatprep.subr.mxu0 0.0
      %486 = vmatpush1.msra.mxu0 0.0
      %487 = vmatprep.subr.mxu0 0.0
      %488 = vmatpush1.msra.mxu0 0.0
      %489 = vmatprep.subr.mxu0 0.0
      %490 = vmatpush1.msra.mxu0 0.0
      %491 = vmatprep.subr.mxu0 0.0
      %492 = vmatpush1.msra.mxu0 0.0
      %493 = vmatprep.subr.mxu0 0.0
      %494 = vmatpush1.msra.mxu0 0.0
      %495 = vmatprep.subr.mxu0 0.0
      %496 = vmatpush1.msra.mxu0 0.0
      %497 = vmatprep.subr.mxu0 0.0
      %498 = vmatpush1.msra.mxu0 0.0
      %499 = vmatprep.subr.mxu0 0.0
      %500 = vmatpush1.msra.mxu0 0.0
      %501 = vmatprep.subr.mxu0 0.0
      %502 = vmatpush1.msra.mxu0 0.0
      %503 = vmatprep.subr.mxu0 0.0
      %504 = vmatpush1.msra.mxu0 0.0
      %505 = vmatprep.subr.mxu0 0.0
      %506 = vmatpush1.msra.mxu0 0.0
      %507 = vmatprep.subr.mxu0 0.0
      %508 = vmatpush1.msra.mxu0 0.0
      %509 = vmatprep.subr.mxu0 0.0
      %510 = vmatpush1.msra.mxu0 0.0
      %511 = vmatprep.subr.mxu0 0.0
      %512 = vmatpush1.msra.mxu0 0.0
      %513 = vmatprep.subr.mxu0 0.0
      %514 = vmatpush1.msra.mxu0 0.0
      %515 = vmatprep.subr.mxu0 0.0
      %516 = vmatpush1.msra.mxu0 0.0
      %517 = vmatprep.subr.mxu0 0.0
      %518 = vmatpush1.msra.mxu0 0.0
      %519 = vmatprep.subr.mxu0 0.0
      %520 = vmatpush1.msra.mxu0 0.0
      %521 = vmatprep.subr.mxu0 0.0
      %522 = vmatpush1.msra.mxu0 0.0
      %523 = vmatprep.subr.mxu0 0.0
      %524 = vmatpush1.msra.mxu0 0.0
      %525 = vmatprep.subr.mxu0 0.0
      %526 = vmatpush1.msra.mxu0 0.0
      %527 = vmatprep.subr.mxu0 0.0
      %528 = vmatpush1.msra.mxu0 0.0
      %529 = vmatprep.subr.mxu0 0.0
      %530 = vmatpush1.msra.mxu0 0.0
      %531 = vmatprep.subr.mxu0 0.0
      %532 = vmatpush1.msra.mxu0 0.0
      %533 = vmatprep.subr.mxu0 0.0
      %534 = vmatpush1.msra.mxu0 0.0
      %535 = vmatprep.subr.mxu0 0.0
      %536 = vmatpush1.msra.mxu0 0.0
      %537 = vmatprep.subr.mxu0 0.0
      %538 = vmatpush1.msra.mxu0 0.0
      %539 = vmatprep.subr.mxu0 0.0
      %540 = vmatpush1.msra.mxu0 0.0
      %541 = vmatprep.subr.mxu0 0.0
      %542 = vmatpush1.msra.mxu0 0.0
      %543 = vmatprep.subr.mxu0 0.0
      %544 = vmatpush1.msra.mxu0 0.0
      %545 = vmatprep.mubr.f32.mxu0 0.0
      %546 = vmatmul.mubr.f32.gmra.mrb[0].mxu0 %v471
      %v547 = vpop.f32.mrb[0].mxu0
      %v548 = vadd.f32 %v395, %v547
      %v549 = vpop.f32.mrb[0].mxu0
      %v550 = vadd.f32 %v397, %v549
      %551 = vdwg.mxu0
      %552 = vmatprep.subr.mxu0 %v479
      %553 = vmatpush1.msra.mxu0 %v477
      %554 = vmatprep.subr.mxu0 0.0
      %555 = vmatpush1.msra.mxu0 0.0
      %556 = vmatprep.subr.mxu0 0.0
      %557 = vmatpush1.msra.mxu0 0.0
      %558 = vmatprep.subr.mxu0 0.0
      %559 = vmatpush1.msra.mxu0 0.0
      %560 = vmatprep.subr.mxu0 0.0
      %561 = vmatpush1.msra.mxu0 0.0
      %562 = vmatprep.subr.mxu0 0.0
      %563 = vmatpush1.msra.mxu0 0.0
      %564 = vmatprep.subr.mxu0 0.0
      %565 = vmatpush1.msra.mxu0 0.0
      %566 = vmatprep.subr.mxu0 0.0
      %567 = vmatpush1.msra.mxu0 0.0
      %568 = vmatprep.subr.mxu0 0.0
      %569 = vmatpush1.msra.mxu0 0.0
      %570 = vmatprep.subr.mxu0 0.0
      %571 = vmatpush1.msra.mxu0 0.0
      %572 = vmatprep.subr.mxu0 0.0
      %573 = vmatpush1.msra.mxu0 0.0
      %574 = vmatprep.subr.mxu0 0.0
      %575 = vmatpush1.msra.mxu0 0.0
      %576 = vmatprep.subr.mxu0 0.0
      %577 = vmatpush1.msra.mxu0 0.0
      %578 = vmatprep.subr.mxu0 0.0
      %579 = vmatpush1.msra.mxu0 0.0
      %580 = vmatprep.subr.mxu0 0.0
      %581 = vmatpush1.msra.mxu0 0.0
      %582 = vmatprep.subr.mxu0 0.0
      %583 = vmatpush1.msra.mxu0 0.0
      %584 = vmatprep.subr.mxu0 0.0
      %585 = vmatpush1.msra.mxu0 0.0
      %586 = vmatprep.subr.mxu0 0.0
      %587 = vmatpush1.msra.mxu0 0.0
      %588 = vmatprep.subr.mxu0 0.0
      %589 = vmatpush1.msra.mxu0 0.0
      %590 = vmatprep.subr.mxu0 0.0
      %591 = vmatpush1.msra.mxu0 0.0
      %592 = vmatprep.subr.mxu0 0.0
      %593 = vmatpush1.msra.mxu0 0.0
      %594 = vmatprep.subr.mxu0 0.0
      %595 = vmatpush1.msra.mxu0 0.0
      %596 = vmatprep.subr.mxu0 0.0
      %597 = vmatpush1.msra.mxu0 0.0
      %598 = vmatprep.subr.mxu0 0.0
      %599 = vmatpush1.msra.mxu0 0.0
      %600 = vmatprep.subr.mxu0 0.0
      %601 = vmatpush1.msra.mxu0 0.0
      %602 = vmatprep.subr.mxu0 0.0
      %603 = vmatpush1.msra.mxu0 0.0
      %604 = vmatprep.subr.mxu0 0.0
      %605 = vmatpush1.msra.mxu0 0.0
      %606 = vmatprep.subr.mxu0 0.0
      %607 = vmatpush1.msra.mxu0 0.0
      %608 = vmatprep.subr.mxu0 0.0
      %609 = vmatpush1.msra.mxu0 0.0
      %610 = vmatprep.subr.mxu0 0.0
      %611 = vmatpush1.msra.mxu0 0.0
      %612 = vmatprep.subr.mxu0 0.0
      %613 = vmatpush1.msra.mxu0 0.0
      %614 = vmatprep.subr.mxu0 0.0
      %615 = vmatpush1.msra.mxu0 0.0
      %616 = vmatprep.mubr.f32.mxu0 0.0
      %617 = vmatmul.mubr.f32.gmra.mrb[0].mxu0 %v471
      %v618 = vpop.f32.mrb[0].mxu0
      %v619 = vadd.f32 %v466, %v618
      %v620 = vpop.f32.mrb[0].mxu0
      %v621 = vadd.f32 %v468, %v620
      %622 = vdwg.mxu0
      %s623 = scalar_lea.vmem %s2, 16
      %v624 = vld [vmem:[%s623] sm:$0xff]
      %625 = vrot.lane.b32.xlu0 %v289, 126
      %v626 = vpop.permute.xlu0 %625
      %627 = vrot.lane.b32.xlu0 %v294, 126
      %v628 = vpop.permute.xlu0 %627
      %629 = vrot.lane.b32.xlu0 %v290, 126
      %v630 = vpop.permute.xlu0 %629
      %631 = vrot.lane.b32.xlu0 %v295, 126
      %v632 = vpop.permute.xlu0 %631
      %633 = vrot.lane.b32.xlu0 %v291, 126
      %v634 = vpop.permute.xlu0 %633
      %vm635 = vcmask 1031168
      %v636 = vsel %vm635, %v626, %v628
      %v637 = vsel %vm635, %v628, %v630
      %v638 = vsel %vm635, %v630, %v632
      %v639 = vsel %vm635, %v632, %v634
      %v641 = vsel %vm315, %v624, 0
      %v643 = vsel %vm319, %v636, 0
      %v645 = vsel %vm319, %v637, 0
      %v647 = vsel %vm319, %v638, 0
      %v649 = vsel %vm319, %v639, 0
      %651 = vmatprep.subr.mxu0 %v645
      %652 = vmatpush1.msra.mxu0 %v643
      %653 = vmatprep.subr.mxu0 0.0
      %654 = vmatpush1.msra.mxu0 0.0
      %655 = vmatprep.subr.mxu0 0.0
      %656 = vmatpush1.msra.mxu0 0.0
      %657 = vmatprep.subr.mxu0 0.0
      %658 = vmatpush1.msra.mxu0 0.0
      %659 = vmatprep.subr.mxu0 0.0
      %660 = vmatpush1.msra.mxu0 0.0
      %661 = vmatprep.subr.mxu0 0.0
      %662 = vmatpush1.msra.mxu0 0.0
      %663 = vmatprep.subr.mxu0 0.0
      %664 = vmatpush1.msra.mxu0 0.0
      %665 = vmatprep.subr.mxu0 0.0
      %666 = vmatpush1.msra.mxu0 0.0
      %667 = vmatprep.subr.mxu0 0.0
      %668 = vmatpush1.msra.mxu0 0.0
      %669 = vmatprep.subr.mxu0 0.0
      %670 = vmatpush1.msra.mxu0 0.0
      %671 = vmatprep.subr.mxu0 0.0
      %672 = vmatpush1.msra.mxu0 0.0
      %673 = vmatprep.subr.mxu0 0.0
      %674 = vmatpush1.msra.mxu0 0.0
      %675 = vmatprep.subr.mxu0 0.0
      %676 = vmatpush1.msra.mxu0 0.0
      %677 = vmatprep.subr.mxu0 0.0
      %678 = vmatpush1.msra.mxu0 0.0
      %679 = vmatprep.subr.mxu0 0.0
      %680 = vmatpush1.msra.mxu0 0.0
      %681 = vmatprep.subr.mxu0 0.0
      %682 = vmatpush1.msra.mxu0 0.0
      %683 = vmatprep.subr.mxu0 0.0
      %684 = vmatpush1.msra.mxu0 0.0
      %685 = vmatprep.subr.mxu0 0.0
      %686 = vmatpush1.msra.mxu0 0.0
      %687 = vmatprep.subr.mxu0 0.0
      %688 = vmatpush1.msra.mxu0 0.0
      %689 = vmatprep.subr.mxu0 0.0
      %690 = vmatpush1.msra.mxu0 0.0
      %691 = vmatprep.subr.mxu0 0.0
      %692 = vmatpush1.msra.mxu0 0.0
      %693 = vmatprep.subr.mxu0 0.0
      %694 = vmatpush1.msra.mxu0 0.0
      %695 = vmatprep.subr.mxu0 0.0
      %696 = vmatpush1.msra.mxu0 0.0
      %697 = vmatprep.subr.mxu0 0.0
      %698 = vmatpush1.msra.mxu0 0.0
      %699 = vmatprep.subr.mxu0 0.0
      %700 = vmatpush1.msra.mxu0 0.0
      %701 = vmatprep.subr.mxu0 0.0
      %702 = vmatpush1.msra.mxu0 0.0
      %703 = vmatprep.subr.mxu0 0.0
      %704 = vmatpush1.msra.mxu0 0.0
      %705 = vmatprep.subr.mxu0 0.0
      %706 = vmatpush1.msra.mxu0 0.0
      %707 = vmatprep.subr.mxu0 0.0
      %708 = vmatpush1.msra.mxu0 0.0
      %709 = vmatprep.subr.mxu0 0.0
      %710 = vmatpush1.msra.mxu0 0.0
      %711 = vmatprep.subr.mxu0 0.0
      %712 = vmatpush1.msra.mxu0 0.0
      %713 = vmatprep.subr.mxu0 0.0
      %714 = vmatpush1.msra.mxu0 0.0
      %715 = vmatprep.mubr.f32.mxu0 0.0
      %716 = vmatmul.mubr.f32.gmra.mrb[0].mxu0 %v641
      %v717 = vpop.f32.mrb[0].mxu0
      %v718 = vadd.f32 0.0, %v717
      %v719 = vpop.f32.mrb[0].mxu0
      %v720 = vadd.f32 0.0, %v719
      %721 = vdwg.mxu0
      %722 = vmatprep.subr.mxu0 %v649
      %723 = vmatpush1.msra.mxu0 %v647
      %724 = vmatprep.subr.mxu0 0.0
      %725 = vmatpush1.msra.mxu0 0.0
      %726 = vmatprep.subr.mxu0 0.0
      %727 = vmatpush1.msra.mxu0 0.0
      %728 = vmatprep.subr.mxu0 0.0
      %729 = vmatpush1.msra.mxu0 0.0
      %730 = vmatprep.subr.mxu0 0.0
      %731 = vmatpush1.msra.mxu0 0.0
      %732 = vmatprep.subr.mxu0 0.0
      %733 = vmatpush1.msra.mxu0 0.0
      %734 = vmatprep.subr.mxu0 0.0
      %735 = vmatpush1.msra.mxu0 0.0
      %736 = vmatprep.subr.mxu0 0.0
      %737 = vmatpush1.msra.mxu0 0.0
      %738 = vmatprep.subr.mxu0 0.0
      %739 = vmatpush1.msra.mxu0 0.0
      %740 = vmatprep.subr.mxu0 0.0
      %741 = vmatpush1.msra.mxu0 0.0
      %742 = vmatprep.subr.mxu0 0.0
      %743 = vmatpush1.msra.mxu0 0.0
      %744 = vmatprep.subr.mxu0 0.0
      %745 = vmatpush1.msra.mxu0 0.0
      %746 = vmatprep.subr.mxu0 0.0
      %747 = vmatpush1.msra.mxu0 0.0
      %748 = vmatprep.subr.mxu0 0.0
      %749 = vmatpush1.msra.mxu0 0.0
      %750 = vmatprep.subr.mxu0 0.0
      %751 = vmatpush1.msra.mxu0 0.0
      %752 = vmatprep.subr.mxu0 0.0
      %753 = vmatpush1.msra.mxu0 0.0
      %754 = vmatprep.subr.mxu0 0.0
      %755 = vmatpush1.msra.mxu0 0.0
      %756 = vmatprep.subr.mxu0 0.0
      %757 = vmatpush1.msra.mxu0 0.0
      %758 = vmatprep.subr.mxu0 0.0
      %759 = vmatpush1.msra.mxu0 0.0
      %760 = vmatprep.subr.mxu0 0.0
      %761 = vmatpush1.msra.mxu0 0.0
      %762 = vmatprep.subr.mxu0 0.0
      %763 = vmatpush1.msra.mxu0 0.0
      %764 = vmatprep.subr.mxu0 0.0
      %765 = vmatpush1.msra.mxu0 0.0
      %766 = vmatprep.subr.mxu0 0.0
      %767 = vmatpush1.msra.mxu0 0.0
      %768 = vmatprep.subr.mxu0 0.0
      %769 = vmatpush1.msra.mxu0 0.0
      %770 = vmatprep.subr.mxu0 0.0
      %771 = vmatpush1.msra.mxu0 0.0
      %772 = vmatprep.subr.mxu0 0.0
      %773 = vmatpush1.msra.mxu0 0.0
      %774 = vmatprep.subr.mxu0 0.0
      %775 = vmatpush1.msra.mxu0 0.0
      %776 = vmatprep.subr.mxu0 0.0
      %777 = vmatpush1.msra.mxu0 0.0
      %778 = vmatprep.subr.mxu0 0.0
      %779 = vmatpush1.msra.mxu0 0.0
      %780 = vmatprep.subr.mxu0 0.0
      %781 = vmatpush1.msra.mxu0 0.0
      %782 = vmatprep.subr.mxu0 0.0
      %783 = vmatpush1.msra.mxu0 0.0
      %784 = vmatprep.subr.mxu0 0.0
      %785 = vmatpush1.msra.mxu0 0.0
      %786 = vmatprep.mubr.f32.mxu0 0.0
      %787 = vmatmul.mubr.f32.gmra.mrb[0].mxu0 %v641
      %v788 = vpop.f32.mrb[0].mxu0
      %v789 = vadd.f32 0.0, %v788
      %v790 = vpop.f32.mrb[0].mxu0
      %v791 = vadd.f32 0.0, %v790
      %792 = vdwg.mxu0
      %v793 = vadd.f32 %v548, %v718
      %v794 = vadd.f32 %v550, %v720
      %v795 = vadd.f32 %v619, %v789
      %v796 = vadd.f32 %v621, %v791
      %s797 = scalar_lea.vmem %s2, 24
      %v798 = vld [vmem:[%s797] sm:$0xff]
      %799 = vrot.lane.b32.xlu0 %v289, 110
      %v800 = vpop.permute.xlu0 %799
      %801 = vrot.lane.b32.xlu0 %v294, 110
      %v802 = vpop.permute.xlu0 %801
      %803 = vrot.lane.b32.xlu0 %v290, 110
      %v804 = vpop.permute.xlu0 %803
      %805 = vrot.lane.b32.xlu0 %v295, 110
      %v806 = vpop.permute.xlu0 %805
      %807 = vrot.lane.b32.xlu0 %v291, 110
      %v808 = vpop.permute.xlu0 %807
      %vm809 = vcmask 900096
      %v810 = vsel %vm809, %v800, %v802
      %v811 = vsel %vm809, %v802, %v804
      %v812 = vsel %vm809, %v804, %v806
      %v813 = vsel %vm809, %v806, %v808
      %v815 = vsel %vm315, %v798, 0
      %v817 = vsel %vm319, %v810, 0
      %v819 = vsel %vm319, %v811, 0
      %v821 = vsel %vm319, %v812, 0
      %v823 = vsel %vm319, %v813, 0
      %825 = vmatprep.subr.mxu0 %v819
      %826 = vmatpush1.msra.mxu0 %v817
      %827 = vmatprep.subr.mxu0 0.0
      %828 = vmatpush1.msra.mxu0 0.0
      %829 = vmatprep.subr.mxu0 0.0
      %830 = vmatpush1.msra.mxu0 0.0
      %831 = vmatprep.subr.mxu0 0.0
      %832 = vmatpush1.msra.mxu0 0.0
      %833 = vmatprep.subr.mxu0 0.0
      %834 = vmatpush1.msra.mxu0 0.0
      %835 = vmatprep.subr.mxu0 0.0
      %836 = vmatpush1.msra.mxu0 0.0
      %837 = vmatprep.subr.mxu0 0.0
      %838 = vmatpush1.msra.mxu0 0.0
      %839 = vmatprep.subr.mxu0 0.0
      %840 = vmatpush1.msra.mxu0 0.0
      %841 = vmatprep.subr.mxu0 0.0
      %842 = vmatpush1.msra.mxu0 0.0
      %843 = vmatprep.subr.mxu0 0.0
      %844 = vmatpush1.msra.mxu0 0.0
      %845 = vmatprep.subr.mxu0 0.0
      %846 = vmatpush1.msra.mxu0 0.0
      %847 = vmatprep.subr.mxu0 0.0
      %848 = vmatpush1.msra.mxu0 0.0
      %849 = vmatprep.subr.mxu0 0.0
      %850 = vmatpush1.msra.mxu0 0.0
      %851 = vmatprep.subr.mxu0 0.0
      %852 = vmatpush1.msra.mxu0 0.0
      %853 = vmatprep.subr.mxu0 0.0
      %854 = vmatpush1.msra.mxu0 0.0
      %855 = vmatprep.subr.mxu0 0.0
      %856 = vmatpush1.msra.mxu0 0.0
      %857 = vmatprep.subr.mxu0 0.0
      %858 = vmatpush1.msra.mxu0 0.0
      %859 = vmatprep.subr.mxu0 0.0
      %860 = vmatpush1.msra.mxu0 0.0
      %861 = vmatprep.subr.mxu0 0.0
      %862 = vmatpush1.msra.mxu0 0.0
      %863 = vmatprep.subr.mxu0 0.0
      %864 = vmatpush1.msra.mxu0 0.0
      %865 = vmatprep.subr.mxu0 0.0
      %866 = vmatpush1.msra.mxu0 0.0
      %867 = vmatprep.subr.mxu0 0.0
      %868 = vmatpush1.msra.mxu0 0.0
      %869 = vmatprep.subr.mxu0 0.0
      %870 = vmatpush1.msra.mxu0 0.0
      %871 = vmatprep.subr.mxu0 0.0
      %872 = vmatpush1.msra.mxu0 0.0
      %873 = vmatprep.subr.mxu0 0.0
      %874 = vmatpush1.msra.mxu0 0.0
      %875 = vmatprep.subr.mxu0 0.0
      %876 = vmatpush1.msra.mxu0 0.0
      %877 = vmatprep.subr.mxu0 0.0
      %878 = vmatpush1.msra.mxu0 0.0
      %879 = vmatprep.subr.mxu0 0.0
      %880 = vmatpush1.msra.mxu0 0.0
      %881 = vmatprep.subr.mxu0 0.0
      %882 = vmatpush1.msra.mxu0 0.0
      %883 = vmatprep.subr.mxu0 0.0
      %884 = vmatpush1.msra.mxu0 0.0
      %885 = vmatprep.subr.mxu0 0.0
      %886 = vmatpush1.msra.mxu0 0.0
      %887 = vmatprep.subr.mxu0 0.0
      %888 = vmatpush1.msra.mxu0 0.0
      %889 = vmatprep.mubr.f32.mxu0 0.0
      %890 = vmatmul.mubr.f32.gmra.mrb[0].mxu0 %v815
      %v891 = vpop.f32.mrb[0].mxu0
      %v892 = vadd.f32 0.0, %v891
      %v893 = vpop.f32.mrb[0].mxu0
      %v894 = vadd.f32 0.0, %v893
      %895 = vdwg.mxu0
      %896 = vmatprep.subr.mxu0 %v823
      %897 = vmatpush1.msra.mxu0 %v821
      %898 = vmatprep.subr.mxu0 0.0
      %899 = vmatpush1.msra.mxu0 0.0
      %900 = vmatprep.subr.mxu0 0.0
      %901 = vmatpush1.msra.mxu0 0.0
      %902 = vmatprep.subr.mxu0 0.0
      %903 = vmatpush1.msra.mxu0 0.0
      %904 = vmatprep.subr.mxu0 0.0
      %905 = vmatpush1.msra.mxu0 0.0
      %906 = vmatprep.subr.mxu0 0.0
      %907 = vmatpush1.msra.mxu0 0.0
      %908 = vmatprep.subr.mxu0 0.0
      %909 = vmatpush1.msra.mxu0 0.0
      %910 = vmatprep.subr.mxu0 0.0
      %911 = vmatpush1.msra.mxu0 0.0
      %912 = vmatprep.subr.mxu0 0.0
      %913 = vmatpush1.msra.mxu0 0.0
      %914 = vmatprep.subr.mxu0 0.0
      %915 = vmatpush1.msra.mxu0 0.0
      %916 = vmatprep.subr.mxu0 0.0
      %917 = vmatpush1.msra.mxu0 0.0
      %918 = vmatprep.subr.mxu0 0.0
      %919 = vmatpush1.msra.mxu0 0.0
      %920 = vmatprep.subr.mxu0 0.0
      %921 = vmatpush1.msra.mxu0 0.0
      %922 = vmatprep.subr.mxu0 0.0
      %923 = vmatpush1.msra.mxu0 0.0
      %924 = vmatprep.subr.mxu0 0.0
      %925 = vmatpush1.msra.mxu0 0.0
      %926 = vmatprep.subr.mxu0 0.0
      %927 = vmatpush1.msra.mxu0 0.0
      %928 = vmatprep.subr.mxu0 0.0
      %929 = vmatpush1.msra.mxu0 0.0
      %930 = vmatprep.subr.mxu0 0.0
      %931 = vmatpush1.msra.mxu0 0.0
      %932 = vmatprep.subr.mxu0 0.0
      %933 = vmatpush1.msra.mxu0 0.0
      %934 = vmatprep.subr.mxu0 0.0
      %935 = vmatpush1.msra.mxu0 0.0
      %936 = vmatprep.subr.mxu0 0.0
      %937 = vmatpush1.msra.mxu0 0.0
      %938 = vmatprep.subr.mxu0 0.0
      %939 = vmatpush1.msra.mxu0 0.0
      %940 = vmatprep.subr.mxu0 0.0
      %941 = vmatpush1.msra.mxu0 0.0
      %942 = vmatprep.subr.mxu0 0.0
      %943 = vmatpush1.msra.mxu0 0.0
      %944 = vmatprep.subr.mxu0 0.0
      %945 = vmatpush1.msra.mxu0 0.0
      %946 = vmatprep.subr.mxu0 0.0
      %947 = vmatpush1.msra.mxu0 0.0
      %948 = vmatprep.subr.mxu0 0.0
      %949 = vmatpush1.msra.mxu0 0.0
      %950 = vmatprep.subr.mxu0 0.0
      %951 = vmatpush1.msra.mxu0 0.0
      %952 = vmatprep.subr.mxu0 0.0
      %953 = vmatpush1.msra.mxu0 0.0
      %954 = vmatprep.subr.mxu0 0.0
      %955 = vmatpush1.msra.mxu0 0.0
      %956 = vmatprep.subr.mxu0 0.0
      %957 = vmatpush1.msra.mxu0 0.0
      %958 = vmatprep.subr.mxu0 0.0
      %959 = vmatpush1.msra.mxu0 0.0
      %960 = vmatprep.mubr.f32.mxu0 0.0
      %961 = vmatmul.mubr.f32.gmra.mrb[0].mxu0 %v815
      %v962 = vpop.f32.mrb[0].mxu0
      %v963 = vadd.f32 0.0, %v962
      %v964 = vpop.f32.mrb[0].mxu0
      %v965 = vadd.f32 0.0, %v964
      %966 = vdwg.mxu0
      %v967 = vadd.f32 %v793, %v892
      %v968 = vadd.f32 %v794, %v894
      %v969 = vadd.f32 %v795, %v963
      %v970 = vadd.f32 %v796, %v965
      %s971 = scalar_lea.vmem %s2, 32
      %v972 = vld [vmem:[%s971] sm:$0xff]
      %973 = vrot.lane.b32.xlu0 %v289, 109
      %v974 = vpop.permute.xlu0 %973
      %975 = vrot.lane.b32.xlu0 %v294, 109
      %v976 = vpop.permute.xlu0 %975
      %977 = vrot.lane.b32.xlu0 %v290, 109
      %v978 = vpop.permute.xlu0 %977
      %979 = vrot.lane.b32.xlu0 %v295, 109
      %v980 = vpop.permute.xlu0 %979
      %981 = vrot.lane.b32.xlu0 %v291, 109
      %v982 = vpop.permute.xlu0 %981
      %vm983 = vcmask 891904
      %v984 = vsel %vm983, %v974, %v976
      %v985 = vsel %vm983, %v976, %v978
      %v986 = vsel %vm983, %v978, %v980
      %v987 = vsel %vm983, %v980, %v982
      %v989 = vsel %vm315, %v972, 0
      %v991 = vsel %vm319, %v984, 0
      %v993 = vsel %vm319, %v985, 0
      %v995 = vsel %vm319, %v986, 0
      %v997 = vsel %vm319, %v987, 0
      %999 = vmatprep.subr.mxu0 %v993
      %1000 = vmatpush1.msra.mxu0 %v991
      %1001 = vmatprep.subr.mxu0 0.0
      %1002 = vmatpush1.msra.mxu0 0.0
      %1003 = vmatprep.subr.mxu0 0.0
      %1004 = vmatpush1.msra.mxu0 0.0
      %1005 = vmatprep.subr.mxu0 0.0
      %1006 = vmatpush1.msra.mxu0 0.0
      %1007 = vmatprep.subr.mxu0 0.0
      %1008 = vmatpush1.msra.mxu0 0.0
      %1009 = vmatprep.subr.mxu0 0.0
      %1010 = vmatpush1.msra.mxu0 0.0
      %1011 = vmatprep.subr.mxu0 0.0
      %1012 = vmatpush1.msra.mxu0 0.0
      %1013 = vmatprep.subr.mxu0 0.0
      %1014 = vmatpush1.msra.mxu0 0.0
      %1015 = vmatprep.subr.mxu0 0.0
      %1016 = vmatpush1.msra.mxu0 0.0
      %1017 = vmatprep.subr.mxu0 0.0
      %1018 = vmatpush1.msra.mxu0 0.0
      %1019 = vmatprep.subr.mxu0 0.0
      %1020 = vmatpush1.msra.mxu0 0.0
      %1021 = vmatprep.subr.mxu0 0.0
      %1022 = vmatpush1.msra.mxu0 0.0
      %1023 = vmatprep.subr.mxu0 0.0
      %1024 = vmatpush1.msra.mxu0 0.0
      %1025 = vmatprep.subr.mxu0 0.0
      %1026 = vmatpush1.msra.mxu0 0.0
      %1027 = vmatprep.subr.mxu0 0.0
      %1028 = vmatpush1.msra.mxu0 0.0
      %1029 = vmatprep.subr.mxu0 0.0
      %1030 = vmatpush1.msra.mxu0 0.0
      %1031 = vmatprep.subr.mxu0 0.0
      %1032 = vmatpush1.msra.mxu0 0.0
      %1033 = vmatprep.subr.mxu0 0.0
      %1034 = vmatpush1.msra.mxu0 0.0
      %1035 = vmatprep.subr.mxu0 0.0
      %1036 = vmatpush1.msra.mxu0 0.0
      %1037 = vmatprep.subr.mxu0 0.0
      %1038 = vmatpush1.msra.mxu0 0.0
      %1039 = vmatprep.subr.mxu0 0.0
      %1040 = vmatpush1.msra.mxu0 0.0
      %1041 = vmatprep.subr.mxu0 0.0
      %1042 = vmatpush1.msra.mxu0 0.0
      %1043 = vmatprep.subr.mxu0 0.0
      %1044 = vmatpush1.msra.mxu0 0.0
      %1045 = vmatprep.subr.mxu0 0.0
      %1046 = vmatpush1.msra.mxu0 0.0
      %1047 = vmatprep.subr.mxu0 0.0
      %1048 = vmatpush1.msra.mxu0 0.0
      %1049 = vmatprep.subr.mxu0 0.0
      %1050 = vmatpush1.msra.mxu0 0.0
      %1051 = vmatprep.subr.mxu0 0.0
      %1052 = vmatpush1.msra.mxu0 0.0
      %1053 = vmatprep.subr.mxu0 0.0
      %1054 = vmatpush1.msra.mxu0 0.0
      %1055 = vmatprep.subr.mxu0 0.0
      %1056 = vmatpush1.msra.mxu0 0.0
      %1057 = vmatprep.subr.mxu0 0.0
      %1058 = vmatpush1.msra.mxu0 0.0
      %1059 = vmatprep.subr.mxu0 0.0
      %1060 = vmatpush1.msra.mxu0 0.0
      %1061 = vmatprep.subr.mxu0 0.0
      %1062 = vmatpush1.msra.mxu0 0.0
      %1063 = vmatprep.mubr.f32.mxu0 0.0
      %1064 = vmatmul.mubr.f32.gmra.mrb[0].mxu0 %v989
      %v1065 = vpop.f32.mrb[0].mxu0
      %v1066 = vadd.f32 0.0, %v1065
      %v1067 = vpop.f32.mrb[0].mxu0
      %v1068 = vadd.f32 0.0, %v1067
      %1069 = vdwg.mxu0
      %1070 = vmatprep.subr.mxu0 %v997
      %1071 = vmatpush1.msra.mxu0 %v995
      %1072 = vmatprep.subr.mxu0 0.0
      %1073 = vmatpush1.msra.mxu0 0.0
      %1074 = vmatprep.subr.mxu0 0.0
      %1075 = vmatpush1.msra.mxu0 0.0
      %1076 = vmatprep.subr.mxu0 0.0
      %1077 = vmatpush1.msra.mxu0 0.0
      %1078 = vmatprep.subr.mxu0 0.0
      %1079 = vmatpush1.msra.mxu0 0.0
      %1080 = vmatprep.subr.mxu0 0.0
      %1081 = vmatpush1.msra.mxu0 0.0
      %1082 = vmatprep.subr.mxu0 0.0
      %1083 = vmatpush1.msra.mxu0 0.0
      %1084 = vmatprep.subr.mxu0 0.0
      %1085 = vmatpush1.msra.mxu0 0.0
      %1086 = vmatprep.subr.mxu0 0.0
      %1087 = vmatpush1.msra.mxu0 0.0
      %1088 = vmatprep.subr.mxu0 0.0
      %1089 = vmatpush1.msra.mxu0 0.0
      %1090 = vmatprep.subr.mxu0 0.0
      %1091 = vmatpush1.msra.mxu0 0.0
      %1092 = vmatprep.subr.mxu0 0.0
      %1093 = vmatpush1.msra.mxu0 0.0
      %1094 = vmatprep.subr.mxu0 0.0
      %1095 = vmatpush1.msra.mxu0 0.0
      %1096 = vmatprep.subr.mxu0 0.0
      %1097 = vmatpush1.msra.mxu0 0.0
      %1098 = vmatprep.subr.mxu0 0.0
      %1099 = vmatpush1.msra.mxu0 0.0
      %1100 = vmatprep.subr.mxu0 0.0
      %1101 = vmatpush1.msra.mxu0 0.0
      %1102 = vmatprep.subr.mxu0 0.0
      %1103 = vmatpush1.msra.mxu0 0.0
      %1104 = vmatprep.subr.mxu0 0.0
      %1105 = vmatpush1.msra.mxu0 0.0
      %1106 = vmatprep.subr.mxu0 0.0
      %1107 = vmatpush1.msra.mxu0 0.0
      %1108 = vmatprep.subr.mxu0 0.0
      %1109 = vmatpush1.msra.mxu0 0.0
      %1110 = vmatprep.subr.mxu0 0.0
      %1111 = vmatpush1.msra.mxu0 0.0
      %1112 = vmatprep.subr.mxu0 0.0
      %1113 = vmatpush1.msra.mxu0 0.0
      %1114 = vmatprep.subr.mxu0 0.0
      %1115 = vmatpush1.msra.mxu0 0.0
      %1116 = vmatprep.subr.mxu0 0.0
      %1117 = vmatpush1.msra.mxu0 0.0
      %1118 = vmatprep.subr.mxu0 0.0
      %1119 = vmatpush1.msra.mxu0 0.0
      %1120 = vmatprep.subr.mxu0 0.0
      %1121 = vmatpush1.msra.mxu0 0.0
      %1122 = vmatprep.subr.mxu0 0.0
      %1123 = vmatpush1.msra.mxu0 0.0
      %1124 = vmatprep.subr.mxu0 0.0
      %1125 = vmatpush1.msra.mxu0 0.0
      %1126 = vmatprep.subr.mxu0 0.0
      %1127 = vmatpush1.msra.mxu0 0.0
      %1128 = vmatprep.subr.mxu0 0.0
      %1129 = vmatpush1.msra.mxu0 0.0
      %1130 = vmatprep.subr.mxu0 0.0
      %1131 = vmatpush1.msra.mxu0 0.0
      %1132 = vmatprep.subr.mxu0 0.0
      %1133 = vmatpush1.msra.mxu0 0.0
      %1134 = vmatprep.mubr.f32.mxu0 0.0
      %1135 = vmatmul.mubr.f32.gmra.mrb[0].mxu0 %v989
      %v1136 = vpop.f32.mrb[0].mxu0
      %v1137 = vadd.f32 0.0, %v1136
      %v1138 = vpop.f32.mrb[0].mxu0
      %v1139 = vadd.f32 0.0, %v1138
      %1140 = vdwg.mxu0
      %v1141 = vadd.f32 %v967, %v1066
      %v1142 = vadd.f32 %v968, %v1068
      %v1143 = vadd.f32 %v969, %v1137
      %v1144 = vadd.f32 %v970, %v1139
      %s1145 = scalar_lea.vmem %s2, 40
      %v1146 = vld [vmem:[%s1145] sm:$0xff]
      %1147 = vrot.lane.b32.xlu0 %v289, 108
      %v1148 = vpop.permute.xlu0 %1147
      %1149 = vrot.lane.b32.xlu0 %v294, 108
      %v1150 = vpop.permute.xlu0 %1149
      %1151 = vrot.lane.b32.xlu0 %v290, 108
      %v1152 = vpop.permute.xlu0 %1151
      %1153 = vrot.lane.b32.xlu0 %v295, 108
      %v1154 = vpop.permute.xlu0 %1153
      %1155 = vrot.lane.b32.xlu0 %v291, 108
      %v1156 = vpop.permute.xlu0 %1155
      %vm1157 = vcmask 883712
      %v1158 = vsel %vm1157, %v1148, %v1150
      %v1159 = vsel %vm1157, %v1150, %v1152
      %v1160 = vsel %vm1157, %v1152, %v1154
      %v1161 = vsel %vm1157, %v1154, %v1156
      %v1163 = vsel %vm315, %v1146, 0
      %v1165 = vsel %vm319, %v1158, 0
      %v1167 = vsel %vm319, %v1159, 0
      %v1169 = vsel %vm319, %v1160, 0
      %v1171 = vsel %vm319, %v1161, 0
      %1173 = vmatprep.subr.mxu0 %v1167
      %1174 = vmatpush1.msra.mxu0 %v1165
      %1175 = vmatprep.subr.mxu0 0.0
      %1176 = vmatpush1.msra.mxu0 0.0
      %1177 = vmatprep.subr.mxu0 0.0
      %1178 = vmatpush1.msra.mxu0 0.0
      %1179 = vmatprep.subr.mxu0 0.0
      %1180 = vmatpush1.msra.mxu0 0.0
      %1181 = vmatprep.subr.mxu0 0.0
      %1182 = vmatpush1.msra.mxu0 0.0
      %1183 = vmatprep.subr.mxu0 0.0
      %1184 = vmatpush1.msra.mxu0 0.0
      %1185 = vmatprep.subr.mxu0 0.0
      %1186 = vmatpush1.msra.mxu0 0.0
      %1187 = vmatprep.subr.mxu0 0.0
      %1188 = vmatpush1.msra.mxu0 0.0
      %1189 = vmatprep.subr.mxu0 0.0
      %1190 = vmatpush1.msra.mxu0 0.0
      %1191 = vmatprep.subr.mxu0 0.0
      %1192 = vmatpush1.msra.mxu0 0.0
      %1193 = vmatprep.subr.mxu0 0.0
      %1194 = vmatpush1.msra.mxu0 0.0
      %1195 = vmatprep.subr.mxu0 0.0
      %1196 = vmatpush1.msra.mxu0 0.0
      %1197 = vmatprep.subr.mxu0 0.0
      %1198 = vmatpush1.msra.mxu0 0.0
      %1199 = vmatprep.subr.mxu0 0.0
      %1200 = vmatpush1.msra.mxu0 0.0
      %1201 = vmatprep.subr.mxu0 0.0
      %1202 = vmatpush1.msra.mxu0 0.0
      %1203 = vmatprep.subr.mxu0 0.0
      %1204 = vmatpush1.msra.mxu0 0.0
      %1205 = vmatprep.subr.mxu0 0.0
      %1206 = vmatpush1.msra.mxu0 0.0
      %1207 = vmatprep.subr.mxu0 0.0
      %1208 = vmatpush1.msra.mxu0 0.0
      %1209 = vmatprep.subr.mxu0 0.0
      %1210 = vmatpush1.msra.mxu0 0.0
      %1211 = vmatprep.subr.mxu0 0.0
      %1212 = vmatpush1.msra.mxu0 0.0
      %1213 = vmatprep.subr.mxu0 0.0
      %1214 = vmatpush1.msra.mxu0 0.0
      %1215 = vmatprep.subr.mxu0 0.0
      %1216 = vmatpush1.msra.mxu0 0.0
      %1217 = vmatprep.subr.mxu0 0.0
      %1218 = vmatpush1.msra.mxu0 0.0
      %1219 = vmatprep.subr.mxu0 0.0
      %1220 = vmatpush1.msra.mxu0 0.0
      %1221 = vmatprep.subr.mxu0 0.0
      %1222 = vmatpush1.msra.mxu0 0.0
      %1223 = vmatprep.subr.mxu0 0.0
      %1224 = vmatpush1.msra.mxu0 0.0
      %1225 = vmatprep.subr.mxu0 0.0
      %1226 = vmatpush1.msra.mxu0 0.0
      %1227 = vmatprep.subr.mxu0 0.0
      %1228 = vmatpush1.msra.mxu0 0.0
      %1229 = vmatprep.subr.mxu0 0.0
      %1230 = vmatpush1.msra.mxu0 0.0
      %1231 = vmatprep.subr.mxu0 0.0
      %1232 = vmatpush1.msra.mxu0 0.0
      %1233 = vmatprep.subr.mxu0 0.0
      %1234 = vmatpush1.msra.mxu0 0.0
      %1235 = vmatprep.subr.mxu0 0.0
      %1236 = vmatpush1.msra.mxu0 0.0
      %1237 = vmatprep.mubr.f32.mxu0 0.0
      %1238 = vmatmul.mubr.f32.gmra.mrb[0].mxu0 %v1163
      %v1239 = vpop.f32.mrb[0].mxu0
      %v1240 = vadd.f32 0.0, %v1239
      %v1241 = vpop.f32.mrb[0].mxu0
      %v1242 = vadd.f32 0.0, %v1241
      %1243 = vdwg.mxu0
      %1244 = vmatprep.subr.mxu0 %v1171
      %1245 = vmatpush1.msra.mxu0 %v1169
      %1246 = vmatprep.subr.mxu0 0.0
      %1247 = vmatpush1.msra.mxu0 0.0
      %1248 = vmatprep.subr.mxu0 0.0
      %1249 = vmatpush1.msra.mxu0 0.0
      %1250 = vmatprep.subr.mxu0 0.0
      %1251 = vmatpush1.msra.mxu0 0.0
      %1252 = vmatprep.subr.mxu0 0.0
      %1253 = vmatpush1.msra.mxu0 0.0
      %1254 = vmatprep.subr.mxu0 0.0
      %1255 = vmatpush1.msra.mxu0 0.0
      %1256 = vmatprep.subr.mxu0 0.0
      %1257 = vmatpush1.msra.mxu0 0.0
      %1258 = vmatprep.subr.mxu0 0.0
      %1259 = vmatpush1.msra.mxu0 0.0
      %1260 = vmatprep.subr.mxu0 0.0
      %1261 = vmatpush1.msra.mxu0 0.0
      %1262 = vmatprep.subr.mxu0 0.0
      %1263 = vmatpush1.msra.mxu0 0.0
      %1264 = vmatprep.subr.mxu0 0.0
      %1265 = vmatpush1.msra.mxu0 0.0
      %1266 = vmatprep.subr.mxu0 0.0
      %1267 = vmatpush1.msra.mxu0 0.0
      %1268 = vmatprep.subr.mxu0 0.0
      %1269 = vmatpush1.msra.mxu0 0.0
      %1270 = vmatprep.subr.mxu0 0.0
      %1271 = vmatpush1.msra.mxu0 0.0
      %1272 = vmatprep.subr.mxu0 0.0
      %1273 = vmatpush1.msra.mxu0 0.0
      %1274 = vmatprep.subr.mxu0 0.0
      %1275 = vmatpush1.msra.mxu0 0.0
      %1276 = vmatprep.subr.mxu0 0.0
      %1277 = vmatpush1.msra.mxu0 0.0
      %1278 = vmatprep.subr.mxu0 0.0
      %1279 = vmatpush1.msra.mxu0 0.0
      %1280 = vmatprep.subr.mxu0 0.0
      %1281 = vmatpush1.msra.mxu0 0.0
      %1282 = vmatprep.subr.mxu0 0.0
      %1283 = vmatpush1.msra.mxu0 0.0
      %1284 = vmatprep.subr.mxu0 0.0
      %1285 = vmatpush1.msra.mxu0 0.0
      %1286 = vmatprep.subr.mxu0 0.0
      %1287 = vmatpush1.msra.mxu0 0.0
      %1288 = vmatprep.subr.mxu0 0.0
      %1289 = vmatpush1.msra.mxu0 0.0
      %1290 = vmatprep.subr.mxu0 0.0
      %1291 = vmatpush1.msra.mxu0 0.0
      %1292 = vmatprep.subr.mxu0 0.0
      %1293 = vmatpush1.msra.mxu0 0.0
      %1294 = vmatprep.subr.mxu0 0.0
      %1295 = vmatpush1.msra.mxu0 0.0
      %1296 = vmatprep.subr.mxu0 0.0
      %1297 = vmatpush1.msra.mxu0 0.0
      %1298 = vmatprep.subr.mxu0 0.0
      %1299 = vmatpush1.msra.mxu0 0.0
      %1300 = vmatprep.subr.mxu0 0.0
      %1301 = vmatpush1.msra.mxu0 0.0
      %1302 = vmatprep.subr.mxu0 0.0
      %1303 = vmatpush1.msra.mxu0 0.0
      %1304 = vmatprep.subr.mxu0 0.0
      %1305 = vmatpush1.msra.mxu0 0.0
      %1306 = vmatprep.subr.mxu0 0.0
      %1307 = vmatpush1.msra.mxu0 0.0
      %1308 = vmatprep.mubr.f32.mxu0 0.0
      %1309 = vmatmul.mubr.f32.gmra.mrb[0].mxu0 %v1163
      %v1310 = vpop.f32.mrb[0].mxu0
      %v1311 = vadd.f32 0.0, %v1310
      %v1312 = vpop.f32.mrb[0].mxu0
      %v1313 = vadd.f32 0.0, %v1312
      %1314 = vdwg.mxu0
      %v1315 = vadd.f32 %v1141, %v1240
      %v1316 = vadd.f32 %v1142, %v1242
      %v1317 = vadd.f32 %v1143, %v1311
      %v1318 = vadd.f32 %v1144, %v1313
      %s1319 = scalar_lea.vmem %s2, 48
      %v1320 = vld [vmem:[%s1319] sm:$0xff]
      %1321 = vrot.lane.b32.xlu0 %v289, 92
      %v1322 = vpop.permute.xlu0 %1321
      %1323 = vrot.lane.b32.xlu0 %v294, 92
      %v1324 = vpop.permute.xlu0 %1323
      %1325 = vrot.lane.b32.xlu0 %v290, 92
      %v1326 = vpop.permute.xlu0 %1325
      %1327 = vrot.lane.b32.xlu0 %v295, 92
      %v1328 = vpop.permute.xlu0 %1327
      %1329 = vrot.lane.b32.xlu0 %v291, 92
      %v1330 = vpop.permute.xlu0 %1329
      %vm1331 = vcmask 752640
      %v1332 = vsel %vm1331, %v1322, %v1324
      %v1333 = vsel %vm1331, %v1324, %v1326
      %v1334 = vsel %vm1331, %v1326, %v1328
      %v1335 = vsel %vm1331, %v1328, %v1330
      %v1337 = vsel %vm315, %v1320, 0
      %v1339 = vsel %vm319, %v1332, 0
      %v1341 = vsel %vm319, %v1333, 0
      %v1343 = vsel %vm319, %v1334, 0
      %v1345 = vsel %vm319, %v1335, 0
      %1347 = vmatprep.subr.mxu0 %v1341
      %1348 = vmatpush1.msra.mxu0 %v1339
      %1349 = vmatprep.subr.mxu0 0.0
      %1350 = vmatpush1.msra.mxu0 0.0
      %1351 = vmatprep.subr.mxu0 0.0
      %1352 = vmatpush1.msra.mxu0 0.0
      %1353 = vmatprep.subr.mxu0 0.0
      %1354 = vmatpush1.msra.mxu0 0.0
      %1355 = vmatprep.subr.mxu0 0.0
      %1356 = vmatpush1.msra.mxu0 0.0
      %1357 = vmatprep.subr.mxu0 0.0
      %1358 = vmatpush1.msra.mxu0 0.0
      %1359 = vmatprep.subr.mxu0 0.0
      %1360 = vmatpush1.msra.mxu0 0.0
      %1361 = vmatprep.subr.mxu0 0.0
      %1362 = vmatpush1.msra.mxu0 0.0
      %1363 = vmatprep.subr.mxu0 0.0
      %1364 = vmatpush1.msra.mxu0 0.0
      %1365 = vmatprep.subr.mxu0 0.0
      %1366 = vmatpush1.msra.mxu0 0.0
      %1367 = vmatprep.subr.mxu0 0.0
      %1368 = vmatpush1.msra.mxu0 0.0
      %1369 = vmatprep.subr.mxu0 0.0
      %1370 = vmatpush1.msra.mxu0 0.0
      %1371 = vmatprep.subr.mxu0 0.0
      %1372 = vmatpush1.msra.mxu0 0.0
      %1373 = vmatprep.subr.mxu0 0.0
      %1374 = vmatpush1.msra.mxu0 0.0
      %1375 = vmatprep.subr.mxu0 0.0
      %1376 = vmatpush1.msra.mxu0 0.0
      %1377 = vmatprep.subr.mxu0 0.0
      %1378 = vmatpush1.msra.mxu0 0.0
      %1379 = vmatprep.subr.mxu0 0.0
      %1380 = vmatpush1.msra.mxu0 0.0
      %1381 = vmatprep.subr.mxu0 0.0
      %1382 = vmatpush1.msra.mxu0 0.0
      %1383 = vmatprep.subr.mxu0 0.0
      %1384 = vmatpush1.msra.mxu0 0.0
      %1385 = vmatprep.subr.mxu0 0.0
      %1386 = vmatpush1.msra.mxu0 0.0
      %1387 = vmatprep.subr.mxu0 0.0
      %1388 = vmatpush1.msra.mxu0 0.0
      %1389 = vmatprep.subr.mxu0 0.0
      %1390 = vmatpush1.msra.mxu0 0.0
      %1391 = vmatprep.subr.mxu0 0.0
      %1392 = vmatpush1.msra.mxu0 0.0
      %1393 = vmatprep.subr.mxu0 0.0
      %1394 = vmatpush1.msra.mxu0 0.0
      %1395 = vmatprep.subr.mxu0 0.0
      %1396 = vmatpush1.msra.mxu0 0.0
      %1397 = vmatprep.subr.mxu0 0.0
      %1398 = vmatpush1.msra.mxu0 0.0
      %1399 = vmatprep.subr.mxu0 0.0
      %1400 = vmatpush1.msra.mxu0 0.0
      %1401 = vmatprep.subr.mxu0 0.0
      %1402 = vmatpush1.msra.mxu0 0.0
      %1403 = vmatprep.subr.mxu0 0.0
      %1404 = vmatpush1.msra.mxu0 0.0
      %1405 = vmatprep.subr.mxu0 0.0
      %1406 = vmatpush1.msra.mxu0 0.0
      %1407 = vmatprep.subr.mxu0 0.0
      %1408 = vmatpush1.msra.mxu0 0.0
      %1409 = vmatprep.subr.mxu0 0.0
      %1410 = vmatpush1.msra.mxu0 0.0
      %1411 = vmatprep.mubr.f32.mxu0 0.0
      %1412 = vmatmul.mubr.f32.gmra.mrb[0].mxu0 %v1337
      %v1413 = vpop.f32.mrb[0].mxu0
      %v1414 = vadd.f32 0.0, %v1413
      %v1415 = vpop.f32.mrb[0].mxu0
      %v1416 = vadd.f32 0.0, %v1415
      %1417 = vdwg.mxu0
      %1418 = vmatprep.subr.mxu0 %v1345
      %1419 = vmatpush1.msra.mxu0 %v1343
      %1420 = vmatprep.subr.mxu0 0.0
      %1421 = vmatpush1.msra.mxu0 0.0
      %1422 = vmatprep.subr.mxu0 0.0
      %1423 = vmatpush1.msra.mxu0 0.0
      %1424 = vmatprep.subr.mxu0 0.0
      %1425 = vmatpush1.msra.mxu0 0.0
      %1426 = vmatprep.subr.mxu0 0.0
      %1427 = vmatpush1.msra.mxu0 0.0
      %1428 = vmatprep.subr.mxu0 0.0
      %1429 = vmatpush1.msra.mxu0 0.0
      %1430 = vmatprep.subr.mxu0 0.0
      %1431 = vmatpush1.msra.mxu0 0.0
      %1432 = vmatprep.subr.mxu0 0.0
      %1433 = vmatpush1.msra.mxu0 0.0
      %1434 = vmatprep.subr.mxu0 0.0
      %1435 = vmatpush1.msra.mxu0 0.0
      %1436 = vmatprep.subr.mxu0 0.0
      %1437 = vmatpush1.msra.mxu0 0.0
      %1438 = vmatprep.subr.mxu0 0.0
      %1439 = vmatpush1.msra.mxu0 0.0
      %1440 = vmatprep.subr.mxu0 0.0
      %1441 = vmatpush1.msra.mxu0 0.0
      %1442 = vmatprep.subr.mxu0 0.0
      %1443 = vmatpush1.msra.mxu0 0.0
      %1444 = vmatprep.subr.mxu0 0.0
      %1445 = vmatpush1.msra.mxu0 0.0
      %1446 = vmatprep.subr.mxu0 0.0
      %1447 = vmatpush1.msra.mxu0 0.0
      %1448 = vmatprep.subr.mxu0 0.0
      %1449 = vmatpush1.msra.mxu0 0.0
      %1450 = vmatprep.subr.mxu0 0.0
      %1451 = vmatpush1.msra.mxu0 0.0
      %1452 = vmatprep.subr.mxu0 0.0
      %1453 = vmatpush1.msra.mxu0 0.0
      %1454 = vmatprep.subr.mxu0 0.0
      %1455 = vmatpush1.msra.mxu0 0.0
      %1456 = vmatprep.subr.mxu0 0.0
      %1457 = vmatpush1.msra.mxu0 0.0
      %1458 = vmatprep.subr.mxu0 0.0
      %1459 = vmatpush1.msra.mxu0 0.0
      %1460 = vmatprep.subr.mxu0 0.0
      %1461 = vmatpush1.msra.mxu0 0.0
      %1462 = vmatprep.subr.mxu0 0.0
      %1463 = vmatpush1.msra.mxu0 0.0
      %1464 = vmatprep.subr.mxu0 0.0
      %1465 = vmatpush1.msra.mxu0 0.0
      %1466 = vmatprep.subr.mxu0 0.0
      %1467 = vmatpush1.msra.mxu0 0.0
      %1468 = vmatprep.subr.mxu0 0.0
      %1469 = vmatpush1.msra.mxu0 0.0
      %1470 = vmatprep.subr.mxu0 0.0
      %1471 = vmatpush1.msra.mxu0 0.0
      %1472 = vmatprep.subr.mxu0 0.0
      %1473 = vmatpush1.msra.mxu0 0.0
      %1474 = vmatprep.subr.mxu0 0.0
      %1475 = vmatpush1.msra.mxu0 0.0
      %1476 = vmatprep.subr.mxu0 0.0
      %1477 = vmatpush1.msra.mxu0 0.0
      %1478 = vmatprep.subr.mxu0 0.0
      %1479 = vmatpush1.msra.mxu0 0.0
      %1480 = vmatprep.subr.mxu0 0.0
      %1481 = vmatpush1.msra.mxu0 0.0
      %1482 = vmatprep.mubr.f32.mxu0 0.0
      %1483 = vmatmul.mubr.f32.gmra.mrb[0].mxu0 %v1337
      %v1484 = vpop.f32.mrb[0].mxu0
      %v1485 = vadd.f32 0.0, %v1484
      %v1486 = vpop.f32.mrb[0].mxu0
      %v1487 = vadd.f32 0.0, %v1486
      %1488 = vdwg.mxu0
      %v1489 = vadd.f32 %v1315, %v1414
      %v1490 = vadd.f32 %v1316, %v1416
      %v1491 = vadd.f32 %v1317, %v1485
      %v1492 = vadd.f32 %v1318, %v1487
      %s1493 = scalar_lea.vmem %s2, 56
      %v1494 = vld [vmem:[%s1493] sm:$0xff]
      %1495 = vrot.lane.b32.xlu0 %v289, 91
      %v1496 = vpop.permute.xlu0 %1495
      %1497 = vrot.lane.b32.xlu0 %v294, 91
      %v1498 = vpop.permute.xlu0 %1497
      %1499 = vrot.lane.b32.xlu0 %v290, 91
      %v1500 = vpop.permute.xlu0 %1499
      %1501 = vrot.lane.b32.xlu0 %v295, 91
      %v1502 = vpop.permute.xlu0 %1501
      %1503 = vrot.lane.b32.xlu0 %v291, 91
      %v1504 = vpop.permute.xlu0 %1503
      %vm1505 = vcmask 744448
      %v1506 = vsel %vm1505, %v1496, %v1498
      %v1507 = vsel %vm1505, %v1498, %v1500
      %v1508 = vsel %vm1505, %v1500, %v1502
      %v1509 = vsel %vm1505, %v1502, %v1504
      %v1511 = vsel %vm315, %v1494, 0
      %v1513 = vsel %vm319, %v1506, 0
      %v1515 = vsel %vm319, %v1507, 0
      %v1517 = vsel %vm319, %v1508, 0
      %v1519 = vsel %vm319, %v1509, 0
      %1521 = vmatprep.subr.mxu0 %v1515
      %1522 = vmatpush1.msra.mxu0 %v1513
      %1523 = vmatprep.subr.mxu0 0.0
      %1524 = vmatpush1.msra.mxu0 0.0
      %1525 = vmatprep.subr.mxu0 0.0
      %1526 = vmatpush1.msra.mxu0 0.0
      %1527 = vmatprep.subr.mxu0 0.0
      %1528 = vmatpush1.msra.mxu0 0.0
      %1529 = vmatprep.subr.mxu0 0.0
      %1530 = vmatpush1.msra.mxu0 0.0
      %1531 = vmatprep.subr.mxu0 0.0
      %1532 = vmatpush1.msra.mxu0 0.0
      %1533 = vmatprep.subr.mxu0 0.0
      %1534 = vmatpush1.msra.mxu0 0.0
      %1535 = vmatprep.subr.mxu0 0.0
      %1536 = vmatpush1.msra.mxu0 0.0
      %1537 = vmatprep.subr.mxu0 0.0
      %1538 = vmatpush1.msra.mxu0 0.0
      %1539 = vmatprep.subr.mxu0 0.0
      %1540 = vmatpush1.msra.mxu0 0.0
      %1541 = vmatprep.subr.mxu0 0.0
      %1542 = vmatpush1.msra.mxu0 0.0
      %1543 = vmatprep.subr.mxu0 0.0
      %1544 = vmatpush1.msra.mxu0 0.0
      %1545 = vmatprep.subr.mxu0 0.0
      %1546 = vmatpush1.msra.mxu0 0.0
      %1547 = vmatprep.subr.mxu0 0.0
      %1548 = vmatpush1.msra.mxu0 0.0
      %1549 = vmatprep.subr.mxu0 0.0
      %1550 = vmatpush1.msra.mxu0 0.0
      %1551 = vmatprep.subr.mxu0 0.0
      %1552 = vmatpush1.msra.mxu0 0.0
      %1553 = vmatprep.subr.mxu0 0.0
      %1554 = vmatpush1.msra.mxu0 0.0
      %1555 = vmatprep.subr.mxu0 0.0
      %1556 = vmatpush1.msra.mxu0 0.0
      %1557 = vmatprep.subr.mxu0 0.0
      %1558 = vmatpush1.msra.mxu0 0.0
      %1559 = vmatprep.subr.mxu0 0.0
      %1560 = vmatpush1.msra.mxu0 0.0
      %1561 = vmatprep.subr.mxu0 0.0
      %1562 = vmatpush1.msra.mxu0 0.0
      %1563 = vmatprep.subr.mxu0 0.0
      %1564 = vmatpush1.msra.mxu0 0.0
      %1565 = vmatprep.subr.mxu0 0.0
      %1566 = vmatpush1.msra.mxu0 0.0
      %1567 = vmatprep.subr.mxu0 0.0
      %1568 = vmatpush1.msra.mxu0 0.0
      %1569 = vmatprep.subr.mxu0 0.0
      %1570 = vmatpush1.msra.mxu0 0.0
      %1571 = vmatprep.subr.mxu0 0.0
      %1572 = vmatpush1.msra.mxu0 0.0
      %1573 = vmatprep.subr.mxu0 0.0
      %1574 = vmatpush1.msra.mxu0 0.0
      %1575 = vmatprep.subr.mxu0 0.0
      %1576 = vmatpush1.msra.mxu0 0.0
      %1577 = vmatprep.subr.mxu0 0.0
      %1578 = vmatpush1.msra.mxu0 0.0
      %1579 = vmatprep.subr.mxu0 0.0
      %1580 = vmatpush1.msra.mxu0 0.0
      %1581 = vmatprep.subr.mxu0 0.0
      %1582 = vmatpush1.msra.mxu0 0.0
      %1583 = vmatprep.subr.mxu0 0.0
      %1584 = vmatpush1.msra.mxu0 0.0
      %1585 = vmatprep.mubr.f32.mxu0 0.0
      %1586 = vmatmul.mubr.f32.gmra.mrb[0].mxu0 %v1511
      %v1587 = vpop.f32.mrb[0].mxu0
      %v1588 = vadd.f32 0.0, %v1587
      %v1589 = vpop.f32.mrb[0].mxu0
      %v1590 = vadd.f32 0.0, %v1589
      %1591 = vdwg.mxu0
      %1592 = vmatprep.subr.mxu0 %v1519
      %1593 = vmatpush1.msra.mxu0 %v1517
      %1594 = vmatprep.subr.mxu0 0.0
      %1595 = vmatpush1.msra.mxu0 0.0
      %1596 = vmatprep.subr.mxu0 0.0
      %1597 = vmatpush1.msra.mxu0 0.0
      %1598 = vmatprep.subr.mxu0 0.0
      %1599 = vmatpush1.msra.mxu0 0.0
      %1600 = vmatprep.subr.mxu0 0.0
      %1601 = vmatpush1.msra.mxu0 0.0
      %1602 = vmatprep.subr.mxu0 0.0
      %1603 = vmatpush1.msra.mxu0 0.0
      %1604 = vmatprep.subr.mxu0 0.0
      %1605 = vmatpush1.msra.mxu0 0.0
      %1606 = vmatprep.subr.mxu0 0.0
      %1607 = vmatpush1.msra.mxu0 0.0
      %1608 = vmatprep.subr.mxu0 0.0
      %1609 = vmatpush1.msra.mxu0 0.0
      %1610 = vmatprep.subr.mxu0 0.0
      %1611 = vmatpush1.msra.mxu0 0.0
      %1612 = vmatprep.subr.mxu0 0.0
      %1613 = vmatpush1.msra.mxu0 0.0
      %1614 = vmatprep.subr.mxu0 0.0
      %1615 = vmatpush1.msra.mxu0 0.0
      %1616 = vmatprep.subr.mxu0 0.0
      %1617 = vmatpush1.msra.mxu0 0.0
      %1618 = vmatprep.subr.mxu0 0.0
      %1619 = vmatpush1.msra.mxu0 0.0
      %1620 = vmatprep.subr.mxu0 0.0
      %1621 = vmatpush1.msra.mxu0 0.0
      %1622 = vmatprep.subr.mxu0 0.0
      %1623 = vmatpush1.msra.mxu0 0.0
      %1624 = vmatprep.subr.mxu0 0.0
      %1625 = vmatpush1.msra.mxu0 0.0
      %1626 = vmatprep.subr.mxu0 0.0
      %1627 = vmatpush1.msra.mxu0 0.0
      %1628 = vmatprep.subr.mxu0 0.0
      %1629 = vmatpush1.msra.mxu0 0.0
      %1630 = vmatprep.subr.mxu0 0.0
      %1631 = vmatpush1.msra.mxu0 0.0
      %1632 = vmatprep.subr.mxu0 0.0
      %1633 = vmatpush1.msra.mxu0 0.0
      %1634 = vmatprep.subr.mxu0 0.0
      %1635 = vmatpush1.msra.mxu0 0.0
      %1636 = vmatprep.subr.mxu0 0.0
      %1637 = vmatpush1.msra.mxu0 0.0
      %1638 = vmatprep.subr.mxu0 0.0
      %1639 = vmatpush1.msra.mxu0 0.0
      %1640 = vmatprep.subr.mxu0 0.0
      %1641 = vmatpush1.msra.mxu0 0.0
      %1642 = vmatprep.subr.mxu0 0.0
      %1643 = vmatpush1.msra.mxu0 0.0
      %1644 = vmatprep.subr.mxu0 0.0
      %1645 = vmatpush1.msra.mxu0 0.0
      %1646 = vmatprep.subr.mxu0 0.0
      %1647 = vmatpush1.msra.mxu0 0.0
      %1648 = vmatprep.subr.mxu0 0.0
      %1649 = vmatpush1.msra.mxu0 0.0
      %1650 = vmatprep.subr.mxu0 0.0
      %1651 = vmatpush1.msra.mxu0 0.0
      %1652 = vmatprep.subr.mxu0 0.0
      %1653 = vmatpush1.msra.mxu0 0.0
      %1654 = vmatprep.subr.mxu0 0.0
      %1655 = vmatpush1.msra.mxu0 0.0
      %1656 = vmatprep.mubr.f32.mxu0 0.0
      %1657 = vmatmul.mubr.f32.gmra.mrb[0].mxu0 %v1511
      %v1658 = vpop.f32.mrb[0].mxu0
      %v1659 = vadd.f32 0.0, %v1658
      %v1660 = vpop.f32.mrb[0].mxu0
      %v1661 = vadd.f32 0.0, %v1660
      %1662 = vdwg.mxu0
      %v1663 = vadd.f32 %v1489, %v1588
      %v1664 = vadd.f32 %v1490, %v1590
      %v1665 = vadd.f32 %v1491, %v1659
      %v1666 = vadd.f32 %v1492, %v1661
      %s1667 = scalar_lea.vmem %s2, 64
      %v1668 = vld [vmem:[%s1667] sm:$0xff]
      %1669 = vrot.lane.b32.xlu0 %v289, 90
      %v1670 = vpop.permute.xlu0 %1669
      %1671 = vrot.lane.b32.xlu0 %v294, 90
      %v1672 = vpop.permute.xlu0 %1671
      %1673 = vrot.lane.b32.xlu0 %v290, 90
      %v1674 = vpop.permute.xlu0 %1673
      %1675 = vrot.lane.b32.xlu0 %v295, 90
      %v1676 = vpop.permute.xlu0 %1675
      %1677 = vrot.lane.b32.xlu0 %v291, 90
      %v1678 = vpop.permute.xlu0 %1677
      %vm1679 = vcmask 736256
      %v1680 = vsel %vm1679, %v1670, %v1672
      %v1681 = vsel %vm1679, %v1672, %v1674
      %v1682 = vsel %vm1679, %v1674, %v1676
      %v1683 = vsel %vm1679, %v1676, %v1678
      %v1685 = vsel %vm315, %v1668, 0
      %v1687 = vsel %vm319, %v1680, 0
      %v1689 = vsel %vm319, %v1681, 0
      %v1691 = vsel %vm319, %v1682, 0
      %v1693 = vsel %vm319, %v1683, 0
      %1695 = vmatprep.subr.mxu0 %v1689
      %1696 = vmatpush1.msra.mxu0 %v1687
      %1697 = vmatprep.subr.mxu0 0.0
      %1698 = vmatpush1.msra.mxu0 0.0
      %1699 = vmatprep.subr.mxu0 0.0
      %1700 = vmatpush1.msra.mxu0 0.0
      %1701 = vmatprep.subr.mxu0 0.0
      %1702 = vmatpush1.msra.mxu0 0.0
      %1703 = vmatprep.subr.mxu0 0.0
      %1704 = vmatpush1.msra.mxu0 0.0
      %1705 = vmatprep.subr.mxu0 0.0
      %1706 = vmatpush1.msra.mxu0 0.0
      %1707 = vmatprep.subr.mxu0 0.0
      %1708 = vmatpush1.msra.mxu0 0.0
      %1709 = vmatprep.subr.mxu0 0.0
      %1710 = vmatpush1.msra.mxu0 0.0
      %1711 = vmatprep.subr.mxu0 0.0
      %1712 = vmatpush1.msra.mxu0 0.0
      %1713 = vmatprep.subr.mxu0 0.0
      %1714 = vmatpush1.msra.mxu0 0.0
      %1715 = vmatprep.subr.mxu0 0.0
      %1716 = vmatpush1.msra.mxu0 0.0
      %1717 = vmatprep.subr.mxu0 0.0
      %1718 = vmatpush1.msra.mxu0 0.0
      %1719 = vmatprep.subr.mxu0 0.0
      %1720 = vmatpush1.msra.mxu0 0.0
      %1721 = vmatprep.subr.mxu0 0.0
      %1722 = vmatpush1.msra.mxu0 0.0
      %1723 = vmatprep.subr.mxu0 0.0
      %1724 = vmatpush1.msra.mxu0 0.0
      %1725 = vmatprep.subr.mxu0 0.0
      %1726 = vmatpush1.msra.mxu0 0.0
      %1727 = vmatprep.subr.mxu0 0.0
      %1728 = vmatpush1.msra.mxu0 0.0
      %1729 = vmatprep.subr.mxu0 0.0
      %1730 = vmatpush1.msra.mxu0 0.0
      %1731 = vmatprep.subr.mxu0 0.0
      %1732 = vmatpush1.msra.mxu0 0.0
      %1733 = vmatprep.subr.mxu0 0.0
      %1734 = vmatpush1.msra.mxu0 0.0
      %1735 = vmatprep.subr.mxu0 0.0
      %1736 = vmatpush1.msra.mxu0 0.0
      %1737 = vmatprep.subr.mxu0 0.0
      %1738 = vmatpush1.msra.mxu0 0.0
      %1739 = vmatprep.subr.mxu0 0.0
      %1740 = vmatpush1.msra.mxu0 0.0
      %1741 = vmatprep.subr.mxu0 0.0
      %1742 = vmatpush1.msra.mxu0 0.0
      %1743 = vmatprep.subr.mxu0 0.0
      %1744 = vmatpush1.msra.mxu0 0.0
      %1745 = vmatprep.subr.mxu0 0.0
      %1746 = vmatpush1.msra.mxu0 0.0
      %1747 = vmatprep.subr.mxu0 0.0
      %1748 = vmatpush1.msra.mxu0 0.0
      %1749 = vmatprep.subr.mxu0 0.0
      %1750 = vmatpush1.msra.mxu0 0.0
      %1751 = vmatprep.subr.mxu0 0.0
      %1752 = vmatpush1.msra.mxu0 0.0
      %1753 = vmatprep.subr.mxu0 0.0
      %1754 = vmatpush1.msra.mxu0 0.0
      %1755 = vmatprep.subr.mxu0 0.0
      %1756 = vmatpush1.msra.mxu0 0.0
      %1757 = vmatprep.subr.mxu0 0.0
      %1758 = vmatpush1.msra.mxu0 0.0
      %1759 = vmatprep.mubr.f32.mxu0 0.0
      %1760 = vmatmul.mubr.f32.gmra.mrb[0].mxu0 %v1685
      %v1761 = vpop.f32.mrb[0].mxu0
      %v1762 = vadd.f32 0.0, %v1761
      %v1763 = vpop.f32.mrb[0].mxu0
      %v1764 = vadd.f32 0.0, %v1763
      %1765 = vdwg.mxu0
      %1766 = vmatprep.subr.mxu0 %v1693
      %1767 = vmatpush1.msra.mxu0 %v1691
      %1768 = vmatprep.subr.mxu0 0.0
      %1769 = vmatpush1.msra.mxu0 0.0
      %1770 = vmatprep.subr.mxu0 0.0
      %1771 = vmatpush1.msra.mxu0 0.0
      %1772 = vmatprep.subr.mxu0 0.0
      %1773 = vmatpush1.msra.mxu0 0.0
      %1774 = vmatprep.subr.mxu0 0.0
      %1775 = vmatpush1.msra.mxu0 0.0
      %1776 = vmatprep.subr.mxu0 0.0
      %1777 = vmatpush1.msra.mxu0 0.0
      %1778 = vmatprep.subr.mxu0 0.0
      %1779 = vmatpush1.msra.mxu0 0.0
      %1780 = vmatprep.subr.mxu0 0.0
      %1781 = vmatpush1.msra.mxu0 0.0
      %1782 = vmatprep.subr.mxu0 0.0
      %1783 = vmatpush1.msra.mxu0 0.0
      %1784 = vmatprep.subr.mxu0 0.0
      %1785 = vmatpush1.msra.mxu0 0.0
      %1786 = vmatprep.subr.mxu0 0.0
      %1787 = vmatpush1.msra.mxu0 0.0
      %1788 = vmatprep.subr.mxu0 0.0
      %1789 = vmatpush1.msra.mxu0 0.0
      %1790 = vmatprep.subr.mxu0 0.0
      %1791 = vmatpush1.msra.mxu0 0.0
      %1792 = vmatprep.subr.mxu0 0.0
      %1793 = vmatpush1.msra.mxu0 0.0
      %1794 = vmatprep.subr.mxu0 0.0
      %1795 = vmatpush1.msra.mxu0 0.0
      %1796 = vmatprep.subr.mxu0 0.0
      %1797 = vmatpush1.msra.mxu0 0.0
      %1798 = vmatprep.subr.mxu0 0.0
      %1799 = vmatpush1.msra.mxu0 0.0
      %1800 = vmatprep.subr.mxu0 0.0
      %1801 = vmatpush1.msra.mxu0 0.0
      %1802 = vmatprep.subr.mxu0 0.0
      %1803 = vmatpush1.msra.mxu0 0.0
      %1804 = vmatprep.subr.mxu0 0.0
      %1805 = vmatpush1.msra.mxu0 0.0
      %1806 = vmatprep.subr.mxu0 0.0
      %1807 = vmatpush1.msra.mxu0 0.0
      %1808 = vmatprep.subr.mxu0 0.0
      %1809 = vmatpush1.msra.mxu0 0.0
      %1810 = vmatprep.subr.mxu0 0.0
      %1811 = vmatpush1.msra.mxu0 0.0
      %1812 = vmatprep.subr.mxu0 0.0
      %1813 = vmatpush1.msra.mxu0 0.0
      %1814 = vmatprep.subr.mxu0 0.0
      %1815 = vmatpush1.msra.mxu0 0.0
      %1816 = vmatprep.subr.mxu0 0.0
      %1817 = vmatpush1.msra.mxu0 0.0
      %1818 = vmatprep.subr.mxu0 0.0
      %1819 = vmatpush1.msra.mxu0 0.0
      %1820 = vmatprep.subr.mxu0 0.0
      %1821 = vmatpush1.msra.mxu0 0.0
      %1822 = vmatprep.subr.mxu0 0.0
      %1823 = vmatpush1.msra.mxu0 0.0
      %1824 = vmatprep.subr.mxu0 0.0
      %1825 = vmatpush1.msra.mxu0 0.0
      %1826 = vmatprep.subr.mxu0 0.0
      %1827 = vmatpush1.msra.mxu0 0.0
      %1828 = vmatprep.subr.mxu0 0.0
      %1829 = vmatpush1.msra.mxu0 0.0
      %1830 = vmatprep.mubr.f32.mxu0 0.0
      %1831 = vmatmul.mubr.f32.gmra.mrb[0].mxu0 %v1685
      %v1832 = vpop.f32.mrb[0].mxu0
      %v1833 = vadd.f32 0.0, %v1832
      %v1834 = vpop.f32.mrb[0].mxu0
      %v1835 = vadd.f32 0.0, %v1834
      %1836 = vdwg.mxu0
      %v1837 = vadd.f32 %v1663, %v1762
      %v1838 = vadd.f32 %v1664, %v1764
      %v1839 = vadd.f32 %v1665, %v1833
      %v1840 = vadd.f32 %v1666, %v1835
      %v1841 = vld [vmem:[%s277] sm:$0xf]
      %v1843 = vlaneseq
      %v1844 = vshrl.u32 %v1843, 7
      %v1845 = vsub.s32 0, %v1844
      %v1846 = vrot.slane %v1841, %v1845
      %v1847 = vlaneseq
      %v1848 = vshrl.u32 %v1847, 7
      %v1849 = vsub.s32 1, %v1848
      %v1850 = vrot.slane %v1841, %v1849
      %v1851 = vlaneseq
      %v1852 = vshrl.u32 %v1851, 7
      %v1853 = vsub.s32 2, %v1852
      %v1854 = vrot.slane %v1841, %v1853
      %v1855 = vlaneseq
      %v1856 = vshrl.u32 %v1855, 7
      %v1857 = vsub.s32 3, %v1856
      %v1858 = vrot.slane %v1841, %v1857
      %v1863 = vmul.f32 %v1837, %v1846
      %v1864 = vmul.f32 %v1838, %v1850
      %v1865 = vmul.f32 %v1839, %v1854
      %v1866 = vmul.f32 %v1840, %v1858
      %v1867 = vadd.f32 %v1863, %v1864
      %v1868 = vadd.f32 %v1867, %v1865
      %v1869 = vadd.f32 %v1868, %v1866
      %1870 = vadd.xlane.f32.xlu0 %v1869
      %v1871 = vpop.xlane.xlu0 %1870
      %v1872 = vmul.f32 %v1863, %v1837
      %v1873 = vmul.f32 %v1864, %v1838
      %v1874 = vmul.f32 %v1865, %v1839
      %v1875 = vmul.f32 %v1866, %v1840
      %v1876 = vadd.f32 %v1872, %v1873
      %v1877 = vadd.f32 %v1876, %v1874
      %v1878 = vadd.f32 %v1877, %v1875
      %1879 = vadd.xlane.f32.xlu0 %v1878
      %v1880 = vpop.xlane.xlu0 %1879
      %vm1881 = vcmask 7168
      %v1882 = vsel %vm1881, %v1871, %v1880
      %vm1883 = vcmask 15360
      %1884 = vst.msk [vmem:[%s288] sm:$0xff] %vm1883, %v1882
      %1885 = vst [vmem:[%s283] sm:$0xff] %v1837
      %1886 = vst [vmem:[%s283 + $0x8] sm:$0xff] %v1838
      %1887 = vst [vmem:[%s283 + $0x10] sm:$0xff] %v1839
      %1888 = vst [vmem:[%s283 + $0x18] sm:$0xff] %v1840
      %s1889 = smul.u32 4, %s17
      %p1890 = scmp.lt.s32.totalorder %s1889, 7
      %s1891 = scalar_select %p1890, %s1889, 7
      %s1892 = smul.addr %s1891, 8
      %s1893 = scalar_lea.vmem %s4, %s1892
      %p1894 = scmp.lt.s32.totalorder %s17, 1
      %s1895 = scalar_select %p1894, %s17, 1
      %s1896 = smul.addr %s1895, 8
      %s1897 = scalar_lea.vmem %s5, %s1896
      // Predicated region
      $region37: #{conv_block_forward.4} parent=35 // pred_check
        %p1898 = pneg %p138
      $region38: #{conv_block_forward.4} parent=35 // pred_check_branch
        %1900 = sbr.rel (%p1898) target = $region40
      $region39: #{conv_block_forward.4} parent=35 // pred_region
        %s1901 = smul.u32 4, %s17
      $region40: #{conv_block_forward.4} parent=35 // pred_fallthru
        _
      // Predicated region
      $region41: #{conv_block_forward.4} parent=35 // pred_check
        %p1902 = pneg %p164
      $region42: #{conv_block_forward.4} parent=35 // pred_check_branch
        %1904 = sbr.rel (%p1902) target = $region44
      $region43: #{conv_block_forward.4} parent=35 // pred_region
        _
      $region44: #{conv_block_forward.4} parent=35 // pred_fallthru
        _
    $region36: #{conv_block_forward.4} parent=5 // pred_fallthru
      _
    %p1905 = scmp.le.s32.totalorder 2, %s12
    // Predicated region
    $region45: #{conv_block_forward.4} parent=5 // pred_check
      %p1906 = pneg %p1905
    $region46: #{conv_block_forward.4} parent=5 // pred_check_branch
      %1908 = sbr.rel (%p1906) target = $region48
    $region47: #{conv_block_forward.4} parent=5 // pred_region
      %s1909 = ssub.s32 %s12, 2
      // Predicated region
      $region49: #{conv_block_forward.4} parent=47 // pred_check
        %p1910 = pneg %p144
      $region50: #{conv_block_forward.4} parent=47 // pred_check_branch
        %1912 = sbr.rel (%p1910) target = $region52
      $region51: #{conv_block_forward.4} parent=47 // pred_region
        %s1913 = smul.u32 4, %s18
        %p1914 = scmp.lt.s32.totalorder %s1913, 7
        %s1915 = scalar_select %p1914, %s1913, 7
        %s1916 = smul.addr %s1915, 8
        %s1917 = scalar_lea.vmem %s4, %s1916
      $region52: #{conv_block_forward.4} parent=47 // pred_fallthru
        _
      // Predicated region
      $region53: #{conv_block_forward.4} parent=47 // pred_check
        %p1918 = pneg %p170
      $region54: #{conv_block_forward.4} parent=47 // pred_check_branch
        %1920 = sbr.rel (%p1918) target = $region56
      $region55: #{conv_block_forward.4} parent=47 // pred_region
        %p1921 = scmp.lt.s32.totalorder %s18, 1
        %s1922 = scalar_select %p1921, %s18, 1
        %s1923 = smul.addr %s1922, 8
        %s1924 = scalar_lea.vmem %s5, %s1923
      $region56: #{conv_block_forward.4} parent=47 // pred_fallthru
        _
    $region48: #{conv_block_forward.4} parent=5 // pred_fallthru
      _
  $region6: #{conv_block_forward.4} parent=0 // loop_footer
    %s16 = sadd.s32 1, %s12
  $region7: #{conv_block_forward.4} parent=0 // loop_footer_branch
    %11 = sbr.rel target = $region3
  $region8: #{conv_block_forward.4} parent=0 // loop_exit
    _

// kernel: conv_block_forward.6
$region0: #{conv_block_forward.6}
  #allocation0 [shape = 'u32[]', space=smem, size = 0x4, offset = 0x4, fixed_abs, tag = 'smem constant byte address 0x4 - core index']
  #allocation1 [shape = 'u32[144,128]{1,0:T(1,128)}', space=vmem, size = 0x12000, scoped, tag = 'internal scratch']
  %s0 = inlined_call_operand.vmem [shape: f32[8,1536], index: 0, kind: input, shape index: {}, may-alias: {0,1}]
  %s1 = inlined_call_operand.vmem [shape: f32[8,1536], index: 1, kind: input, shape index: {}, may-alias: {0,1}]
  %s2 = inlined_call_operand.vmem [shape: f32[9,8,8], index: 2, kind: input, shape index: {}]
  %s3 = inlined_call_operand.vmem [shape: f32[1,1024], index: 3, kind: input, shape index: {}]
  %s4 = inlined_call_operand.vmem [shape: f32[8,1024], index: 4, kind: output, shape index: {0}]
  %s5 = inlined_call_operand.vmem [shape: f32[2,8,2], index: 5, kind: output, shape index: {1}]
  %6 = xla_tuple %s4, %s5
  %s7 = sld [smem:[#allocation0]]
  $region57: #{conv_block_forward.6} parent=0
    _
  %s9 = ssub.s32 1, %s7
  %s10 = scalar_select 0, %s9, %s7
  loop: start=0, step=1, limit=4
  $region2: #{conv_block_forward.6} parent=0 // loop_pre_header
    _
  $region3: #{conv_block_forward.6} parent=0 // loop_header
    %s12 = sphi 0, %s16
    %p13 = scmp.ge.s32.totalorder %s12, 4
    %s22 = sphi 0, %s24
    %s25 = sphi 0, %s22
    %s26 = sphi 0, %s25
    %s42 = sphi 0, %s26
    %s52 = sphi 0, %s54
    %s55 = sphi 0, %s52
    %s56 = sphi 0, %s55
    %s72 = sphi 0, %s56
    %s76 = sphi 0, %s76
    %s78 = sphi 0, %s76
    %s79 = sphi 0, %s78
    %s93 = sphi 0, %s79
    %s99 = sphi 0, %s101
    %s102 = sphi 0, %s99
    %s103 = sphi 0, %s102
    %s119 = sphi 0, %s103
    %s125 = sphi 0, %s127
    %s128 = sphi 0, %s125
    %s129 = sphi 0, %s128
    %s145 = sphi 0, %s129
    %s151 = sphi 0, %s153
    %s154 = sphi 0, %s151
    %s155 = sphi 0, %s154
    %s171 = sphi 0, %s155
  $region4: #{conv_block_forward.6} parent=0 // loop_header_branch
    %15 = sbr.rel (%p13) target = $region8
  $region5: #{conv_block_forward.6} parent=0 // loop_body
    %s17 = ssub.s32 %s12, 1
    %s18 = ssub.s32 %s12, 2
    %s19 = sadd.s32 %s12, 1
    %s20 = ssub.s32 %s12, %s19
    %p21 = scmp.eq.s32.totalorder %s20, 0
    %s23 = sadd.s32 %s22, 1
    %s24 = scalar_select %p21, %s22, %s23
    %p27 = pneg %p21
    %p28 = scmp.eq.s32.totalorder %s12, 1
    %p29 = por %p27, %p28
    %p30 = scmp.ne.s32.totalorder %s22, %s25
    %p31 = scmp.eq.s32.totalorder %s12, 0
    %p32 = por %p30, %p31
    %p33 = scmp.ne.s32.totalorder %s22, %s25
    %p34 = scmp.eq.s32.totalorder %s17, 1
    %p35 = por %p33, %p34
    %p36 = scmp.ne.s32.totalorder %s25, %s26
    %p37 = scmp.eq.s32.totalorder %s17, 0
    %p38 = por %p36, %p37
    %p39 = scmp.ne.s32.totalorder %s25, %s26
    %p40 = scmp.eq.s32.totalorder %s18, 1
    %p41 = por %p39, %p40
    %p43 = scmp.ne.s32.totalorder %s26, %s42
    %p44 = scmp.eq.s32.totalorder %s18, 0
    %p45 = por %p43, %p44
    %s46 = sadd.s32 %s12, 1
    %s47 = smul.u32 %s46, 4
    %s48 = sadd.s32 %s19, 1
    %s49 = smul.u32 %s48, 4
    %s50 = ssub.s32 %s47, %s49
    %p51 = scmp.eq.s32.totalorder %s50, 0
    %s53 = sadd.s32 %s52, 1
    %s54 = scalar_select %p51, %s52, %s53
    %p57 = pneg %p51
    %p58 = scmp.eq.s32.totalorder %s12, 1
    %p59 = por %p57, %p58
    %p60 = scmp.ne.s32.totalorder %s52, %s55
    %p61 = scmp.eq.s32.totalorder %s12, 0
    %p62 = por %p60, %p61
    %p63 = scmp.ne.s32.totalorder %s52, %s55
    %p64 = scmp.eq.s32.totalorder %s17, 1
    %p65 = por %p63, %p64
    %p66 = scmp.ne.s32.totalorder %s55, %s56
    %p67 = scmp.eq.s32.totalorder %s17, 0
    %p68 = por %p66, %p67
    %p69 = scmp.ne.s32.totalorder %s55, %s56
    %p70 = scmp.eq.s32.totalorder %s18, 1
    %p71 = por %p69, %p70
    %p73 = scmp.ne.s32.totalorder %s56, %s72
    %p74 = scmp.eq.s32.totalorder %s18, 0
    %p75 = por %p73, %p74
    %s77 = sadd.s32 %s76, 1
    %p80 = scmp.eq.s32.totalorder %s12, 1
    %p81 = scmp.ne.s32.totalorder %s76, %s78
    %p82 = scmp.eq.s32.totalorder %s12, 0
    %p83 = por %p81, %p82
    %p84 = scmp.ne.s32.totalorder %s76, %s78
    %p85 = scmp.eq.s32.totalorder %s17, 1
    %p86 = por %p84, %p85
    %p87 = scmp.ne.s32.totalorder %s78, %s79
    %p88 = scmp.eq.s32.totalorder %s17, 0
    %p89 = por %p87, %p88
    %p90 = scmp.ne.s32.totalorder %s78, %s79
    %p91 = scmp.eq.s32.totalorder %s18, 1
    %p92 = por %p90, %p91
    %p94 = scmp.ne.s32.totalorder %s79, %s93
    %p95 = scmp.eq.s32.totalorder %s18, 0
    %p96 = por %p94, %p95
    %s97 = ssub.s32 %s12, %s19
    %p98 = scmp.eq.s32.totalorder %s97, 0
    %s100 = sadd.s32 %s99, 1
    %s101 = scalar_select %p98, %s99, %s100
    %p104 = pneg %p98
    %p105 = scmp.eq.s32.totalorder %s12, 1
    %p106 = por %p104, %p105
    %p107 = scmp.ne.s32.totalorder %s99, %s102
    %p108 = scmp.eq.s32.totalorder %s12, 0
    %p109 = por %p107, %p108
    %p110 = scmp.ne.s32.totalorder %s99, %s102
    %p111 = scmp.eq.s32.totalorder %s17, 1
    %p112 = por %p110, %p111
    %p113 = scmp.ne.s32.totalorder %s102, %s103
    %p114 = scmp.eq.s32.totalorder %s17, 0
    %p115 = por %p113, %p114
    %p116 = scmp.ne.s32.totalorder %s102, %s103
    %p117 = scmp.eq.s32.totalorder %s18, 1
    %p118 = por %p116, %p117
    %p120 = scmp.ne.s32.totalorder %s103, %s119
    %p121 = scmp.eq.s32.totalorder %s18, 0
    %p122 = por %p120, %p121
    %s123 = ssub.s32 %s12, %s19
    %p124 = scmp.eq.s32.totalorder %s123, 0
    %s126 = sadd.s32 %s125, 1
    %s127 = scalar_select %p124, %s125, %s126
    %p130 = pneg %p124
    %p131 = scmp.eq.s32.totalorder %s12, 1
    %p132 = por %p130, %p131
    %p133 = scmp.ne.s32.totalorder %s125, %s128
    %p134 = scmp.eq.s32.totalorder %s12, 0
    %p135 = por %p133, %p134
    %p136 = scmp.ne.s32.totalorder %s125, %s128
    %p137 = scmp.eq.s32.totalorder %s17, 1
    %p138 = por %p136, %p137
    %p139 = scmp.ne.s32.totalorder %s128, %s129
    %p140 = scmp.eq.s32.totalorder %s17, 0
    %p141 = por %p139, %p140
    %p142 = scmp.ne.s32.totalorder %s128, %s129
    %p143 = scmp.eq.s32.totalorder %s18, 1
    %p144 = por %p142, %p143
    %p146 = scmp.ne.s32.totalorder %s129, %s145
    %p147 = scmp.eq.s32.totalorder %s18, 0
    %p148 = por %p146, %p147
    %s149 = ssub.s32 %s12, %s19
    %p150 = scmp.eq.s32.totalorder %s149, 0
    %s152 = sadd.s32 %s151, 1
    %s153 = scalar_select %p150, %s151, %s152
    %p156 = pneg %p150
    %p157 = scmp.eq.s32.totalorder %s12, 1
    %p158 = por %p156, %p157
    %p159 = scmp.ne.s32.totalorder %s151, %s154
    %p160 = scmp.eq.s32.totalorder %s12, 0
    %p161 = por %p159, %p160
    %p162 = scmp.ne.s32.totalorder %s151, %s154
    %p163 = scmp.eq.s32.totalorder %s17, 1
    %p164 = por %p162, %p163
    %p165 = scmp.ne.s32.totalorder %s154, %s155
    %p166 = scmp.eq.s32.totalorder %s17, 0
    %p167 = por %p165, %p166
    %p168 = scmp.ne.s32.totalorder %s154, %s155
    %p169 = scmp.eq.s32.totalorder %s18, 1
    %p170 = por %p168, %p169
    %p172 = scmp.ne.s32.totalorder %s155, %s171
    %p173 = scmp.eq.s32.totalorder %s18, 0
    %p174 = por %p172, %p173
    %p175 = scmp.le.s32.totalorder 1, %s12
    %p176 = scmp.lt.s32.totalorder %s12, 3
    %p177 = pnand %p175, %p176
    %p178 = pneg %p177
    // Predicated region
    $region9: #{conv_block_forward.6} parent=5 // pred_check
      _
    $region10: #{conv_block_forward.6} parent=5 // pred_check_branch
      %180 = sbr.rel (%p177) target = $region12
    $region11: #{conv_block_forward.6} parent=5 // pred_region
      %s181 = ssub.s32 %s12, 1
      // Predicated region
      $region13: #{conv_block_forward.6} parent=11 // pred_check
        %p182 = pneg %p89
      $region14: #{conv_block_forward.6} parent=11 // pred_check_branch
        %184 = sbr.rel (%p182) target = $region16
      $region15: #{conv_block_forward.6} parent=11 // pred_region
        _
      $region16: #{conv_block_forward.6} parent=11 // pred_fallthru
        _
    $region12: #{conv_block_forward.6} parent=5 // pred_fallthru
      _
    %p185 = scmp.lt.s32.totalorder %s12, 2
    // Predicated region
    $region17: #{conv_block_forward.6} parent=5 // pred_check
      %p186 = pneg %p185
    $region18: #{conv_block_forward.6} parent=5 // pred_check_branch
      %188 = sbr.rel (%p186) target = $region20
    $region19: #{conv_block_forward.6} parent=5 // pred_region
      // Predicated region
      $region21: #{conv_block_forward.6} parent=19 // pred_check
        %p189 = pneg %p32
      $region22: #{conv_block_forward.6} parent=19 // pred_check_branch
        %191 = sbr.rel (%p189) target = $region24
      $region23: #{conv_block_forward.6} parent=19 // pred_region
        %s192 = smul.u32 4, %s12
        %p193 = scmp.lt.s32.totalorder %s192, 11
        %s194 = scalar_select %p193, %s192, 11
        %s195 = smul.addr %s194, 8
        %s196 = scalar_lea.vmem %s0, %s195
        %s197 = smul.u32 4, %s12
      $region24: #{conv_block_forward.6} parent=19 // pred_fallthru
        _
      // Predicated region
      $region25: #{conv_block_forward.6} parent=19 // pred_check
        %p198 = pneg %p62
      $region26: #{conv_block_forward.6} parent=19 // pred_check_branch
        %200 = sbr.rel (%p198) target = $region28
      $region27: #{conv_block_forward.6} parent=19 // pred_region
        %s201 = sadd.s32 %s12, 1
        %s202 = smul.u32 %s201, 4
        %p203 = scmp.lt.s32.totalorder %s202, 11
        %s204 = scalar_select %p203, %s202, 11
        %s205 = smul.addr %s204, 8
        %s206 = scalar_lea.vmem %s1, %s205
        %s207 = sadd.s32 %s12, 1
        %s208 = smul.u32 %s207, 4
      $region28: #{conv_block_forward.6} parent=19 // pred_fallthru
        _
      // Predicated region
      $region29: #{conv_block_forward.6} parent=19 // pred_check
        %p209 = pneg %p109
      $region30: #{conv_block_forward.6} parent=19 // pred_check_branch
        %211 = sbr.rel (%p209) target = $region32
      $region31: #{conv_block_forward.6} parent=19 // pred_region
        %s212 = smul.u32 4, %s12
        %p213 = scmp.lt.s32.totalorder %s212, 7
        %s214 = scalar_select %p213, %s212, 7
        %s215 = scalar_lea.vmem %s3, %s214
        %s216 = smul.u32 4, %s12
      $region32: #{conv_block_forward.6} parent=19 // pred_fallthru
        _
    $region20: #{conv_block_forward.6} parent=5 // pred_fallthru
      _
    %p217 = scmp.le.s32.totalorder 1, %s12
    %p218 = scmp.lt.s32.totalorder %s12, 3
    %p219 = pnand %p217, %p218
    %p220 = pneg %p219
    // Predicated region
    $region33: #{conv_block_forward.6} parent=5 // pred_check
      _
    $region34: #{conv_block_forward.6} parent=5 // pred_check_branch
      %222 = sbr.rel (%p219) target = $region36
    $region35: #{conv_block_forward.6} parent=5 // pred_region
      %s223 = ssub.s32 %s12, 1
      %s224 = smul.u32 4, %s17
      %p225 = scmp.lt.s32.totalorder %s224, 11
      %s226 = scalar_select %p225, %s224, 11
      %s227 = smul.addr %s226, 8
      %s228 = scalar_lea.vmem %s0, %s227
      %p229 = pneg %p38
      %p230 = pneg %p35
      %s231 = sadd.s32 %s17, 1
      %s232 = smul.u32 %s231, 4
      %p233 = scmp.lt.s32.totalorder %s232, 11
      %s234 = scalar_select %p233, %s232, 11
      %s235 = smul.addr %s234, 8
      %s236 = scalar_lea.vmem %s1, %s235
      %p237 = pneg %p68
      %p238 = pneg %p65
      %p239 = pneg %p89
      %p240 = pneg %p86
      %s241 = smul.u32 4, %s17
      %p242 = scmp.lt.s32.totalorder %s241, 7
      %s243 = scalar_select %p242, %s241, 7
      %s244 = scalar_lea.vmem %s3, %s243
      %p245 = pneg %p115
      %p246 = pneg %p112
      %p247 = pneg %p141
      %p248 = pneg %p138
      %s249 = smul.u32 4, %s17
      %p250 = scmp.lt.s32.totalorder %s249, 7
      %s251 = scalar_select %p250, %s249, 7
      %s252 = smul.addr %s251, 8
      %s253 = scalar_lea.vmem %s4, %s252
      %p254 = pneg %p167
      %p255 = pneg %p164
      %p256 = scmp.lt.s32.totalorder %s17, 1
      %s257 = scalar_select %p256, %s17, 1
      %s258 = smul.addr %s257, 8
      %s259 = scalar_lea.vmem %s5, %s258
      %s260 = smul.u32 4, %s17
      %p261 = scmp.lt.s32.totalorder %s260, 11
      %s262 = scalar_select %p261, %s260, 11
      %s263 = smul.addr %s262, 8
      %s264 = scalar_lea.vmem %s0, %s263
      %s265 = smul.u32 4, %s17
      %s266 = sadd.s32 %s17, 1
      %s267 = smul.u32 %s266, 4
      %p268 = scmp.lt.s32.totalorder %s267, 11
      %s269 = scalar_select %p268, %s267, 11
      %s270 = smul.addr %s269, 8
      %s271 = scalar_lea.vmem %s1, %s270
      %s272 = sadd.s32 %s17, 1
      %s273 = smul.u32 %s272, 4
      %s274 = smul.u32 4, %s17
      %p275 = scmp.lt.s32.totalorder %s274, 7
      %s276 = scalar_select %p275, %s274, 7
      %s277 = scalar_lea.vmem %s3, %s276
      %s278 = smul.u32 4, %s17
      %s279 = smul.u32 4, %s17
      %p280 = scmp.lt.s32.totalorder %s279, 7
      %s281 = scalar_select %p280, %s279, 7
      %s282 = smul.addr %s281, 8
      %s283 = scalar_lea.vmem %s4, %s282
      %s284 = smul.u32 4, %s17
      %p285 = scmp.lt.s32.totalorder %s17, 1
      %s286 = scalar_select %p285, %s17, 1
      %s287 = smul.addr %s286, 8
      %s288 = scalar_lea.vmem %s5, %s287
      %v289 = vld [vmem:[%s264] sm:$0xff]
      %v290 = vld [vmem:[%s264 + $0x8] sm:$0xff]
      %v291 = vld [vmem:[%s264 + $0x10] sm:$0xff]
      %v292 = vld [vmem:[%s264 + $0x18] sm:$0xff]
      %v293 = vld [vmem:[%s271] sm:$0xff]
      %v294 = vld [vmem:[%s2] sm:$0xff]
      %s295 = scalar_lea.vmem %s2, 8
      %v296 = vld [vmem:[%s295] sm:$0xff]
      %302 = vrot.lane.b32.xlu0 %v289, 127
      %v303 = vpop.permute.xlu0 %302
      %304 = vrot.lane.b32.xlu0 %v290, 127
      %v305 = vpop.permute.xlu0 %304
      %306 = vrot.lane.b32.xlu0 %v291, 127
      %v307 = vpop.permute.xlu0 %306
      %308 = vrot.lane.b32.xlu0 %v292, 127
      %v309 = vpop.permute.xlu0 %308
      %310 = vrot.lane.b32.xlu0 %v293, 127
      %v311 = vpop.permute.xlu0 %310
      %vm312 = vcmask 1039360
      %v313 = vsel %vm312, %v303, %v305
      %v314 = vsel %vm312, %v305, %v307
      %v315 = vsel %vm312, %v307, %v309
      %v316 = vsel %vm312, %v309, %v311
      %vm321 = vcmask 64512
      %v323 = vsel %vm321, %v296, 0
      %325 = vmatprep.subr.mxu0 %v314
      %326 = vmatpush1.msra.mxu0 %v313
      %327 = vmatprep.subr.mxu0 0.0
      %328 = vmatpush1.msra.mxu0 0.0
      %329 = vmatprep.subr.mxu0 0.0
      %330 = vmatpush1.msra.mxu0 0.0
      %331 = vmatprep.subr.mxu0 0.0
      %332 = vmatpush1.msra.mxu0 0.0
      %333 = vmatprep.subr.mxu0 0.0
      %334 = vmatpush1.msra.mxu0 0.0
      %335 = vmatprep.subr.mxu0 0.0
      %336 = vmatpush1.msra.mxu0 0.0
      %337 = vmatprep.subr.mxu0 0.0
      %338 = vmatpush1.msra.mxu0 0.0
      %339 = vmatprep.subr.mxu0 0.0
      %340 = vmatpush1.msra.mxu0 0.0
      %341 = vmatprep.subr.mxu0 0.0
      %342 = vmatpush1.msra.mxu0 0.0
      %343 = vmatprep.subr.mxu0 0.0
      %344 = vmatpush1.msra.mxu0 0.0
      %345 = vmatprep.subr.mxu0 0.0
      %346 = vmatpush1.msra.mxu0 0.0
      %347 = vmatprep.subr.mxu0 0.0
      %348 = vmatpush1.msra.mxu0 0.0
      %349 = vmatprep.subr.mxu0 0.0
      %350 = vmatpush1.msra.mxu0 0.0
      %351 = vmatprep.subr.mxu0 0.0
      %352 = vmatpush1.msra.mxu0 0.0
      %353 = vmatprep.subr.mxu0 0.0
      %354 = vmatpush1.msra.mxu0 0.0
      %355 = vmatprep.subr.mxu0 0.0
      %356 = vmatpush1.msra.mxu0 0.0
      %357 = vmatprep.subr.mxu0 0.0
      %358 = vmatpush1.msra.mxu0 0.0
      %359 = vmatprep.subr.mxu0 0.0
      %360 = vmatpush1.msra.mxu0 0.0
      %361 = vmatprep.subr.mxu0 0.0
      %362 = vmatpush1.msra.mxu0 0.0
      %363 = vmatprep.subr.mxu0 0.0
      %364 = vmatpush1.msra.mxu0 0.0
      %365 = vmatprep.subr.mxu0 0.0
      %366 = vmatpush1.msra.mxu0 0.0
      %367 = vmatprep.subr.mxu0 0.0
      %368 = vmatpush1.msra.mxu0 0.0
      %369 = vmatprep.subr.mxu0 0.0
      %370 = vmatpush1.msra.mxu0 0.0
      %371 = vmatprep.subr.mxu0 0.0
      %372 = vmatpush1.msra.mxu0 0.0
      %373 = vmatprep.subr.mxu0 0.0
      %374 = vmatpush1.msra.mxu0 0.0
      %375 = vmatprep.subr.mxu0 0.0
      %376 = vmatpush1.msra.mxu0 0.0
      %377 = vmatprep.subr.mxu0 0.0
      %378 = vmatpush1.msra.mxu0 0.0
      %379 = vmatprep.subr.mxu0 0.0
      %380 = vmatpush1.msra.mxu0 0.0
      %381 = vmatprep.subr.mxu0 0.0
      %382 = vmatpush1.msra.mxu0 0.0
      %383 = vmatprep.subr.mxu0 0.0
      %384 = vmatpush1.msra.mxu0 0.0
      %385 = vmatprep.subr.mxu0 0.0
      %386 = vmatpush1.msra.mxu0 0.0
      %387 = vmatprep.subr.mxu0 0.0
      %388 = vmatpush1.msra.mxu0 0.0
      %389 = vmatprep.mubr.f32.mxu0 0.0
      %390 = vmatmul.mubr.f32.gmra.mrb[0].mxu0 %v323
      %v391 = vpop.f32.mrb[0].mxu0
      %v392 = vadd.f32 0.0, %v391
      %v393 = vpop.f32.mrb[0].mxu0
      %v394 = vadd.f32 0.0, %v393
      %395 = vdwg.mxu0
      %396 = vmatprep.subr.mxu0 %v316
      %397 = vmatpush1.msra.mxu0 %v315
      %398 = vmatprep.subr.mxu0 0.0
      %399 = vmatpush1.msra.mxu0 0.0
      %400 = vmatprep.subr.mxu0 0.0
      %401 = vmatpush1.msra.mxu0 0.0
      %402 = vmatprep.subr.mxu0 0.0
      %403 = vmatpush1.msra.mxu0 0.0
      %404 = vmatprep.subr.mxu0 0.0
      %405 = vmatpush1.msra.mxu0 0.0
      %406 = vmatprep.subr.mxu0 0.0
      %407 = vmatpush1.msra.mxu0 0.0
      %408 = vmatprep.subr.mxu0 0.0
      %409 = vmatpush1.msra.mxu0 0.0
      %410 = vmatprep.subr.mxu0 0.0
      %411 = vmatpush1.msra.mxu0 0.0
      %412 = vmatprep.subr.mxu0 0.0
      %413 = vmatpush1.msra.mxu0 0.0
      %414 = vmatprep.subr.mxu0 0.0
      %415 = vmatpush1.msra.mxu0 0.0
      %416 = vmatprep.subr.mxu0 0.0
      %417 = vmatpush1.msra.mxu0 0.0
      %418 = vmatprep.subr.mxu0 0.0
      %419 = vmatpush1.msra.mxu0 0.0
      %420 = vmatprep.subr.mxu0 0.0
      %421 = vmatpush1.msra.mxu0 0.0
      %422 = vmatprep.subr.mxu0 0.0
      %423 = vmatpush1.msra.mxu0 0.0
      %424 = vmatprep.subr.mxu0 0.0
      %425 = vmatpush1.msra.mxu0 0.0
      %426 = vmatprep.subr.mxu0 0.0
      %427 = vmatpush1.msra.mxu0 0.0
      %428 = vmatprep.subr.mxu0 0.0
      %429 = vmatpush1.msra.mxu0 0.0
      %430 = vmatprep.subr.mxu0 0.0
      %431 = vmatpush1.msra.mxu0 0.0
      %432 = vmatprep.subr.mxu0 0.0
      %433 = vmatpush1.msra.mxu0 0.0
      %434 = vmatprep.subr.mxu0 0.0
      %435 = vmatpush1.msra.mxu0 0.0
      %436 = vmatprep.subr.mxu0 0.0
      %437 = vmatpush1.msra.mxu0 0.0
      %438 = vmatprep.subr.mxu0 0.0
      %439 = vmatpush1.msra.mxu0 0.0
      %440 = vmatprep.subr.mxu0 0.0
      %441 = vmatpush1.msra.mxu0 0.0
      %442 = vmatprep.subr.mxu0 0.0
      %443 = vmatpush1.msra.mxu0 0.0
      %444 = vmatprep.subr.mxu0 0.0
      %445 = vmatpush1.msra.mxu0 0.0
      %446 = vmatprep.subr.mxu0 0.0
      %447 = vmatpush1.msra.mxu0 0.0
      %448 = vmatprep.subr.mxu0 0.0
      %449 = vmatpush1.msra.mxu0 0.0
      %450 = vmatprep.subr.mxu0 0.0
      %451 = vmatpush1.msra.mxu0 0.0
      %452 = vmatprep.subr.mxu0 0.0
      %453 = vmatpush1.msra.mxu0 0.0
      %454 = vmatprep.subr.mxu0 0.0
      %455 = vmatpush1.msra.mxu0 0.0
      %456 = vmatprep.subr.mxu0 0.0
      %457 = vmatpush1.msra.mxu0 0.0
      %458 = vmatprep.subr.mxu0 0.0
      %459 = vmatpush1.msra.mxu0 0.0
      %460 = vmatprep.mubr.f32.mxu0 0.0
      %461 = vmatmul.mubr.f32.gmra.mrb[0].mxu0 %v323
      %v462 = vpop.f32.mrb[0].mxu0
      %v463 = vadd.f32 0.0, %v462
      %v464 = vpop.f32.mrb[0].mxu0
      %v465 = vadd.f32 0.0, %v464
      %466 = vdwg.mxu0
      %v468 = vsel %vm321, %v294, 0
      %470 = vmatprep.subr.mxu0 %v290
      %471 = vmatpush1.msra.mxu0 %v289
      %472 = vmatprep.subr.mxu0 0.0
      %473 = vmatpush1.msra.mxu0 0.0
      %474 = vmatprep.subr.mxu0 0.0
      %475 = vmatpush1.msra.mxu0 0.0
      %476 = vmatprep.subr.mxu0 0.0
      %477 = vmatpush1.msra.mxu0 0.0
      %478 = vmatprep.subr.mxu0 0.0
      %479 = vmatpush1.msra.mxu0 0.0
      %480 = vmatprep.subr.mxu0 0.0
      %481 = vmatpush1.msra.mxu0 0.0
      %482 = vmatprep.subr.mxu0 0.0
      %483 = vmatpush1.msra.mxu0 0.0
      %484 = vmatprep.subr.mxu0 0.0
      %485 = vmatpush1.msra.mxu0 0.0
      %486 = vmatprep.subr.mxu0 0.0
      %487 = vmatpush1.msra.mxu0 0.0
      %488 = vmatprep.subr.mxu0 0.0
      %489 = vmatpush1.msra.mxu0 0.0
      %490 = vmatprep.subr.mxu0 0.0
      %491 = vmatpush1.msra.mxu0 0.0
      %492 = vmatprep.subr.mxu0 0.0
      %493 = vmatpush1.msra.mxu0 0.0
      %494 = vmatprep.subr.mxu0 0.0
      %495 = vmatpush1.msra.mxu0 0.0
      %496 = vmatprep.subr.mxu0 0.0
      %497 = vmatpush1.msra.mxu0 0.0
      %498 = vmatprep.subr.mxu0 0.0
      %499 = vmatpush1.msra.mxu0 0.0
      %500 = vmatprep.subr.mxu0 0.0
      %501 = vmatpush1.msra.mxu0 0.0
      %502 = vmatprep.subr.mxu0 0.0
      %503 = vmatpush1.msra.mxu0 0.0
      %504 = vmatprep.subr.mxu0 0.0
      %505 = vmatpush1.msra.mxu0 0.0
      %506 = vmatprep.subr.mxu0 0.0
      %507 = vmatpush1.msra.mxu0 0.0
      %508 = vmatprep.subr.mxu0 0.0
      %509 = vmatpush1.msra.mxu0 0.0
      %510 = vmatprep.subr.mxu0 0.0
      %511 = vmatpush1.msra.mxu0 0.0
      %512 = vmatprep.subr.mxu0 0.0
      %513 = vmatpush1.msra.mxu0 0.0
      %514 = vmatprep.subr.mxu0 0.0
      %515 = vmatpush1.msra.mxu0 0.0
      %516 = vmatprep.subr.mxu0 0.0
      %517 = vmatpush1.msra.mxu0 0.0
      %518 = vmatprep.subr.mxu0 0.0
      %519 = vmatpush1.msra.mxu0 0.0
      %520 = vmatprep.subr.mxu0 0.0
      %521 = vmatpush1.msra.mxu0 0.0
      %522 = vmatprep.subr.mxu0 0.0
      %523 = vmatpush1.msra.mxu0 0.0
      %524 = vmatprep.subr.mxu0 0.0
      %525 = vmatpush1.msra.mxu0 0.0
      %526 = vmatprep.subr.mxu0 0.0
      %527 = vmatpush1.msra.mxu0 0.0
      %528 = vmatprep.subr.mxu0 0.0
      %529 = vmatpush1.msra.mxu0 0.0
      %530 = vmatprep.subr.mxu0 0.0
      %531 = vmatpush1.msra.mxu0 0.0
      %532 = vmatprep.subr.mxu0 0.0
      %533 = vmatpush1.msra.mxu0 0.0
      %534 = vmatprep.mubr.f32.mxu0 0.0
      %535 = vmatmul.mubr.f32.gmra.mrb[0].mxu0 %v468
      %v536 = vpop.f32.mrb[0].mxu0
      %v537 = vadd.f32 %v392, %v536
      %v538 = vpop.f32.mrb[0].mxu0
      %v539 = vadd.f32 %v394, %v538
      %540 = vdwg.mxu0
      %541 = vmatprep.subr.mxu0 %v292
      %542 = vmatpush1.msra.mxu0 %v291
      %543 = vmatprep.subr.mxu0 0.0
      %544 = vmatpush1.msra.mxu0 0.0
      %545 = vmatprep.subr.mxu0 0.0
      %546 = vmatpush1.msra.mxu0 0.0
      %547 = vmatprep.subr.mxu0 0.0
      %548 = vmatpush1.msra.mxu0 0.0
      %549 = vmatprep.subr.mxu0 0.0
      %550 = vmatpush1.msra.mxu0 0.0
      %551 = vmatprep.subr.mxu0 0.0
      %552 = vmatpush1.msra.mxu0 0.0
      %553 = vmatprep.subr.mxu0 0.0
      %554 = vmatpush1.msra.mxu0 0.0
      %555 = vmatprep.subr.mxu0 0.0
      %556 = vmatpush1.msra.mxu0 0.0
      %557 = vmatprep.subr.mxu0 0.0
      %558 = vmatpush1.msra.mxu0 0.0
      %559 = vmatprep.subr.mxu0 0.0
      %560 = vmatpush1.msra.mxu0 0.0
      %561 = vmatprep.subr.mxu0 0.0
      %562 = vmatpush1.msra.mxu0 0.0
      %563 = vmatprep.subr.mxu0 0.0
      %564 = vmatpush1.msra.mxu0 0.0
      %565 = vmatprep.subr.mxu0 0.0
      %566 = vmatpush1.msra.mxu0 0.0
      %567 = vmatprep.subr.mxu0 0.0
      %568 = vmatpush1.msra.mxu0 0.0
      %569 = vmatprep.subr.mxu0 0.0
      %570 = vmatpush1.msra.mxu0 0.0
      %571 = vmatprep.subr.mxu0 0.0
      %572 = vmatpush1.msra.mxu0 0.0
      %573 = vmatprep.subr.mxu0 0.0
      %574 = vmatpush1.msra.mxu0 0.0
      %575 = vmatprep.subr.mxu0 0.0
      %576 = vmatpush1.msra.mxu0 0.0
      %577 = vmatprep.subr.mxu0 0.0
      %578 = vmatpush1.msra.mxu0 0.0
      %579 = vmatprep.subr.mxu0 0.0
      %580 = vmatpush1.msra.mxu0 0.0
      %581 = vmatprep.subr.mxu0 0.0
      %582 = vmatpush1.msra.mxu0 0.0
      %583 = vmatprep.subr.mxu0 0.0
      %584 = vmatpush1.msra.mxu0 0.0
      %585 = vmatprep.subr.mxu0 0.0
      %586 = vmatpush1.msra.mxu0 0.0
      %587 = vmatprep.subr.mxu0 0.0
      %588 = vmatpush1.msra.mxu0 0.0
      %589 = vmatprep.subr.mxu0 0.0
      %590 = vmatpush1.msra.mxu0 0.0
      %591 = vmatprep.subr.mxu0 0.0
      %592 = vmatpush1.msra.mxu0 0.0
      %593 = vmatprep.subr.mxu0 0.0
      %594 = vmatpush1.msra.mxu0 0.0
      %595 = vmatprep.subr.mxu0 0.0
      %596 = vmatpush1.msra.mxu0 0.0
      %597 = vmatprep.subr.mxu0 0.0
      %598 = vmatpush1.msra.mxu0 0.0
      %599 = vmatprep.subr.mxu0 0.0
      %600 = vmatpush1.msra.mxu0 0.0
      %601 = vmatprep.subr.mxu0 0.0
      %602 = vmatpush1.msra.mxu0 0.0
      %603 = vmatprep.subr.mxu0 0.0
      %604 = vmatpush1.msra.mxu0 0.0
      %605 = vmatprep.mubr.f32.mxu0 0.0
      %606 = vmatmul.mubr.f32.gmra.mrb[0].mxu0 %v468
      %v607 = vpop.f32.mrb[0].mxu0
      %v608 = vadd.f32 %v463, %v607
      %v609 = vpop.f32.mrb[0].mxu0
      %v610 = vadd.f32 %v465, %v609
      %611 = vdwg.mxu0
      %s612 = scalar_lea.vmem %s2, 16
      %v613 = vld [vmem:[%s612] sm:$0xff]
      %614 = vrot.lane.b32.xlu0 %v289, 126
      %v615 = vpop.permute.xlu0 %614
      %616 = vrot.lane.b32.xlu0 %v290, 126
      %v617 = vpop.permute.xlu0 %616
      %618 = vrot.lane.b32.xlu0 %v291, 126
      %v619 = vpop.permute.xlu0 %618
      %620 = vrot.lane.b32.xlu0 %v292, 126
      %v621 = vpop.permute.xlu0 %620
      %622 = vrot.lane.b32.xlu0 %v293, 126
      %v623 = vpop.permute.xlu0 %622
      %vm624 = vcmask 1031168
      %v625 = vsel %vm624, %v615, %v617
      %v626 = vsel %vm624, %v617, %v619
      %v627 = vsel %vm624, %v619, %v621
      %v628 = vsel %vm624, %v621, %v623
      %v634 = vsel %vm321, %v613, 0
      %636 = vmatprep.subr.mxu0 %v626
      %637 = vmatpush1.msra.mxu0 %v625
      %638 = vmatprep.subr.mxu0 0.0
      %639 = vmatpush1.msra.mxu0 0.0
      %640 = vmatprep.subr.mxu0 0.0
      %641 = vmatpush1.msra.mxu0 0.0
      %642 = vmatprep.subr.mxu0 0.0
      %643 = vmatpush1.msra.mxu0 0.0
      %644 = vmatprep.subr.mxu0 0.0
      %645 = vmatpush1.msra.mxu0 0.0
      %646 = vmatprep.subr.mxu0 0.0
      %647 = vmatpush1.msra.mxu0 0.0
      %648 = vmatprep.subr.mxu0 0.0
      %649 = vmatpush1.msra.mxu0 0.0
      %650 = vmatprep.subr.mxu0 0.0
      %651 = vmatpush1.msra.mxu0 0.0
      %652 = vmatprep.subr.mxu0 0.0
      %653 = vmatpush1.msra.mxu0 0.0
      %654 = vmatprep.subr.mxu0 0.0
      %655 = vmatpush1.msra.mxu0 0.0
      %656 = vmatprep.subr.mxu0 0.0
      %657 = vmatpush1.msra.mxu0 0.0
      %658 = vmatprep.subr.mxu0 0.0
      %659 = vmatpush1.msra.mxu0 0.0
      %660 = vmatprep.subr.mxu0 0.0
      %661 = vmatpush1.msra.mxu0 0.0
      %662 = vmatprep.subr.mxu0 0.0
      %663 = vmatpush1.msra.mxu0 0.0
      %664 = vmatprep.subr.mxu0 0.0
      %665 = vmatpush1.msra.mxu0 0.0
      %666 = vmatprep.subr.mxu0 0.0
      %667 = vmatpush1.msra.mxu0 0.0
      %668 = vmatprep.subr.mxu0 0.0
      %669 = vmatpush1.msra.mxu0 0.0
      %670 = vmatprep.subr.mxu0 0.0
      %671 = vmatpush1.msra.mxu0 0.0
      %672 = vmatprep.subr.mxu0 0.0
      %673 = vmatpush1.msra.mxu0 0.0
      %674 = vmatprep.subr.mxu0 0.0
      %675 = vmatpush1.msra.mxu0 0.0
      %676 = vmatprep.subr.mxu0 0.0
      %677 = vmatpush1.msra.mxu0 0.0
      %678 = vmatprep.subr.mxu0 0.0
      %679 = vmatpush1.msra.mxu0 0.0
      %680 = vmatprep.subr.mxu0 0.0
      %681 = vmatpush1.msra.mxu0 0.0
      %682 = vmatprep.subr.mxu0 0.0
      %683 = vmatpush1.msra.mxu0 0.0
      %684 = vmatprep.subr.mxu0 0.0
      %685 = vmatpush1.msra.mxu0 0.0
      %686 = vmatprep.subr.mxu0 0.0
      %687 = vmatpush1.msra.mxu0 0.0
      %688 = vmatprep.subr.mxu0 0.0
      %689 = vmatpush1.msra.mxu0 0.0
      %690 = vmatprep.subr.mxu0 0.0
      %691 = vmatpush1.msra.mxu0 0.0
      %692 = vmatprep.subr.mxu0 0.0
      %693 = vmatpush1.msra.mxu0 0.0
      %694 = vmatprep.subr.mxu0 0.0
      %695 = vmatpush1.msra.mxu0 0.0
      %696 = vmatprep.subr.mxu0 0.0
      %697 = vmatpush1.msra.mxu0 0.0
      %698 = vmatprep.subr.mxu0 0.0
      %699 = vmatpush1.msra.mxu0 0.0
      %700 = vmatprep.mubr.f32.mxu0 0.0
      %701 = vmatmul.mubr.f32.gmra.mrb[0].mxu0 %v634
      %v702 = vpop.f32.mrb[0].mxu0
      %v703 = vadd.f32 0.0, %v702
      %v704 = vpop.f32.mrb[0].mxu0
      %v705 = vadd.f32 0.0, %v704
      %706 = vdwg.mxu0
      %707 = vmatprep.subr.mxu0 %v628
      %708 = vmatpush1.msra.mxu0 %v627
      %709 = vmatprep.subr.mxu0 0.0
      %710 = vmatpush1.msra.mxu0 0.0
      %711 = vmatprep.subr.mxu0 0.0
      %712 = vmatpush1.msra.mxu0 0.0
      %713 = vmatprep.subr.mxu0 0.0
      %714 = vmatpush1.msra.mxu0 0.0
      %715 = vmatprep.subr.mxu0 0.0
      %716 = vmatpush1.msra.mxu0 0.0
      %717 = vmatprep.subr.mxu0 0.0
      %718 = vmatpush1.msra.mxu0 0.0
      %719 = vmatprep.subr.mxu0 0.0
      %720 = vmatpush1.msra.mxu0 0.0
      %721 = vmatprep.subr.mxu0 0.0
      %722 = vmatpush1.msra.mxu0 0.0
      %723 = vmatprep.subr.mxu0 0.0
      %724 = vmatpush1.msra.mxu0 0.0
      %725 = vmatprep.subr.mxu0 0.0
      %726 = vmatpush1.msra.mxu0 0.0
      %727 = vmatprep.subr.mxu0 0.0
      %728 = vmatpush1.msra.mxu0 0.0
      %729 = vmatprep.subr.mxu0 0.0
      %730 = vmatpush1.msra.mxu0 0.0
      %731 = vmatprep.subr.mxu0 0.0
      %732 = vmatpush1.msra.mxu0 0.0
      %733 = vmatprep.subr.mxu0 0.0
      %734 = vmatpush1.msra.mxu0 0.0
      %735 = vmatprep.subr.mxu0 0.0
      %736 = vmatpush1.msra.mxu0 0.0
      %737 = vmatprep.subr.mxu0 0.0
      %738 = vmatpush1.msra.mxu0 0.0
      %739 = vmatprep.subr.mxu0 0.0
      %740 = vmatpush1.msra.mxu0 0.0
      %741 = vmatprep.subr.mxu0 0.0
      %742 = vmatpush1.msra.mxu0 0.0
      %743 = vmatprep.subr.mxu0 0.0
      %744 = vmatpush1.msra.mxu0 0.0
      %745 = vmatprep.subr.mxu0 0.0
      %746 = vmatpush1.msra.mxu0 0.0
      %747 = vmatprep.subr.mxu0 0.0
      %748 = vmatpush1.msra.mxu0 0.0
      %749 = vmatprep.subr.mxu0 0.0
      %750 = vmatpush1.msra.mxu0 0.0
      %751 = vmatprep.subr.mxu0 0.0
      %752 = vmatpush1.msra.mxu0 0.0
      %753 = vmatprep.subr.mxu0 0.0
      %754 = vmatpush1.msra.mxu0 0.0
      %755 = vmatprep.subr.mxu0 0.0
      %756 = vmatpush1.msra.mxu0 0.0
      %757 = vmatprep.subr.mxu0 0.0
      %758 = vmatpush1.msra.mxu0 0.0
      %759 = vmatprep.subr.mxu0 0.0
      %760 = vmatpush1.msra.mxu0 0.0
      %761 = vmatprep.subr.mxu0 0.0
      %762 = vmatpush1.msra.mxu0 0.0
      %763 = vmatprep.subr.mxu0 0.0
      %764 = vmatpush1.msra.mxu0 0.0
      %765 = vmatprep.subr.mxu0 0.0
      %766 = vmatpush1.msra.mxu0 0.0
      %767 = vmatprep.subr.mxu0 0.0
      %768 = vmatpush1.msra.mxu0 0.0
      %769 = vmatprep.subr.mxu0 0.0
      %770 = vmatpush1.msra.mxu0 0.0
      %771 = vmatprep.mubr.f32.mxu0 0.0
      %772 = vmatmul.mubr.f32.gmra.mrb[0].mxu0 %v634
      %v773 = vpop.f32.mrb[0].mxu0
      %v774 = vadd.f32 0.0, %v773
      %v775 = vpop.f32.mrb[0].mxu0
      %v776 = vadd.f32 0.0, %v775
      %777 = vdwg.mxu0
      %v778 = vadd.f32 %v537, %v703
      %v779 = vadd.f32 %v539, %v705
      %v780 = vadd.f32 %v608, %v774
      %v781 = vadd.f32 %v610, %v776
      %s782 = scalar_lea.vmem %s2, 24
      %v783 = vld [vmem:[%s782] sm:$0xff]
      %784 = vrot.lane.b32.xlu0 %v289, 110
      %v785 = vpop.permute.xlu0 %784
      %786 = vrot.lane.b32.xlu0 %v290, 110
      %v787 = vpop.permute.xlu0 %786
      %788 = vrot.lane.b32.xlu0 %v291, 110
      %v789 = vpop.permute.xlu0 %788
      %790 = vrot.lane.b32.xlu0 %v292, 110
      %v791 = vpop.permute.xlu0 %790
      %792 = vrot.lane.b32.xlu0 %v293, 110
      %v793 = vpop.permute.xlu0 %792
      %vm794 = vcmask 900096
      %v795 = vsel %vm794, %v785, %v787
      %v796 = vsel %vm794, %v787, %v789
      %v797 = vsel %vm794, %v789, %v791
      %v798 = vsel %vm794, %v791, %v793
      %v804 = vsel %vm321, %v783, 0
      %806 = vmatprep.subr.mxu0 %v796
      %807 = vmatpush1.msra.mxu0 %v795
      %808 = vmatprep.subr.mxu0 0.0
      %809 = vmatpush1.msra.mxu0 0.0
      %810 = vmatprep.subr.mxu0 0.0
      %811 = vmatpush1.msra.mxu0 0.0
      %812 = vmatprep.subr.mxu0 0.0
      %813 = vmatpush1.msra.mxu0 0.0
      %814 = vmatprep.subr.mxu0 0.0
      %815 = vmatpush1.msra.mxu0 0.0
      %816 = vmatprep.subr.mxu0 0.0
      %817 = vmatpush1.msra.mxu0 0.0
      %818 = vmatprep.subr.mxu0 0.0
      %819 = vmatpush1.msra.mxu0 0.0
      %820 = vmatprep.subr.mxu0 0.0
      %821 = vmatpush1.msra.mxu0 0.0
      %822 = vmatprep.subr.mxu0 0.0
      %823 = vmatpush1.msra.mxu0 0.0
      %824 = vmatprep.subr.mxu0 0.0
      %825 = vmatpush1.msra.mxu0 0.0
      %826 = vmatprep.subr.mxu0 0.0
      %827 = vmatpush1.msra.mxu0 0.0
      %828 = vmatprep.subr.mxu0 0.0
      %829 = vmatpush1.msra.mxu0 0.0
      %830 = vmatprep.subr.mxu0 0.0
      %831 = vmatpush1.msra.mxu0 0.0
      %832 = vmatprep.subr.mxu0 0.0
      %833 = vmatpush1.msra.mxu0 0.0
      %834 = vmatprep.subr.mxu0 0.0
      %835 = vmatpush1.msra.mxu0 0.0
      %836 = vmatprep.subr.mxu0 0.0
      %837 = vmatpush1.msra.mxu0 0.0
      %838 = vmatprep.subr.mxu0 0.0
      %839 = vmatpush1.msra.mxu0 0.0
      %840 = vmatprep.subr.mxu0 0.0
      %841 = vmatpush1.msra.mxu0 0.0
      %842 = vmatprep.subr.mxu0 0.0
      %843 = vmatpush1.msra.mxu0 0.0
      %844 = vmatprep.subr.mxu0 0.0
      %845 = vmatpush1.msra.mxu0 0.0
      %846 = vmatprep.subr.mxu0 0.0
      %847 = vmatpush1.msra.mxu0 0.0
      %848 = vmatprep.subr.mxu0 0.0
      %849 = vmatpush1.msra.mxu0 0.0
      %850 = vmatprep.subr.mxu0 0.0
      %851 = vmatpush1.msra.mxu0 0.0
      %852 = vmatprep.subr.mxu0 0.0
      %853 = vmatpush1.msra.mxu0 0.0
      %854 = vmatprep.subr.mxu0 0.0
      %855 = vmatpush1.msra.mxu0 0.0
      %856 = vmatprep.subr.mxu0 0.0
      %857 = vmatpush1.msra.mxu0 0.0
      %858 = vmatprep.subr.mxu0 0.0
      %859 = vmatpush1.msra.mxu0 0.0
      %860 = vmatprep.subr.mxu0 0.0
      %861 = vmatpush1.msra.mxu0 0.0
      %862 = vmatprep.subr.mxu0 0.0
      %863 = vmatpush1.msra.mxu0 0.0
      %864 = vmatprep.subr.mxu0 0.0
      %865 = vmatpush1.msra.mxu0 0.0
      %866 = vmatprep.subr.mxu0 0.0
      %867 = vmatpush1.msra.mxu0 0.0
      %868 = vmatprep.subr.mxu0 0.0
      %869 = vmatpush1.msra.mxu0 0.0
      %870 = vmatprep.mubr.f32.mxu0 0.0
      %871 = vmatmul.mubr.f32.gmra.mrb[0].mxu0 %v804
      %v872 = vpop.f32.mrb[0].mxu0
      %v873 = vadd.f32 0.0, %v872
      %v874 = vpop.f32.mrb[0].mxu0
      %v875 = vadd.f32 0.0, %v874
      %876 = vdwg.mxu0
      %877 = vmatprep.subr.mxu0 %v798
      %878 = vmatpush1.msra.mxu0 %v797
      %879 = vmatprep.subr.mxu0 0.0
      %880 = vmatpush1.msra.mxu0 0.0
      %881 = vmatprep.subr.mxu0 0.0
      %882 = vmatpush1.msra.mxu0 0.0
      %883 = vmatprep.subr.mxu0 0.0
      %884 = vmatpush1.msra.mxu0 0.0
      %885 = vmatprep.subr.mxu0 0.0
      %886 = vmatpush1.msra.mxu0 0.0
      %887 = vmatprep.subr.mxu0 0.0
      %888 = vmatpush1.msra.mxu0 0.0
      %889 = vmatprep.subr.mxu0 0.0
      %890 = vmatpush1.msra.mxu0 0.0
      %891 = vmatprep.subr.mxu0 0.0
      %892 = vmatpush1.msra.mxu0 0.0
      %893 = vmatprep.subr.mxu0 0.0
      %894 = vmatpush1.msra.mxu0 0.0
      %895 = vmatprep.subr.mxu0 0.0
      %896 = vmatpush1.msra.mxu0 0.0
      %897 = vmatprep.subr.mxu0 0.0
      %898 = vmatpush1.msra.mxu0 0.0
      %899 = vmatprep.subr.mxu0 0.0
      %900 = vmatpush1.msra.mxu0 0.0
      %901 = vmatprep.subr.mxu0 0.0
      %902 = vmatpush1.msra.mxu0 0.0
      %903 = vmatprep.subr.mxu0 0.0
      %904 = vmatpush1.msra.mxu0 0.0
      %905 = vmatprep.subr.mxu0 0.0
      %906 = vmatpush1.msra.mxu0 0.0
      %907 = vmatprep.subr.mxu0 0.0
      %908 = vmatpush1.msra.mxu0 0.0
      %909 = vmatprep.subr.mxu0 0.0
      %910 = vmatpush1.msra.mxu0 0.0
      %911 = vmatprep.subr.mxu0 0.0
      %912 = vmatpush1.msra.mxu0 0.0
      %913 = vmatprep.subr.mxu0 0.0
      %914 = vmatpush1.msra.mxu0 0.0
      %915 = vmatprep.subr.mxu0 0.0
      %916 = vmatpush1.msra.mxu0 0.0
      %917 = vmatprep.subr.mxu0 0.0
      %918 = vmatpush1.msra.mxu0 0.0
      %919 = vmatprep.subr.mxu0 0.0
      %920 = vmatpush1.msra.mxu0 0.0
      %921 = vmatprep.subr.mxu0 0.0
      %922 = vmatpush1.msra.mxu0 0.0
      %923 = vmatprep.subr.mxu0 0.0
      %924 = vmatpush1.msra.mxu0 0.0
      %925 = vmatprep.subr.mxu0 0.0
      %926 = vmatpush1.msra.mxu0 0.0
      %927 = vmatprep.subr.mxu0 0.0
      %928 = vmatpush1.msra.mxu0 0.0
      %929 = vmatprep.subr.mxu0 0.0
      %930 = vmatpush1.msra.mxu0 0.0
      %931 = vmatprep.subr.mxu0 0.0
      %932 = vmatpush1.msra.mxu0 0.0
      %933 = vmatprep.subr.mxu0 0.0
      %934 = vmatpush1.msra.mxu0 0.0
      %935 = vmatprep.subr.mxu0 0.0
      %936 = vmatpush1.msra.mxu0 0.0
      %937 = vmatprep.subr.mxu0 0.0
      %938 = vmatpush1.msra.mxu0 0.0
      %939 = vmatprep.subr.mxu0 0.0
      %940 = vmatpush1.msra.mxu0 0.0
      %941 = vmatprep.mubr.f32.mxu0 0.0
      %942 = vmatmul.mubr.f32.gmra.mrb[0].mxu0 %v804
      %v943 = vpop.f32.mrb[0].mxu0
      %v944 = vadd.f32 0.0, %v943
      %v945 = vpop.f32.mrb[0].mxu0
      %v946 = vadd.f32 0.0, %v945
      %947 = vdwg.mxu0
      %v948 = vadd.f32 %v778, %v873
      %v949 = vadd.f32 %v779, %v875
      %v950 = vadd.f32 %v780, %v944
      %v951 = vadd.f32 %v781, %v946
      %s952 = scalar_lea.vmem %s2, 32
      %v953 = vld [vmem:[%s952] sm:$0xff]
      %954 = vrot.lane.b32.xlu0 %v289, 109
      %v955 = vpop.permute.xlu0 %954
      %956 = vrot.lane.b32.xlu0 %v290, 109
      %v957 = vpop.permute.xlu0 %956
      %958 = vrot.lane.b32.xlu0 %v291, 109
      %v959 = vpop.permute.xlu0 %958
      %960 = vrot.lane.b32.xlu0 %v292, 109
      %v961 = vpop.permute.xlu0 %960
      %962 = vrot.lane.b32.xlu0 %v293, 109
      %v963 = vpop.permute.xlu0 %962
      %vm964 = vcmask 891904
      %v965 = vsel %vm964, %v955, %v957
      %v966 = vsel %vm964, %v957, %v959
      %v967 = vsel %vm964, %v959, %v961
      %v968 = vsel %vm964, %v961, %v963
      %v974 = vsel %vm321, %v953, 0
      %976 = vmatprep.subr.mxu0 %v966
      %977 = vmatpush1.msra.mxu0 %v965
      %978 = vmatprep.subr.mxu0 0.0
      %979 = vmatpush1.msra.mxu0 0.0
      %980 = vmatprep.subr.mxu0 0.0
      %981 = vmatpush1.msra.mxu0 0.0
      %982 = vmatprep.subr.mxu0 0.0
      %983 = vmatpush1.msra.mxu0 0.0
      %984 = vmatprep.subr.mxu0 0.0
      %985 = vmatpush1.msra.mxu0 0.0
      %986 = vmatprep.subr.mxu0 0.0
      %987 = vmatpush1.msra.mxu0 0.0
      %988 = vmatprep.subr.mxu0 0.0
      %989 = vmatpush1.msra.mxu0 0.0
      %990 = vmatprep.subr.mxu0 0.0
      %991 = vmatpush1.msra.mxu0 0.0
      %992 = vmatprep.subr.mxu0 0.0
      %993 = vmatpush1.msra.mxu0 0.0
      %994 = vmatprep.subr.mxu0 0.0
      %995 = vmatpush1.msra.mxu0 0.0
      %996 = vmatprep.subr.mxu0 0.0
      %997 = vmatpush1.msra.mxu0 0.0
      %998 = vmatprep.subr.mxu0 0.0
      %999 = vmatpush1.msra.mxu0 0.0
      %1000 = vmatprep.subr.mxu0 0.0
      %1001 = vmatpush1.msra.mxu0 0.0
      %1002 = vmatprep.subr.mxu0 0.0
      %1003 = vmatpush1.msra.mxu0 0.0
      %1004 = vmatprep.subr.mxu0 0.0
      %1005 = vmatpush1.msra.mxu0 0.0
      %1006 = vmatprep.subr.mxu0 0.0
      %1007 = vmatpush1.msra.mxu0 0.0
      %1008 = vmatprep.subr.mxu0 0.0
      %1009 = vmatpush1.msra.mxu0 0.0
      %1010 = vmatprep.subr.mxu0 0.0
      %1011 = vmatpush1.msra.mxu0 0.0
      %1012 = vmatprep.subr.mxu0 0.0
      %1013 = vmatpush1.msra.mxu0 0.0
      %1014 = vmatprep.subr.mxu0 0.0
      %1015 = vmatpush1.msra.mxu0 0.0
      %1016 = vmatprep.subr.mxu0 0.0
      %1017 = vmatpush1.msra.mxu0 0.0
      %1018 = vmatprep.subr.mxu0 0.0
      %1019 = vmatpush1.msra.mxu0 0.0
      %1020 = vmatprep.subr.mxu0 0.0
      %1021 = vmatpush1.msra.mxu0 0.0
      %1022 = vmatprep.subr.mxu0 0.0
      %1023 = vmatpush1.msra.mxu0 0.0
      %1024 = vmatprep.subr.mxu0 0.0
      %1025 = vmatpush1.msra.mxu0 0.0
      %1026 = vmatprep.subr.mxu0 0.0
      %1027 = vmatpush1.msra.mxu0 0.0
      %1028 = vmatprep.subr.mxu0 0.0
      %1029 = vmatpush1.msra.mxu0 0.0
      %1030 = vmatprep.subr.mxu0 0.0
      %1031 = vmatpush1.msra.mxu0 0.0
      %1032 = vmatprep.subr.mxu0 0.0
      %1033 = vmatpush1.msra.mxu0 0.0
      %1034 = vmatprep.subr.mxu0 0.0
      %1035 = vmatpush1.msra.mxu0 0.0
      %1036 = vmatprep.subr.mxu0 0.0
      %1037 = vmatpush1.msra.mxu0 0.0
      %1038 = vmatprep.subr.mxu0 0.0
      %1039 = vmatpush1.msra.mxu0 0.0
      %1040 = vmatprep.mubr.f32.mxu0 0.0
      %1041 = vmatmul.mubr.f32.gmra.mrb[0].mxu0 %v974
      %v1042 = vpop.f32.mrb[0].mxu0
      %v1043 = vadd.f32 0.0, %v1042
      %v1044 = vpop.f32.mrb[0].mxu0
      %v1045 = vadd.f32 0.0, %v1044
      %1046 = vdwg.mxu0
      %1047 = vmatprep.subr.mxu0 %v968
      %1048 = vmatpush1.msra.mxu0 %v967
      %1049 = vmatprep.subr.mxu0 0.0
      %1050 = vmatpush1.msra.mxu0 0.0
      %1051 = vmatprep.subr.mxu0 0.0
      %1052 = vmatpush1.msra.mxu0 0.0
      %1053 = vmatprep.subr.mxu0 0.0
      %1054 = vmatpush1.msra.mxu0 0.0
      %1055 = vmatprep.subr.mxu0 0.0
      %1056 = vmatpush1.msra.mxu0 0.0
      %1057 = vmatprep.subr.mxu0 0.0
      %1058 = vmatpush1.msra.mxu0 0.0
      %1059 = vmatprep.subr.mxu0 0.0
      %1060 = vmatpush1.msra.mxu0 0.0
      %1061 = vmatprep.subr.mxu0 0.0
      %1062 = vmatpush1.msra.mxu0 0.0
      %1063 = vmatprep.subr.mxu0 0.0
      %1064 = vmatpush1.msra.mxu0 0.0
      %1065 = vmatprep.subr.mxu0 0.0
      %1066 = vmatpush1.msra.mxu0 0.0
      %1067 = vmatprep.subr.mxu0 0.0
      %1068 = vmatpush1.msra.mxu0 0.0
      %1069 = vmatprep.subr.mxu0 0.0
      %1070 = vmatpush1.msra.mxu0 0.0
      %1071 = vmatprep.subr.mxu0 0.0
      %1072 = vmatpush1.msra.mxu0 0.0
      %1073 = vmatprep.subr.mxu0 0.0
      %1074 = vmatpush1.msra.mxu0 0.0
      %1075 = vmatprep.subr.mxu0 0.0
      %1076 = vmatpush1.msra.mxu0 0.0
      %1077 = vmatprep.subr.mxu0 0.0
      %1078 = vmatpush1.msra.mxu0 0.0
      %1079 = vmatprep.subr.mxu0 0.0
      %1080 = vmatpush1.msra.mxu0 0.0
      %1081 = vmatprep.subr.mxu0 0.0
      %1082 = vmatpush1.msra.mxu0 0.0
      %1083 = vmatprep.subr.mxu0 0.0
      %1084 = vmatpush1.msra.mxu0 0.0
      %1085 = vmatprep.subr.mxu0 0.0
      %1086 = vmatpush1.msra.mxu0 0.0
      %1087 = vmatprep.subr.mxu0 0.0
      %1088 = vmatpush1.msra.mxu0 0.0
      %1089 = vmatprep.subr.mxu0 0.0
      %1090 = vmatpush1.msra.mxu0 0.0
      %1091 = vmatprep.subr.mxu0 0.0
      %1092 = vmatpush1.msra.mxu0 0.0
      %1093 = vmatprep.subr.mxu0 0.0
      %1094 = vmatpush1.msra.mxu0 0.0
      %1095 = vmatprep.subr.mxu0 0.0
      %1096 = vmatpush1.msra.mxu0 0.0
      %1097 = vmatprep.subr.mxu0 0.0
      %1098 = vmatpush1.msra.mxu0 0.0
      %1099 = vmatprep.subr.mxu0 0.0
      %1100 = vmatpush1.msra.mxu0 0.0
      %1101 = vmatprep.subr.mxu0 0.0
      %1102 = vmatpush1.msra.mxu0 0.0
      %1103 = vmatprep.subr.mxu0 0.0
      %1104 = vmatpush1.msra.mxu0 0.0
      %1105 = vmatprep.subr.mxu0 0.0
      %1106 = vmatpush1.msra.mxu0 0.0
      %1107 = vmatprep.subr.mxu0 0.0
      %1108 = vmatpush1.msra.mxu0 0.0
      %1109 = vmatprep.subr.mxu0 0.0
      %1110 = vmatpush1.msra.mxu0 0.0
      %1111 = vmatprep.mubr.f32.mxu0 0.0
      %1112 = vmatmul.mubr.f32.gmra.mrb[0].mxu0 %v974
      %v1113 = vpop.f32.mrb[0].mxu0
      %v1114 = vadd.f32 0.0, %v1113
      %v1115 = vpop.f32.mrb[0].mxu0
      %v1116 = vadd.f32 0.0, %v1115
      %1117 = vdwg.mxu0
      %v1118 = vadd.f32 %v948, %v1043
      %v1119 = vadd.f32 %v949, %v1045
      %v1120 = vadd.f32 %v950, %v1114
      %v1121 = vadd.f32 %v951, %v1116
      %s1122 = scalar_lea.vmem %s2, 40
      %v1123 = vld [vmem:[%s1122] sm:$0xff]
      %1124 = vrot.lane.b32.xlu0 %v289, 108
      %v1125 = vpop.permute.xlu0 %1124
      %1126 = vrot.lane.b32.xlu0 %v290, 108
      %v1127 = vpop.permute.xlu0 %1126
      %1128 = vrot.lane.b32.xlu0 %v291, 108
      %v1129 = vpop.permute.xlu0 %1128
      %1130 = vrot.lane.b32.xlu0 %v292, 108
      %v1131 = vpop.permute.xlu0 %1130
      %1132 = vrot.lane.b32.xlu0 %v293, 108
      %v1133 = vpop.permute.xlu0 %1132
      %vm1134 = vcmask 883712
      %v1135 = vsel %vm1134, %v1125, %v1127
      %v1136 = vsel %vm1134, %v1127, %v1129
      %v1137 = vsel %vm1134, %v1129, %v1131
      %v1138 = vsel %vm1134, %v1131, %v1133
      %v1144 = vsel %vm321, %v1123, 0
      %1146 = vmatprep.subr.mxu0 %v1136
      %1147 = vmatpush1.msra.mxu0 %v1135
      %1148 = vmatprep.subr.mxu0 0.0
      %1149 = vmatpush1.msra.mxu0 0.0
      %1150 = vmatprep.subr.mxu0 0.0
      %1151 = vmatpush1.msra.mxu0 0.0
      %1152 = vmatprep.subr.mxu0 0.0
      %1153 = vmatpush1.msra.mxu0 0.0
      %1154 = vmatprep.subr.mxu0 0.0
      %1155 = vmatpush1.msra.mxu0 0.0
      %1156 = vmatprep.subr.mxu0 0.0
      %1157 = vmatpush1.msra.mxu0 0.0
      %1158 = vmatprep.subr.mxu0 0.0
      %1159 = vmatpush1.msra.mxu0 0.0
      %1160 = vmatprep.subr.mxu0 0.0
      %1161 = vmatpush1.msra.mxu0 0.0
      %1162 = vmatprep.subr.mxu0 0.0
      %1163 = vmatpush1.msra.mxu0 0.0
      %1164 = vmatprep.subr.mxu0 0.0
      %1165 = vmatpush1.msra.mxu0 0.0
      %1166 = vmatprep.subr.mxu0 0.0
      %1167 = vmatpush1.msra.mxu0 0.0
      %1168 = vmatprep.subr.mxu0 0.0
      %1169 = vmatpush1.msra.mxu0 0.0
      %1170 = vmatprep.subr.mxu0 0.0
      %1171 = vmatpush1.msra.mxu0 0.0
      %1172 = vmatprep.subr.mxu0 0.0
      %1173 = vmatpush1.msra.mxu0 0.0
      %1174 = vmatprep.subr.mxu0 0.0
      %1175 = vmatpush1.msra.mxu0 0.0
      %1176 = vmatprep.subr.mxu0 0.0
      %1177 = vmatpush1.msra.mxu0 0.0
      %1178 = vmatprep.subr.mxu0 0.0
      %1179 = vmatpush1.msra.mxu0 0.0
      %1180 = vmatprep.subr.mxu0 0.0
      %1181 = vmatpush1.msra.mxu0 0.0
      %1182 = vmatprep.subr.mxu0 0.0
      %1183 = vmatpush1.msra.mxu0 0.0
      %1184 = vmatprep.subr.mxu0 0.0
      %1185 = vmatpush1.msra.mxu0 0.0
      %1186 = vmatprep.subr.mxu0 0.0
      %1187 = vmatpush1.msra.mxu0 0.0
      %1188 = vmatprep.subr.mxu0 0.0
      %1189 = vmatpush1.msra.mxu0 0.0
      %1190 = vmatprep.subr.mxu0 0.0
      %1191 = vmatpush1.msra.mxu0 0.0
      %1192 = vmatprep.subr.mxu0 0.0
      %1193 = vmatpush1.msra.mxu0 0.0
      %1194 = vmatprep.subr.mxu0 0.0
      %1195 = vmatpush1.msra.mxu0 0.0
      %1196 = vmatprep.subr.mxu0 0.0
      %1197 = vmatpush1.msra.mxu0 0.0
      %1198 = vmatprep.subr.mxu0 0.0
      %1199 = vmatpush1.msra.mxu0 0.0
      %1200 = vmatprep.subr.mxu0 0.0
      %1201 = vmatpush1.msra.mxu0 0.0
      %1202 = vmatprep.subr.mxu0 0.0
      %1203 = vmatpush1.msra.mxu0 0.0
      %1204 = vmatprep.subr.mxu0 0.0
      %1205 = vmatpush1.msra.mxu0 0.0
      %1206 = vmatprep.subr.mxu0 0.0
      %1207 = vmatpush1.msra.mxu0 0.0
      %1208 = vmatprep.subr.mxu0 0.0
      %1209 = vmatpush1.msra.mxu0 0.0
      %1210 = vmatprep.mubr.f32.mxu0 0.0
      %1211 = vmatmul.mubr.f32.gmra.mrb[0].mxu0 %v1144
      %v1212 = vpop.f32.mrb[0].mxu0
      %v1213 = vadd.f32 0.0, %v1212
      %v1214 = vpop.f32.mrb[0].mxu0
      %v1215 = vadd.f32 0.0, %v1214
      %1216 = vdwg.mxu0
      %1217 = vmatprep.subr.mxu0 %v1138
      %1218 = vmatpush1.msra.mxu0 %v1137
      %1219 = vmatprep.subr.mxu0 0.0
      %1220 = vmatpush1.msra.mxu0 0.0
      %1221 = vmatprep.subr.mxu0 0.0
      %1222 = vmatpush1.msra.mxu0 0.0
      %1223 = vmatprep.subr.mxu0 0.0
      %1224 = vmatpush1.msra.mxu0 0.0
      %1225 = vmatprep.subr.mxu0 0.0
      %1226 = vmatpush1.msra.mxu0 0.0
      %1227 = vmatprep.subr.mxu0 0.0
      %1228 = vmatpush1.msra.mxu0 0.0
      %1229 = vmatprep.subr.mxu0 0.0
      %1230 = vmatpush1.msra.mxu0 0.0
      %1231 = vmatprep.subr.mxu0 0.0
      %1232 = vmatpush1.msra.mxu0 0.0
      %1233 = vmatprep.subr.mxu0 0.0
      %1234 = vmatpush1.msra.mxu0 0.0
      %1235 = vmatprep.subr.mxu0 0.0
      %1236 = vmatpush1.msra.mxu0 0.0
      %1237 = vmatprep.subr.mxu0 0.0
      %1238 = vmatpush1.msra.mxu0 0.0
      %1239 = vmatprep.subr.mxu0 0.0
      %1240 = vmatpush1.msra.mxu0 0.0
      %1241 = vmatprep.subr.mxu0 0.0
      %1242 = vmatpush1.msra.mxu0 0.0
      %1243 = vmatprep.subr.mxu0 0.0
      %1244 = vmatpush1.msra.mxu0 0.0
      %1245 = vmatprep.subr.mxu0 0.0
      %1246 = vmatpush1.msra.mxu0 0.0
      %1247 = vmatprep.subr.mxu0 0.0
      %1248 = vmatpush1.msra.mxu0 0.0
      %1249 = vmatprep.subr.mxu0 0.0
      %1250 = vmatpush1.msra.mxu0 0.0
      %1251 = vmatprep.subr.mxu0 0.0
      %1252 = vmatpush1.msra.mxu0 0.0
      %1253 = vmatprep.subr.mxu0 0.0
      %1254 = vmatpush1.msra.mxu0 0.0
      %1255 = vmatprep.subr.mxu0 0.0
      %1256 = vmatpush1.msra.mxu0 0.0
      %1257 = vmatprep.subr.mxu0 0.0
      %1258 = vmatpush1.msra.mxu0 0.0
      %1259 = vmatprep.subr.mxu0 0.0
      %1260 = vmatpush1.msra.mxu0 0.0
      %1261 = vmatprep.subr.mxu0 0.0
      %1262 = vmatpush1.msra.mxu0 0.0
      %1263 = vmatprep.subr.mxu0 0.0
      %1264 = vmatpush1.msra.mxu0 0.0
      %1265 = vmatprep.subr.mxu0 0.0
      %1266 = vmatpush1.msra.mxu0 0.0
      %1267 = vmatprep.subr.mxu0 0.0
      %1268 = vmatpush1.msra.mxu0 0.0
      %1269 = vmatprep.subr.mxu0 0.0
      %1270 = vmatpush1.msra.mxu0 0.0
      %1271 = vmatprep.subr.mxu0 0.0
      %1272 = vmatpush1.msra.mxu0 0.0
      %1273 = vmatprep.subr.mxu0 0.0
      %1274 = vmatpush1.msra.mxu0 0.0
      %1275 = vmatprep.subr.mxu0 0.0
      %1276 = vmatpush1.msra.mxu0 0.0
      %1277 = vmatprep.subr.mxu0 0.0
      %1278 = vmatpush1.msra.mxu0 0.0
      %1279 = vmatprep.subr.mxu0 0.0
      %1280 = vmatpush1.msra.mxu0 0.0
      %1281 = vmatprep.mubr.f32.mxu0 0.0
      %1282 = vmatmul.mubr.f32.gmra.mrb[0].mxu0 %v1144
      %v1283 = vpop.f32.mrb[0].mxu0
      %v1284 = vadd.f32 0.0, %v1283
      %v1285 = vpop.f32.mrb[0].mxu0
      %v1286 = vadd.f32 0.0, %v1285
      %1287 = vdwg.mxu0
      %v1288 = vadd.f32 %v1118, %v1213
      %v1289 = vadd.f32 %v1119, %v1215
      %v1290 = vadd.f32 %v1120, %v1284
      %v1291 = vadd.f32 %v1121, %v1286
      %s1292 = scalar_lea.vmem %s2, 48
      %v1293 = vld [vmem:[%s1292] sm:$0xff]
      %1294 = vrot.lane.b32.xlu0 %v289, 92
      %v1295 = vpop.permute.xlu0 %1294
      %1296 = vrot.lane.b32.xlu0 %v290, 92
      %v1297 = vpop.permute.xlu0 %1296
      %1298 = vrot.lane.b32.xlu0 %v291, 92
      %v1299 = vpop.permute.xlu0 %1298
      %1300 = vrot.lane.b32.xlu0 %v292, 92
      %v1301 = vpop.permute.xlu0 %1300
      %1302 = vrot.lane.b32.xlu0 %v293, 92
      %v1303 = vpop.permute.xlu0 %1302
      %vm1304 = vcmask 752640
      %v1305 = vsel %vm1304, %v1295, %v1297
      %v1306 = vsel %vm1304, %v1297, %v1299
      %v1307 = vsel %vm1304, %v1299, %v1301
      %v1308 = vsel %vm1304, %v1301, %v1303
      %v1314 = vsel %vm321, %v1293, 0
      %1316 = vmatprep.subr.mxu0 %v1306
      %1317 = vmatpush1.msra.mxu0 %v1305
      %1318 = vmatprep.subr.mxu0 0.0
      %1319 = vmatpush1.msra.mxu0 0.0
      %1320 = vmatprep.subr.mxu0 0.0
      %1321 = vmatpush1.msra.mxu0 0.0
      %1322 = vmatprep.subr.mxu0 0.0
      %1323 = vmatpush1.msra.mxu0 0.0
      %1324 = vmatprep.subr.mxu0 0.0
      %1325 = vmatpush1.msra.mxu0 0.0
      %1326 = vmatprep.subr.mxu0 0.0
      %1327 = vmatpush1.msra.mxu0 0.0
      %1328 = vmatprep.subr.mxu0 0.0
      %1329 = vmatpush1.msra.mxu0 0.0
      %1330 = vmatprep.subr.mxu0 0.0
      %1331 = vmatpush1.msra.mxu0 0.0
      %1332 = vmatprep.subr.mxu0 0.0
      %1333 = vmatpush1.msra.mxu0 0.0
      %1334 = vmatprep.subr.mxu0 0.0
      %1335 = vmatpush1.msra.mxu0 0.0
      %1336 = vmatprep.subr.mxu0 0.0
      %1337 = vmatpush1.msra.mxu0 0.0
      %1338 = vmatprep.subr.mxu0 0.0
      %1339 = vmatpush1.msra.mxu0 0.0
      %1340 = vmatprep.subr.mxu0 0.0
      %1341 = vmatpush1.msra.mxu0 0.0
      %1342 = vmatprep.subr.mxu0 0.0
      %1343 = vmatpush1.msra.mxu0 0.0
      %1344 = vmatprep.subr.mxu0 0.0
      %1345 = vmatpush1.msra.mxu0 0.0
      %1346 = vmatprep.subr.mxu0 0.0
      %1347 = vmatpush1.msra.mxu0 0.0
      %1348 = vmatprep.subr.mxu0 0.0
      %1349 = vmatpush1.msra.mxu0 0.0
      %1350 = vmatprep.subr.mxu0 0.0
      %1351 = vmatpush1.msra.mxu0 0.0
      %1352 = vmatprep.subr.mxu0 0.0
      %1353 = vmatpush1.msra.mxu0 0.0
      %1354 = vmatprep.subr.mxu0 0.0
      %1355 = vmatpush1.msra.mxu0 0.0
      %1356 = vmatprep.subr.mxu0 0.0
      %1357 = vmatpush1.msra.mxu0 0.0
      %1358 = vmatprep.subr.mxu0 0.0
      %1359 = vmatpush1.msra.mxu0 0.0
      %1360 = vmatprep.subr.mxu0 0.0
      %1361 = vmatpush1.msra.mxu0 0.0
      %1362 = vmatprep.subr.mxu0 0.0
      %1363 = vmatpush1.msra.mxu0 0.0
      %1364 = vmatprep.subr.mxu0 0.0
      %1365 = vmatpush1.msra.mxu0 0.0
      %1366 = vmatprep.subr.mxu0 0.0
      %1367 = vmatpush1.msra.mxu0 0.0
      %1368 = vmatprep.subr.mxu0 0.0
      %1369 = vmatpush1.msra.mxu0 0.0
      %1370 = vmatprep.subr.mxu0 0.0
      %1371 = vmatpush1.msra.mxu0 0.0
      %1372 = vmatprep.subr.mxu0 0.0
      %1373 = vmatpush1.msra.mxu0 0.0
      %1374 = vmatprep.subr.mxu0 0.0
      %1375 = vmatpush1.msra.mxu0 0.0
      %1376 = vmatprep.subr.mxu0 0.0
      %1377 = vmatpush1.msra.mxu0 0.0
      %1378 = vmatprep.subr.mxu0 0.0
      %1379 = vmatpush1.msra.mxu0 0.0
      %1380 = vmatprep.mubr.f32.mxu0 0.0
      %1381 = vmatmul.mubr.f32.gmra.mrb[0].mxu0 %v1314
      %v1382 = vpop.f32.mrb[0].mxu0
      %v1383 = vadd.f32 0.0, %v1382
      %v1384 = vpop.f32.mrb[0].mxu0
      %v1385 = vadd.f32 0.0, %v1384
      %1386 = vdwg.mxu0
      %1387 = vmatprep.subr.mxu0 %v1308
      %1388 = vmatpush1.msra.mxu0 %v1307
      %1389 = vmatprep.subr.mxu0 0.0
      %1390 = vmatpush1.msra.mxu0 0.0
      %1391 = vmatprep.subr.mxu0 0.0
      %1392 = vmatpush1.msra.mxu0 0.0
      %1393 = vmatprep.subr.mxu0 0.0
      %1394 = vmatpush1.msra.mxu0 0.0
      %1395 = vmatprep.subr.mxu0 0.0
      %1396 = vmatpush1.msra.mxu0 0.0
      %1397 = vmatprep.subr.mxu0 0.0
      %1398 = vmatpush1.msra.mxu0 0.0
      %1399 = vmatprep.subr.mxu0 0.0
      %1400 = vmatpush1.msra.mxu0 0.0
      %1401 = vmatprep.subr.mxu0 0.0
      %1402 = vmatpush1.msra.mxu0 0.0
      %1403 = vmatprep.subr.mxu0 0.0
      %1404 = vmatpush1.msra.mxu0 0.0
      %1405 = vmatprep.subr.mxu0 0.0
      %1406 = vmatpush1.msra.mxu0 0.0
      %1407 = vmatprep.subr.mxu0 0.0
      %1408 = vmatpush1.msra.mxu0 0.0
      %1409 = vmatprep.subr.mxu0 0.0
      %1410 = vmatpush1.msra.mxu0 0.0
      %1411 = vmatprep.subr.mxu0 0.0
      %1412 = vmatpush1.msra.mxu0 0.0
      %1413 = vmatprep.subr.mxu0 0.0
      %1414 = vmatpush1.msra.mxu0 0.0
      %1415 = vmatprep.subr.mxu0 0.0
      %1416 = vmatpush1.msra.mxu0 0.0
      %1417 = vmatprep.subr.mxu0 0.0
      %1418 = vmatpush1.msra.mxu0 0.0
      %1419 = vmatprep.subr.mxu0 0.0
      %1420 = vmatpush1.msra.mxu0 0.0
      %1421 = vmatprep.subr.mxu0 0.0
      %1422 = vmatpush1.msra.mxu0 0.0
      %1423 = vmatprep.subr.mxu0 0.0
      %1424 = vmatpush1.msra.mxu0 0.0
      %1425 = vmatprep.subr.mxu0 0.0
      %1426 = vmatpush1.msra.mxu0 0.0
      %1427 = vmatprep.subr.mxu0 0.0
      %1428 = vmatpush1.msra.mxu0 0.0
      %1429 = vmatprep.subr.mxu0 0.0
      %1430 = vmatpush1.msra.mxu0 0.0
      %1431 = vmatprep.subr.mxu0 0.0
      %1432 = vmatpush1.msra.mxu0 0.0
      %1433 = vmatprep.subr.mxu0 0.0
      %1434 = vmatpush1.msra.mxu0 0.0
      %1435 = vmatprep.subr.mxu0 0.0
      %1436 = vmatpush1.msra.mxu0 0.0
      %1437 = vmatprep.subr.mxu0 0.0
      %1438 = vmatpush1.msra.mxu0 0.0
      %1439 = vmatprep.subr.mxu0 0.0
      %1440 = vmatpush1.msra.mxu0 0.0
      %1441 = vmatprep.subr.mxu0 0.0
      %1442 = vmatpush1.msra.mxu0 0.0
      %1443 = vmatprep.subr.mxu0 0.0
      %1444 = vmatpush1.msra.mxu0 0.0
      %1445 = vmatprep.subr.mxu0 0.0
      %1446 = vmatpush1.msra.mxu0 0.0
      %1447 = vmatprep.subr.mxu0 0.0
      %1448 = vmatpush1.msra.mxu0 0.0
      %1449 = vmatprep.subr.mxu0 0.0
      %1450 = vmatpush1.msra.mxu0 0.0
      %1451 = vmatprep.mubr.f32.mxu0 0.0
      %1452 = vmatmul.mubr.f32.gmra.mrb[0].mxu0 %v1314
      %v1453 = vpop.f32.mrb[0].mxu0
      %v1454 = vadd.f32 0.0, %v1453
      %v1455 = vpop.f32.mrb[0].mxu0
      %v1456 = vadd.f32 0.0, %v1455
      %1457 = vdwg.mxu0
      %v1458 = vadd.f32 %v1288, %v1383
      %v1459 = vadd.f32 %v1289, %v1385
      %v1460 = vadd.f32 %v1290, %v1454
      %v1461 = vadd.f32 %v1291, %v1456
      %s1462 = scalar_lea.vmem %s2, 56
      %v1463 = vld [vmem:[%s1462] sm:$0xff]
      %1464 = vrot.lane.b32.xlu0 %v289, 91
      %v1465 = vpop.permute.xlu0 %1464
      %1466 = vrot.lane.b32.xlu0 %v290, 91
      %v1467 = vpop.permute.xlu0 %1466
      %1468 = vrot.lane.b32.xlu0 %v291, 91
      %v1469 = vpop.permute.xlu0 %1468
      %1470 = vrot.lane.b32.xlu0 %v292, 91
      %v1471 = vpop.permute.xlu0 %1470
      %1472 = vrot.lane.b32.xlu0 %v293, 91
      %v1473 = vpop.permute.xlu0 %1472
      %vm1474 = vcmask 744448
      %v1475 = vsel %vm1474, %v1465, %v1467
      %v1476 = vsel %vm1474, %v1467, %v1469
      %v1477 = vsel %vm1474, %v1469, %v1471
      %v1478 = vsel %vm1474, %v1471, %v1473
      %v1484 = vsel %vm321, %v1463, 0
      %1486 = vmatprep.subr.mxu0 %v1476
      %1487 = vmatpush1.msra.mxu0 %v1475
      %1488 = vmatprep.subr.mxu0 0.0
      %1489 = vmatpush1.msra.mxu0 0.0
      %1490 = vmatprep.subr.mxu0 0.0
      %1491 = vmatpush1.msra.mxu0 0.0
      %1492 = vmatprep.subr.mxu0 0.0
      %1493 = vmatpush1.msra.mxu0 0.0
      %1494 = vmatprep.subr.mxu0 0.0
      %1495 = vmatpush1.msra.mxu0 0.0
      %1496 = vmatprep.subr.mxu0 0.0
      %1497 = vmatpush1.msra.mxu0 0.0
      %1498 = vmatprep.subr.mxu0 0.0
      %1499 = vmatpush1.msra.mxu0 0.0
      %1500 = vmatprep.subr.mxu0 0.0
      %1501 = vmatpush1.msra.mxu0 0.0
      %1502 = vmatprep.subr.mxu0 0.0
      %1503 = vmatpush1.msra.mxu0 0.0
      %1504 = vmatprep.subr.mxu0 0.0
      %1505 = vmatpush1.msra.mxu0 0.0
      %1506 = vmatprep.subr.mxu0 0.0
      %1507 = vmatpush1.msra.mxu0 0.0
      %1508 = vmatprep.subr.mxu0 0.0
      %1509 = vmatpush1.msra.mxu0 0.0
      %1510 = vmatprep.subr.mxu0 0.0
      %1511 = vmatpush1.msra.mxu0 0.0
      %1512 = vmatprep.subr.mxu0 0.0
      %1513 = vmatpush1.msra.mxu0 0.0
      %1514 = vmatprep.subr.mxu0 0.0
      %1515 = vmatpush1.msra.mxu0 0.0
      %1516 = vmatprep.subr.mxu0 0.0
      %1517 = vmatpush1.msra.mxu0 0.0
      %1518 = vmatprep.subr.mxu0 0.0
      %1519 = vmatpush1.msra.mxu0 0.0
      %1520 = vmatprep.subr.mxu0 0.0
      %1521 = vmatpush1.msra.mxu0 0.0
      %1522 = vmatprep.subr.mxu0 0.0
      %1523 = vmatpush1.msra.mxu0 0.0
      %1524 = vmatprep.subr.mxu0 0.0
      %1525 = vmatpush1.msra.mxu0 0.0
      %1526 = vmatprep.subr.mxu0 0.0
      %1527 = vmatpush1.msra.mxu0 0.0
      %1528 = vmatprep.subr.mxu0 0.0
      %1529 = vmatpush1.msra.mxu0 0.0
      %1530 = vmatprep.subr.mxu0 0.0
      %1531 = vmatpush1.msra.mxu0 0.0
      %1532 = vmatprep.subr.mxu0 0.0
      %1533 = vmatpush1.msra.mxu0 0.0
      %1534 = vmatprep.subr.mxu0 0.0
      %1535 = vmatpush1.msra.mxu0 0.0
      %1536 = vmatprep.subr.mxu0 0.0
      %1537 = vmatpush1.msra.mxu0 0.0
      %1538 = vmatprep.subr.mxu0 0.0
      %1539 = vmatpush1.msra.mxu0 0.0
      %1540 = vmatprep.subr.mxu0 0.0
      %1541 = vmatpush1.msra.mxu0 0.0
      %1542 = vmatprep.subr.mxu0 0.0
      %1543 = vmatpush1.msra.mxu0 0.0
      %1544 = vmatprep.subr.mxu0 0.0
      %1545 = vmatpush1.msra.mxu0 0.0
      %1546 = vmatprep.subr.mxu0 0.0
      %1547 = vmatpush1.msra.mxu0 0.0
      %1548 = vmatprep.subr.mxu0 0.0
      %1549 = vmatpush1.msra.mxu0 0.0
      %1550 = vmatprep.mubr.f32.mxu0 0.0
      %1551 = vmatmul.mubr.f32.gmra.mrb[0].mxu0 %v1484
      %v1552 = vpop.f32.mrb[0].mxu0
      %v1553 = vadd.f32 0.0, %v1552
      %v1554 = vpop.f32.mrb[0].mxu0
      %v1555 = vadd.f32 0.0, %v1554
      %1556 = vdwg.mxu0
      %1557 = vmatprep.subr.mxu0 %v1478
      %1558 = vmatpush1.msra.mxu0 %v1477
      %1559 = vmatprep.subr.mxu0 0.0
      %1560 = vmatpush1.msra.mxu0 0.0
      %1561 = vmatprep.subr.mxu0 0.0
      %1562 = vmatpush1.msra.mxu0 0.0
      %1563 = vmatprep.subr.mxu0 0.0
      %1564 = vmatpush1.msra.mxu0 0.0
      %1565 = vmatprep.subr.mxu0 0.0
      %1566 = vmatpush1.msra.mxu0 0.0
      %1567 = vmatprep.subr.mxu0 0.0
      %1568 = vmatpush1.msra.mxu0 0.0
      %1569 = vmatprep.subr.mxu0 0.0
      %1570 = vmatpush1.msra.mxu0 0.0
      %1571 = vmatprep.subr.mxu0 0.0
      %1572 = vmatpush1.msra.mxu0 0.0
      %1573 = vmatprep.subr.mxu0 0.0
      %1574 = vmatpush1.msra.mxu0 0.0
      %1575 = vmatprep.subr.mxu0 0.0
      %1576 = vmatpush1.msra.mxu0 0.0
      %1577 = vmatprep.subr.mxu0 0.0
      %1578 = vmatpush1.msra.mxu0 0.0
      %1579 = vmatprep.subr.mxu0 0.0
      %1580 = vmatpush1.msra.mxu0 0.0
      %1581 = vmatprep.subr.mxu0 0.0
      %1582 = vmatpush1.msra.mxu0 0.0
      %1583 = vmatprep.subr.mxu0 0.0
      %1584 = vmatpush1.msra.mxu0 0.0
      %1585 = vmatprep.subr.mxu0 0.0
      %1586 = vmatpush1.msra.mxu0 0.0
      %1587 = vmatprep.subr.mxu0 0.0
      %1588 = vmatpush1.msra.mxu0 0.0
      %1589 = vmatprep.subr.mxu0 0.0
      %1590 = vmatpush1.msra.mxu0 0.0
      %1591 = vmatprep.subr.mxu0 0.0
      %1592 = vmatpush1.msra.mxu0 0.0
      %1593 = vmatprep.subr.mxu0 0.0
      %1594 = vmatpush1.msra.mxu0 0.0
      %1595 = vmatprep.subr.mxu0 0.0
      %1596 = vmatpush1.msra.mxu0 0.0
      %1597 = vmatprep.subr.mxu0 0.0
      %1598 = vmatpush1.msra.mxu0 0.0
      %1599 = vmatprep.subr.mxu0 0.0
      %1600 = vmatpush1.msra.mxu0 0.0
      %1601 = vmatprep.subr.mxu0 0.0
      %1602 = vmatpush1.msra.mxu0 0.0
      %1603 = vmatprep.subr.mxu0 0.0
      %1604 = vmatpush1.msra.mxu0 0.0
      %1605 = vmatprep.subr.mxu0 0.0
      %1606 = vmatpush1.msra.mxu0 0.0
      %1607 = vmatprep.subr.mxu0 0.0
      %1608 = vmatpush1.msra.mxu0 0.0
      %1609 = vmatprep.subr.mxu0 0.0
      %1610 = vmatpush1.msra.mxu0 0.0
      %1611 = vmatprep.subr.mxu0 0.0
      %1612 = vmatpush1.msra.mxu0 0.0
      %1613 = vmatprep.subr.mxu0 0.0
      %1614 = vmatpush1.msra.mxu0 0.0
      %1615 = vmatprep.subr.mxu0 0.0
      %1616 = vmatpush1.msra.mxu0 0.0
      %1617 = vmatprep.subr.mxu0 0.0
      %1618 = vmatpush1.msra.mxu0 0.0
      %1619 = vmatprep.subr.mxu0 0.0
      %1620 = vmatpush1.msra.mxu0 0.0
      %1621 = vmatprep.mubr.f32.mxu0 0.0
      %1622 = vmatmul.mubr.f32.gmra.mrb[0].mxu0 %v1484
      %v1623 = vpop.f32.mrb[0].mxu0
      %v1624 = vadd.f32 0.0, %v1623
      %v1625 = vpop.f32.mrb[0].mxu0
      %v1626 = vadd.f32 0.0, %v1625
      %1627 = vdwg.mxu0
      %v1628 = vadd.f32 %v1458, %v1553
      %v1629 = vadd.f32 %v1459, %v1555
      %v1630 = vadd.f32 %v1460, %v1624
      %v1631 = vadd.f32 %v1461, %v1626
      %s1632 = scalar_lea.vmem %s2, 64
      %v1633 = vld [vmem:[%s1632] sm:$0xff]
      %1634 = vrot.lane.b32.xlu0 %v289, 90
      %v1635 = vpop.permute.xlu0 %1634
      %1636 = vrot.lane.b32.xlu0 %v290, 90
      %v1637 = vpop.permute.xlu0 %1636
      %1638 = vrot.lane.b32.xlu0 %v291, 90
      %v1639 = vpop.permute.xlu0 %1638
      %1640 = vrot.lane.b32.xlu0 %v292, 90
      %v1641 = vpop.permute.xlu0 %1640
      %1642 = vrot.lane.b32.xlu0 %v293, 90
      %v1643 = vpop.permute.xlu0 %1642
      %vm1644 = vcmask 736256
      %v1645 = vsel %vm1644, %v1635, %v1637
      %v1646 = vsel %vm1644, %v1637, %v1639
      %v1647 = vsel %vm1644, %v1639, %v1641
      %v1648 = vsel %vm1644, %v1641, %v1643
      %v1654 = vsel %vm321, %v1633, 0
      %1656 = vmatprep.subr.mxu0 %v1646
      %1657 = vmatpush1.msra.mxu0 %v1645
      %1658 = vmatprep.subr.mxu0 0.0
      %1659 = vmatpush1.msra.mxu0 0.0
      %1660 = vmatprep.subr.mxu0 0.0
      %1661 = vmatpush1.msra.mxu0 0.0
      %1662 = vmatprep.subr.mxu0 0.0
      %1663 = vmatpush1.msra.mxu0 0.0
      %1664 = vmatprep.subr.mxu0 0.0
      %1665 = vmatpush1.msra.mxu0 0.0
      %1666 = vmatprep.subr.mxu0 0.0
      %1667 = vmatpush1.msra.mxu0 0.0
      %1668 = vmatprep.subr.mxu0 0.0
      %1669 = vmatpush1.msra.mxu0 0.0
      %1670 = vmatprep.subr.mxu0 0.0
      %1671 = vmatpush1.msra.mxu0 0.0
      %1672 = vmatprep.subr.mxu0 0.0
      %1673 = vmatpush1.msra.mxu0 0.0
      %1674 = vmatprep.subr.mxu0 0.0
      %1675 = vmatpush1.msra.mxu0 0.0
      %1676 = vmatprep.subr.mxu0 0.0
      %1677 = vmatpush1.msra.mxu0 0.0
      %1678 = vmatprep.subr.mxu0 0.0
      %1679 = vmatpush1.msra.mxu0 0.0
      %1680 = vmatprep.subr.mxu0 0.0
      %1681 = vmatpush1.msra.mxu0 0.0
      %1682 = vmatprep.subr.mxu0 0.0
      %1683 = vmatpush1.msra.mxu0 0.0
      %1684 = vmatprep.subr.mxu0 0.0
      %1685 = vmatpush1.msra.mxu0 0.0
      %1686 = vmatprep.subr.mxu0 0.0
      %1687 = vmatpush1.msra.mxu0 0.0
      %1688 = vmatprep.subr.mxu0 0.0
      %1689 = vmatpush1.msra.mxu0 0.0
      %1690 = vmatprep.subr.mxu0 0.0
      %1691 = vmatpush1.msra.mxu0 0.0
      %1692 = vmatprep.subr.mxu0 0.0
      %1693 = vmatpush1.msra.mxu0 0.0
      %1694 = vmatprep.subr.mxu0 0.0
      %1695 = vmatpush1.msra.mxu0 0.0
      %1696 = vmatprep.subr.mxu0 0.0
      %1697 = vmatpush1.msra.mxu0 0.0
      %1698 = vmatprep.subr.mxu0 0.0
      %1699 = vmatpush1.msra.mxu0 0.0
      %1700 = vmatprep.subr.mxu0 0.0
      %1701 = vmatpush1.msra.mxu0 0.0
      %1702 = vmatprep.subr.mxu0 0.0
      %1703 = vmatpush1.msra.mxu0 0.0
      %1704 = vmatprep.subr.mxu0 0.0
      %1705 = vmatpush1.msra.mxu0 0.0
      %1706 = vmatprep.subr.mxu0 0.0
      %1707 = vmatpush1.msra.mxu0 0.0
      %1708 = vmatprep.subr.mxu0 0.0
      %1709 = vmatpush1.msra.mxu0 0.0
      %1710 = vmatprep.subr.mxu0 0.0
      %1711 = vmatpush1.msra.mxu0 0.0
      %1712 = vmatprep.subr.mxu0 0.0
      %1713 = vmatpush1.msra.mxu0 0.0
      %1714 = vmatprep.subr.mxu0 0.0
      %1715 = vmatpush1.msra.mxu0 0.0
      %1716 = vmatprep.subr.mxu0 0.0
      %1717 = vmatpush1.msra.mxu0 0.0
      %1718 = vmatprep.subr.mxu0 0.0
      %1719 = vmatpush1.msra.mxu0 0.0
      %1720 = vmatprep.mubr.f32.mxu0 0.0
      %1721 = vmatmul.mubr.f32.gmra.mrb[0].mxu0 %v1654
      %v1722 = vpop.f32.mrb[0].mxu0
      %v1723 = vadd.f32 0.0, %v1722
      %v1724 = vpop.f32.mrb[0].mxu0
      %v1725 = vadd.f32 0.0, %v1724
      %1726 = vdwg.mxu0
      %1727 = vmatprep.subr.mxu0 %v1648
      %1728 = vmatpush1.msra.mxu0 %v1647
      %1729 = vmatprep.subr.mxu0 0.0
      %1730 = vmatpush1.msra.mxu0 0.0
      %1731 = vmatprep.subr.mxu0 0.0
      %1732 = vmatpush1.msra.mxu0 0.0
      %1733 = vmatprep.subr.mxu0 0.0
      %1734 = vmatpush1.msra.mxu0 0.0
      %1735 = vmatprep.subr.mxu0 0.0
      %1736 = vmatpush1.msra.mxu0 0.0
      %1737 = vmatprep.subr.mxu0 0.0
      %1738 = vmatpush1.msra.mxu0 0.0
      %1739 = vmatprep.subr.mxu0 0.0
      %1740 = vmatpush1.msra.mxu0 0.0
      %1741 = vmatprep.subr.mxu0 0.0
      %1742 = vmatpush1.msra.mxu0 0.0
      %1743 = vmatprep.subr.mxu0 0.0
      %1744 = vmatpush1.msra.mxu0 0.0
      %1745 = vmatprep.subr.mxu0 0.0
      %1746 = vmatpush1.msra.mxu0 0.0
      %1747 = vmatprep.subr.mxu0 0.0
      %1748 = vmatpush1.msra.mxu0 0.0
      %1749 = vmatprep.subr.mxu0 0.0
      %1750 = vmatpush1.msra.mxu0 0.0
      %1751 = vmatprep.subr.mxu0 0.0
      %1752 = vmatpush1.msra.mxu0 0.0
      %1753 = vmatprep.subr.mxu0 0.0
      %1754 = vmatpush1.msra.mxu0 0.0
      %1755 = vmatprep.subr.mxu0 0.0
      %1756 = vmatpush1.msra.mxu0 0.0
      %1757 = vmatprep.subr.mxu0 0.0
      %1758 = vmatpush1.msra.mxu0 0.0
      %1759 = vmatprep.subr.mxu0 0.0
      %1760 = vmatpush1.msra.mxu0 0.0
      %1761 = vmatprep.subr.mxu0 0.0
      %1762 = vmatpush1.msra.mxu0 0.0
      %1763 = vmatprep.subr.mxu0 0.0
      %1764 = vmatpush1.msra.mxu0 0.0
      %1765 = vmatprep.subr.mxu0 0.0
      %1766 = vmatpush1.msra.mxu0 0.0
      %1767 = vmatprep.subr.mxu0 0.0
      %1768 = vmatpush1.msra.mxu0 0.0
      %1769 = vmatprep.subr.mxu0 0.0
      %1770 = vmatpush1.msra.mxu0 0.0
      %1771 = vmatprep.subr.mxu0 0.0
      %1772 = vmatpush1.msra.mxu0 0.0
      %1773 = vmatprep.subr.mxu0 0.0
      %1774 = vmatpush1.msra.mxu0 0.0
      %1775 = vmatprep.subr.mxu0 0.0
      %1776 = vmatpush1.msra.mxu0 0.0
      %1777 = vmatprep.subr.mxu0 0.0
      %1778 = vmatpush1.msra.mxu0 0.0
      %1779 = vmatprep.subr.mxu0 0.0
      %1780 = vmatpush1.msra.mxu0 0.0
      %1781 = vmatprep.subr.mxu0 0.0
      %1782 = vmatpush1.msra.mxu0 0.0
      %1783 = vmatprep.subr.mxu0 0.0
      %1784 = vmatpush1.msra.mxu0 0.0
      %1785 = vmatprep.subr.mxu0 0.0
      %1786 = vmatpush1.msra.mxu0 0.0
      %1787 = vmatprep.subr.mxu0 0.0
      %1788 = vmatpush1.msra.mxu0 0.0
      %1789 = vmatprep.subr.mxu0 0.0
      %1790 = vmatpush1.msra.mxu0 0.0
      %1791 = vmatprep.mubr.f32.mxu0 0.0
      %1792 = vmatmul.mubr.f32.gmra.mrb[0].mxu0 %v1654
      %v1793 = vpop.f32.mrb[0].mxu0
      %v1794 = vadd.f32 0.0, %v1793
      %v1795 = vpop.f32.mrb[0].mxu0
      %v1796 = vadd.f32 0.0, %v1795
      %1797 = vdwg.mxu0
      %v1798 = vadd.f32 %v1628, %v1723
      %v1799 = vadd.f32 %v1629, %v1725
      %v1800 = vadd.f32 %v1630, %v1794
      %v1801 = vadd.f32 %v1631, %v1796
      %v1802 = vld [vmem:[%s277] sm:$0xf]
      %v1804 = vlaneseq
      %v1805 = vshrl.u32 %v1804, 7
      %v1806 = vsub.s32 0, %v1805
      %v1807 = vrot.slane %v1802, %v1806
      %v1808 = vlaneseq
      %v1809 = vshrl.u32 %v1808, 7
      %v1810 = vsub.s32 1, %v1809
      %v1811 = vrot.slane %v1802, %v1810
      %v1812 = vlaneseq
      %v1813 = vshrl.u32 %v1812, 7
      %v1814 = vsub.s32 2, %v1813
      %v1815 = vrot.slane %v1802, %v1814
      %v1816 = vlaneseq
      %v1817 = vshrl.u32 %v1816, 7
      %v1818 = vsub.s32 3, %v1817
      %v1819 = vrot.slane %v1802, %v1818
      %v1824 = vmul.f32 %v1798, %v1807
      %v1825 = vmul.f32 %v1799, %v1811
      %v1826 = vmul.f32 %v1800, %v1815
      %v1827 = vmul.f32 %v1801, %v1819
      %v1828 = vadd.f32 %v1824, %v1825
      %v1829 = vadd.f32 %v1828, %v1826
      %v1830 = vadd.f32 %v1829, %v1827
      %1831 = vadd.xlane.f32.xlu0 %v1830
      %v1832 = vpop.xlane.xlu0 %1831
      %v1833 = vmul.f32 %v1824, %v1798
      %v1834 = vmul.f32 %v1825, %v1799
      %v1835 = vmul.f32 %v1826, %v1800
      %v1836 = vmul.f32 %v1827, %v1801
      %v1837 = vadd.f32 %v1833, %v1834
      %v1838 = vadd.f32 %v1837, %v1835
      %v1839 = vadd.f32 %v1838, %v1836
      %1840 = vadd.xlane.f32.xlu0 %v1839
      %v1841 = vpop.xlane.xlu0 %1840
      %vm1842 = vcmask 7168
      %v1843 = vsel %vm1842, %v1832, %v1841
      %vm1844 = vcmask 15360
      %1845 = vst.msk [vmem:[%s288] sm:$0xff] %vm1844, %v1843
      %1846 = vst [vmem:[%s283] sm:$0xff] %v1798
      %1847 = vst [vmem:[%s283 + $0x8] sm:$0xff] %v1799
      %1848 = vst [vmem:[%s283 + $0x10] sm:$0xff] %v1800
      %1849 = vst [vmem:[%s283 + $0x18] sm:$0xff] %v1801
      %s1850 = smul.u32 4, %s17
      %p1851 = scmp.lt.s32.totalorder %s1850, 7
      %s1852 = scalar_select %p1851, %s1850, 7
      %s1853 = smul.addr %s1852, 8
      %s1854 = scalar_lea.vmem %s4, %s1853
      %p1855 = scmp.lt.s32.totalorder %s17, 1
      %s1856 = scalar_select %p1855, %s17, 1
      %s1857 = smul.addr %s1856, 8
      %s1858 = scalar_lea.vmem %s5, %s1857
      // Predicated region
      $region37: #{conv_block_forward.6} parent=35 // pred_check
        %p1859 = pneg %p138
      $region38: #{conv_block_forward.6} parent=35 // pred_check_branch
        %1861 = sbr.rel (%p1859) target = $region40
      $region39: #{conv_block_forward.6} parent=35 // pred_region
        %s1862 = smul.u32 4, %s17
      $region40: #{conv_block_forward.6} parent=35 // pred_fallthru
        _
      // Predicated region
      $region41: #{conv_block_forward.6} parent=35 // pred_check
        %p1863 = pneg %p164
      $region42: #{conv_block_forward.6} parent=35 // pred_check_branch
        %1865 = sbr.rel (%p1863) target = $region44
      $region43: #{conv_block_forward.6} parent=35 // pred_region
        _
      $region44: #{conv_block_forward.6} parent=35 // pred_fallthru
        _
    $region36: #{conv_block_forward.6} parent=5 // pred_fallthru
      _
    %p1866 = scmp.le.s32.totalorder 2, %s12
    // Predicated region
    $region45: #{conv_block_forward.6} parent=5 // pred_check
      %p1867 = pneg %p1866
    $region46: #{conv_block_forward.6} parent=5 // pred_check_branch
      %1869 = sbr.rel (%p1867) target = $region48
    $region47: #{conv_block_forward.6} parent=5 // pred_region
      %s1870 = ssub.s32 %s12, 2
      // Predicated region
      $region49: #{conv_block_forward.6} parent=47 // pred_check
        %p1871 = pneg %p144
      $region50: #{conv_block_forward.6} parent=47 // pred_check_branch
        %1873 = sbr.rel (%p1871) target = $region52
      $region51: #{conv_block_forward.6} parent=47 // pred_region
        %s1874 = smul.u32 4, %s18
        %p1875 = scmp.lt.s32.totalorder %s1874, 7
        %s1876 = scalar_select %p1875, %s1874, 7
        %s1877 = smul.addr %s1876, 8
        %s1878 = scalar_lea.vmem %s4, %s1877
      $region52: #{conv_block_forward.6} parent=47 // pred_fallthru
        _
      // Predicated region
      $region53: #{conv_block_forward.6} parent=47 // pred_check
        %p1879 = pneg %p170
      $region54: #{conv_block_forward.6} parent=47 // pred_check_branch
        %1881 = sbr.rel (%p1879) target = $region56
      $region55: #{conv_block_forward.6} parent=47 // pred_region
        %p1882 = scmp.lt.s32.totalorder %s18, 1
        %s1883 = scalar_select %p1882, %s18, 1
        %s1884 = smul.addr %s1883, 8
        %s1885 = scalar_lea.vmem %s5, %s1884
      $region56: #{conv_block_forward.6} parent=47 // pred_fallthru
        _
    $region48: #{conv_block_forward.6} parent=5 // pred_fallthru
      _
  $region6: #{conv_block_forward.6} parent=0 // loop_footer
    %s16 = sadd.s32 1, %s12
  $region7: #{conv_block_forward.6} parent=0 // loop_footer_branch
    %11 = sbr.rel target = $region3
  $region8: #{conv_block_forward.6} parent=0 // loop_exit
    _

</llo_original>
